<compile_context>
chip_gen: v6e
topology: v6e:2x2x1
jax: 0.10.0
libtpu: 0.0.40
codegen_flags: <defaults>
</compile_context>

<pallas_src>
import numpy as np
import jax
import jax.numpy as jnp
from jax.experimental import pallas as pl
from jax.experimental.pallas import tpu as pltpu

NUM_CLASSES = 20      # amino-acid classes
HIDDEN = 32           # hidden width of the stand-in denoiser
LANE = 128            # lane-dense output width (logits 0..19, sasa at 20, zero pad)
PACK_W = 32           # packed input width: x(20) | alpha | t | sasa | mask | u_keep | u_cls | 0-pad
TILE_N = 2048         # max node tile (rows per grid step)
TIMESTEPS = 500
SASA_LOSS_COEFF = 0.5


# --------------------------------------------------------------------------
# cosine noise schedule (PredefinedNoiseScheduleDiscrete) — host-side constants
# --------------------------------------------------------------------------
def cosine_alphas_bar(timesteps, s=0.008):
    steps = timesteps + 2
    x = np.linspace(0, steps, steps)
    ac = np.cos(0.5 * np.pi * ((x / steps) + s) / (1 + s)) ** 2
    ac = ac / ac[0]
    betas = 1.0 - (ac[1:] / ac[:-1])
    alphas = 1.0 - np.clip(betas, 0.0, 0.9999)
    alphas_bar = np.exp(np.cumsum(np.log(alphas)))
    return jnp.asarray(alphas_bar, dtype=jnp.float32)  # length timesteps + 1


# --------------------------------------------------------------------------
# Fused kernel: sample X_t (two-stage) -> denoiser head -> per-tile CE/MSE partials
# --------------------------------------------------------------------------
def _fused_kernel(pk_ref, w1t_ref, b1_ref, wh_ref, bh_ref, out_ref, part_ref):
    c = NUM_CLASSES
    pk = pk_ref[...]                                   # (T, 32) packed node stream
    alpha = pk[:, c + 0:c + 1]                         # alpha_bar[batch]
    t     = pk[:, c + 1:c + 2]                         # t_float[batch]
    sasa  = pk[:, c + 2:c + 3]
    mask  = pk[:, c + 3:c + 4]                         # 1 real row / 0 pad row
    ukeep = pk[:, c + 4:c + 5]                         # uniform [0,1)
    ucls  = pk[:, c + 5:c + 6]                         # uniform [0,1)

    lane = jax.lax.broadcasted_iota(jnp.int32, (1, PACK_W), 1)

    # --- apply_noise + multinomial fused, closed form (no (N,C,C) Qtb, no Gumbel):
    #     X_t = x          with prob alpha_bar
    #         = Uniform(C) with prob 1 - alpha_bar
    # which is exactly prob_X = alpha_bar*x + (1-alpha_bar)/C for one-hot x.
    rand_idx = jnp.minimum(jnp.floor(ucls * c), c - 1).astype(jnp.int32)    # (T,1)
    rand_oh = (lane == rand_idx).astype(jnp.float32)                        # (T,32) one-hot
    x_lanes = jnp.where(lane < c, pk, 0.0)                                  # clean one-hot, 32 lanes
    noise_x = jnp.where(ukeep < alpha, x_lanes, rand_oh)                    # one_hot(X_t)

    # --- denoiser: time-conditioned MLP with the EGNN_NET(output_dim=21) head.
    #     Time term folded into the first matmul: t sits in lane C, wt is row C of w1t.
    # TODO(synk): full EGNN_Sparse message passing / sinusoidal time-MLP stack of
    # EGNN_NET is not translated (EGNN_Sparse is not defined in the spec).
    inp = jnp.where(lane == c, t, noise_x)                                  # (T, 32)
    h = jnp.dot(inp, w1t_ref[...], preferred_element_type=jnp.float32) + b1_ref[...]
    h = jnp.maximum(h, 0.0)                                                 # (T, H)
    out = jnp.dot(h, wh_ref[...], preferred_element_type=jnp.float32) + bh_ref[...]
    out_ref[...] = out.astype(out_ref.dtype)           # single lane-dense bf16 (T,128) store

    # --- fused losses (f32): per-tile partial sums; means taken in glue, pad rows masked
    logits = out[:, :c]
    psasa = out[:, c:c + 1]
    xoh = pk[:, :c]                                     # pred_x0 target = clean one-hot
    m = jnp.max(logits, axis=-1, keepdims=True)
    lse = m + jnp.log(jnp.sum(jnp.exp(logits - m), axis=-1, keepdims=True))
    ce_rows = jnp.sum(xoh * (lse - logits), axis=-1, keepdims=True) * mask
    diff = (psasa - sasa) * mask
    ce_part = jnp.sum(ce_rows)
    mse_part = jnp.sum(diff * diff)

    row = jax.lax.broadcasted_iota(jnp.int32, (2, LANE), 0)
    part_ref[0] = jnp.where(row == 0, ce_part, mse_part).astype(jnp.float32)


# --------------------------------------------------------------------------
# host-side weight packing
# --------------------------------------------------------------------------
def _pack_weights(params, c):
    # first layer: stack w1 (C,H) and wt (1,H) into one (32,H) weight (row C = time)
    w1t = jnp.zeros((PACK_W, HIDDEN), jnp.float32)
    w1t = w1t.at[:c].set(params["w1"]).at[c].set(params["wt"][0])
    b1 = params["b1"]
    # head: fuse logits head (H,C) and sasa head (H,1) into one lane-dense (H,128) weight
    w_head = jnp.zeros((HIDDEN, LANE), jnp.float32)
    w_head = w_head.at[:, :c].set(params["w2"]).at[:, c:c + 1].set(params["ws"])
    b_head = jnp.zeros((1, LANE), jnp.float32)
    b_head = b_head.at[:, :c].set(params["b2"]).at[:, c:c + 1].set(params["bsasa"])
    return w1t, b1, w_head, b_head


def _pick_tile(n, max_tile=TILE_N, min_tile=512):
    # Big tiles amortize per-step overhead; shrink only to keep >= 2 grid steps so
    # both v7x TensorCores get work (dimension_semantics=("parallel",)).
    tile = max_tile
    while tile > min_tile and -(-n // tile) < 2:
        tile //= 2
    return tile


# --------------------------------------------------------------------------
# forward (objective='pred_x0', noise_type='uniform'); returns
# (loss, ce_loss, sasa_loss_coeff * mse_loss, logits, pred_sasa)
# --------------------------------------------------------------------------
def sparse_digress_forward(key, x, batch, sasa, params, alphas_bar, num_graphs,
                           timesteps=TIMESTEPS, sasa_coeff=SASA_LOSS_COEFF):
    n, c = x.shape
    assert c + 6 <= PACK_W

    k_t, k_keep, k_cls = jax.random.split(key, 3)
    # t_int = torch.randint(0, timesteps, (bs, 1)).float()
    t_int = jax.random.randint(k_t, (num_graphs, 1), 0, timesteps).astype(jnp.float32)
    t_float = t_int / timesteps
    t_idx = jnp.round(t_float * timesteps).astype(jnp.int32)
    alpha_bar = alphas_bar[t_idx[:, 0]][:, None]                  # (bs, 1)

    # per-node scalars (replaces the (N, C, C) Qtb[batch] materialization)
    alpha_node = alpha_bar[batch]                                 # (N, 1)
    t_node = t_float[batch]                                       # (N, 1)
    mask = jnp.ones((n, 1), jnp.float32)

    # TODO(synk): torch.multinomial RNG stream not reproducible; the two-stage
    # uniform-transition sampler uses two jax.random uniforms per node instead.
    u_keep = jax.random.uniform(k_keep, (n, 1), dtype=jnp.float32)
    u_cls = jax.random.uniform(k_cls, (n, 1), dtype=jnp.float32)

    # one packed (N, 32) node stream: x | alpha | t | sasa | mask | u_keep | u_cls | 0
    packed = jnp.concatenate(
        [x, alpha_node, t_node, sasa, mask, u_keep, u_cls,
         jnp.zeros((n, PACK_W - (c + 6)), jnp.float32)], axis=1)

    tile = _pick_tile(n)
    n_pad = ((n + tile - 1) // tile) * tile
    packed_p = jnp.pad(packed, ((0, n_pad - n), (0, 0)))          # pad rows have mask=0

    w1t, b1, w_head, b_head = _pack_weights(params, c)

    grid_n = n_pad // tile
    out_slab, partials = pl.pallas_call(
        _fused_kernel,
        grid=(grid_n,),
        in_specs=[
            pl.BlockSpec((tile, PACK_W), lambda i: (i, 0)),       # packed node stream
            pl.BlockSpec((PACK_W, HIDDEN), lambda i: (0, 0)),     # w1|wt (resident)
            pl.BlockSpec((1, HIDDEN), lambda i: (0, 0)),          # b1 (resident)
            pl.BlockSpec((HIDDEN, LANE), lambda i: (0, 0)),       # fused head weight
            pl.BlockSpec((1, LANE), lambda i: (0, 0)),            # fused head bias
        ],
        out_specs=(
            pl.BlockSpec((tile, LANE), lambda i: (i, 0)),         # bf16 logits|sasa slab
            pl.BlockSpec((1, 2, LANE), lambda i: (i, 0, 0)),      # per-tile CE/MSE partials
        ),
        out_shape=(
            jax.ShapeDtypeStruct((n_pad, LANE), jnp.bfloat16),
            jax.ShapeDtypeStruct((grid_n, 2, LANE), jnp.float32),
        ),
        compiler_params=pltpu.CompilerParams(
            dimension_semantics=("parallel",),
            vmem_limit_bytes=32 * 1024 * 1024),                   # portable incl. v5e
    )(packed_p, w1t, b1, w_head, b_head)

    inv_n = 1.0 / n                                               # one reciprocal, reused
    ce_loss = jnp.sum(partials[:, 0, 0]) * inv_n
    mse_loss = jnp.sum(partials[:, 1, 0]) * inv_n
    sasa_loss = sasa_coeff * mse_loss
    loss = ce_loss + sasa_loss
    logits = out_slab[:n, :c].astype(jnp.float32)
    pred_sasa = out_slab[:n, c:c + 1].astype(jnp.float32)
    return loss, ce_loss, sasa_loss, logits, pred_sasa


def init_params(key, c=NUM_CLASSES, h=HIDDEN):
    ks = jax.random.split(key, 5)
    return {
        "w1": (0.1 * jax.random.normal(ks[0], (c, h))).astype(jnp.float32),
        "b1": jnp.zeros((1, h), jnp.float32),
        "wt": (0.1 * jax.random.normal(ks[1], (1, h))).astype(jnp.float32),
        "w2": (0.1 * jax.random.normal(ks[2], (h, c))).astype(jnp.float32),
        "b2": jnp.zeros((1, c), jnp.float32),
        "ws": (0.1 * jax.random.normal(ks[3], (h, 1))).astype(jnp.float32),
        "bsasa": jnp.zeros((1, 1), jnp.float32),
    }


if __name__ == "__main__":
    key = jax.random.PRNGKey(0)
    k_data, k_sasa, k_fwd, k_params = jax.random.split(key, 4)

    # small synthetic "PyG"-style batch: N=600 nodes over bs=3 graphs (2 node tiles)
    N, BS = 600, 3
    batch = jnp.repeat(jnp.arange(BS, dtype=jnp.int32), N // BS)          # (N,)
    aa = jax.random.randint(k_data, (N,), 0, NUM_CLASSES)
    x = jax.nn.one_hot(aa, NUM_CLASSES, dtype=jnp.float32)                # (N, 20)
    sasa = jax.random.uniform(k_sasa, (N, 1), dtype=jnp.float32)          # (N, 1)

    params = init_params(k_params)
    alphas_bar = cosine_alphas_bar(TIMESTEPS)

    fwd = jax.jit(sparse_digress_forward,
                  static_argnames=("num_graphs", "timesteps", "sasa_coeff"))
    loss, ce_loss, sasa_loss, logits, pred_sasa = fwd(
        k_fwd, x, batch, sasa, params, alphas_bar,
        num_graphs=BS, timesteps=TIMESTEPS, sasa_coeff=SASA_LOSS_COEFF)
    jax.block_until_ready((loss, ce_loss, sasa_loss, logits, pred_sasa))

    assert logits.shape == (N, NUM_CLASSES)
    assert pred_sasa.shape == (N, 1)
    assert bool(jnp.isfinite(loss))
    assert bool(jnp.all(jnp.isfinite(logits)))
    print("KERNEL_OK")
</pallas_src>

<mosaic_0001>
module attributes {stable_mosaic.version = 11 : i64} {
  func.func @_fused_kernel(%arg0: i32, %arg1: memref<512x32xf32, #tpu.memory_space<vmem>>, %arg2: memref<32x32xf32, #tpu.memory_space<vmem>>, %arg3: memref<1x32xf32, #tpu.memory_space<vmem>>, %arg4: memref<32x128xf32, #tpu.memory_space<vmem>>, %arg5: memref<1x128xf32, #tpu.memory_space<vmem>>, %arg6: memref<512x128xbf16, #tpu.memory_space<vmem>>, %arg7: memref<1x2x128xf32, #tpu.memory_space<vmem>>) attributes {dimension_semantics = [#tpu.dimension_semantics<parallel>], iteration_bounds = array<i64: 2>, scalar_prefetch = 0 : i64, scratch_operands = 0 : i64, tpu.core_type = #tpu.core_type<tc>, window_params = [{transform_indices = @transform_0, window_bounds = array<i64: 512, 32>}, {pipeline_mode = #tpu.pipeline_mode<synchronous>, transform_indices = @transform_1, window_bounds = array<i64: 32, 32>}, {pipeline_mode = #tpu.pipeline_mode<synchronous>, transform_indices = @transform_2, window_bounds = array<i64: 1, 32>}, {pipeline_mode = #tpu.pipeline_mode<synchronous>, transform_indices = @transform_3, window_bounds = array<i64: 32, 128>}, {pipeline_mode = #tpu.pipeline_mode<synchronous>, transform_indices = @transform_4, window_bounds = array<i64: 1, 128>}, {transform_indices = @transform_5, window_bounds = array<i64: 512, 128>}, {transform_indices = @transform_6, window_bounds = array<i64: 1, 2, 128>}]} {
    %c0 = arith.constant 0 : index
    %c0_0 = arith.constant 0 : index
    %0 = vector.load %arg1[%c0, %c0_0] : memref<512x32xf32, #tpu.memory_space<vmem>>, vector<512x32xf32>
    %1 = vector.extract_strided_slice %0 {offsets = [0, 20], sizes = [512, 1], strides = [1, 1]} : vector<512x32xf32> to vector<512x1xf32>
    %2 = vector.extract_strided_slice %0 {offsets = [0, 21], sizes = [512, 1], strides = [1, 1]} : vector<512x32xf32> to vector<512x1xf32>
    %3 = vector.extract_strided_slice %0 {offsets = [0, 22], sizes = [512, 1], strides = [1, 1]} : vector<512x32xf32> to vector<512x1xf32>
    %4 = vector.extract_strided_slice %0 {offsets = [0, 23], sizes = [512, 1], strides = [1, 1]} : vector<512x32xf32> to vector<512x1xf32>
    %5 = vector.extract_strided_slice %0 {offsets = [0, 24], sizes = [512, 1], strides = [1, 1]} : vector<512x32xf32> to vector<512x1xf32>
    %6 = vector.extract_strided_slice %0 {offsets = [0, 25], sizes = [512, 1], strides = [1, 1]} : vector<512x32xf32> to vector<512x1xf32>
    %7 = tpu.iota {dimensions = array<i32: 1>} : vector<1x32xi32>
    %cst = arith.constant 2.000000e+01 : f32
    %8 = vector.broadcast %cst : f32 to vector<512x1xf32>
    %9 = arith.mulf %6, %8 : vector<512x1xf32>
    %10 = math.floor %9 : vector<512x1xf32>
    %cst_1 = arith.constant 1.900000e+01 : f32
    %11 = vector.broadcast %cst_1 : f32 to vector<512x1xf32>
    %12 = arith.minimumf %10, %11 : vector<512x1xf32>
    %13 = arith.fptosi %12 : vector<512x1xf32> to vector<512x1xi32>
    %14 = vector.broadcast %7 : vector<1x32xi32> to vector<512x32xi32>
    %15 = vector.broadcast %13 : vector<512x1xi32> to vector<512x32xi32>
    %16 = arith.cmpi eq, %14, %15 : vector<512x32xi32>
    %17 = arith.extui %16 : vector<512x32xi1> to vector<512x32xi32>
    %18 = arith.sitofp %17 : vector<512x32xi32> to vector<512x32xf32>
    %c20_i32 = arith.constant 20 : i32
    %19 = vector.broadcast %c20_i32 : i32 to vector<1x32xi32>
    %20 = arith.cmpi slt, %7, %19 : vector<1x32xi32>
    %cst_2 = arith.constant 0.000000e+00 : f32
    %21 = vector.shape_cast %20 : vector<1x32xi1> to vector<1x32xi1>
    %22 = vector.broadcast %21 : vector<1x32xi1> to vector<512x32xi1>
    %23 = vector.broadcast %cst_2 : f32 to vector<512x32xf32>
    %24 = arith.select %22, %0, %23 : vector<512x32xi1>, vector<512x32xf32>
    %25 = arith.cmpf olt, %5, %1 : vector<512x1xf32>
    %26 = vector.shape_cast %25 : vector<512x1xi1> to vector<512x1xi1>
    %27 = vector.broadcast %26 : vector<512x1xi1> to vector<512x32xi1>
    %28 = arith.select %27, %24, %18 : vector<512x32xi1>, vector<512x32xf32>
    %c20_i32_3 = arith.constant 20 : i32
    %29 = vector.broadcast %c20_i32_3 : i32 to vector<1x32xi32>
    %30 = arith.cmpi eq, %7, %29 : vector<1x32xi32>
    %31 = vector.shape_cast %30 : vector<1x32xi1> to vector<1x32xi1>
    %32 = vector.broadcast %31 : vector<1x32xi1> to vector<512x32xi1>
    %33 = vector.shape_cast %2 : vector<512x1xf32> to vector<512x1xf32>
    %34 = vector.broadcast %33 : vector<512x1xf32> to vector<512x32xf32>
    %35 = arith.select %32, %34, %28 : vector<512x32xi1>, vector<512x32xf32>
    %c0_4 = arith.constant 0 : index
    %c0_5 = arith.constant 0 : index
    %36 = vector.load %arg2[%c0_4, %c0_5] : memref<32x32xf32, #tpu.memory_space<vmem>>, vector<32x32xf32>
    %cst_6 = arith.constant dense<0.000000e+00> : vector<512x32xf32>
    %37 = tpu.matmul %35, %36, %cst_6 {dimension_numbers = #tpu.dot_dimension_numbers<[1], [0], [0], [1], [0, 0, 1, 1], [], []>} : vector<512x32xf32>, vector<32x32xf32>, vector<512x32xf32> -> vector<512x32xf32>
    %c0_7 = arith.constant 0 : index
    %c0_8 = arith.constant 0 : index
    %38 = vector.load %arg3[%c0_7, %c0_8] : memref<1x32xf32, #tpu.memory_space<vmem>>, vector<1x32xf32>
    %39 = vector.broadcast %38 : vector<1x32xf32> to vector<512x32xf32>
    %40 = arith.addf %37, %39 : vector<512x32xf32>
    %cst_9 = arith.constant 0.000000e+00 : f32
    %41 = vector.broadcast %cst_9 : f32 to vector<512x32xf32>
    %42 = arith.maximumf %40, %41 : vector<512x32xf32>
    %c0_10 = arith.constant 0 : index
    %c0_11 = arith.constant 0 : index
    %43 = vector.load %arg4[%c0_10, %c0_11] : memref<32x128xf32, #tpu.memory_space<vmem>>, vector<32x128xf32>
    %cst_12 = arith.constant dense<0.000000e+00> : vector<512x128xf32>
    %44 = tpu.matmul %42, %43, %cst_12 {dimension_numbers = #tpu.dot_dimension_numbers<[1], [0], [0], [1], [0, 0, 1, 1], [], []>} : vector<512x32xf32>, vector<32x128xf32>, vector<512x128xf32> -> vector<512x128xf32>
    %c0_13 = arith.constant 0 : index
    %c0_14 = arith.constant 0 : index
    %45 = vector.load %arg5[%c0_13, %c0_14] : memref<1x128xf32, #tpu.memory_space<vmem>>, vector<1x128xf32>
    %46 = vector.broadcast %45 : vector<1x128xf32> to vector<512x128xf32>
    %47 = arith.addf %44, %46 : vector<512x128xf32>
    %48 = arith.truncf %47 : vector<512x128xf32> to vector<512x128xbf16>
    %c0_15 = arith.constant 0 : index
    %c0_16 = arith.constant 0 : index
    %49 = vector.load %arg6[%c0_15, %c0_16] : memref<512x128xbf16, #tpu.memory_space<vmem>>, vector<512x128xbf16>
    tpu.vector_store %arg6[%c0_15, %c0_16], %48 {strides = array<i32>} : memref<512x128xbf16, #tpu.memory_space<vmem>>, vector<512x128xbf16>,
    %50 = vector.extract_strided_slice %47 {offsets = [0, 0], sizes = [512, 20], strides = [1, 1]} : vector<512x128xf32> to vector<512x20xf32>
    %51 = vector.extract_strided_slice %47 {offsets = [0, 20], sizes = [512, 1], strides = [1, 1]} : vector<512x128xf32> to vector<512x1xf32>
    %52 = vector.extract_strided_slice %0 {offsets = [0, 0], sizes = [512, 20], strides = [1, 1]} : vector<512x32xf32> to vector<512x20xf32>
    %cst_17 = arith.constant dense<0xFF800000> : vector<512xf32>
    %53 = vector.multi_reduction <maximumf>, %50, %cst_17 [1] : vector<512x20xf32> to vector<512xf32>
    %54 = vector.shape_cast %53 : vector<512xf32> to vector<512x1xf32>
    %55 = vector.broadcast %54 : vector<512x1xf32> to vector<512x20xf32>
    %56 = arith.subf %50, %55 : vector<512x20xf32>
    %57 = math.exp %56 : vector<512x20xf32>
    %cst_18 = arith.constant dense<0.000000e+00> : vector<512xf32>
    %58 = vector.multi_reduction <add>, %57, %cst_18 [1] : vector<512x20xf32> to vector<512xf32>
    %59 = vector.shape_cast %58 : vector<512xf32> to vector<512x1xf32>
    %60 = math.log %59 : vector<512x1xf32>
    %61 = arith.addf %54, %60 : vector<512x1xf32>
    %62 = vector.broadcast %61 : vector<512x1xf32> to vector<512x20xf32>
    %63 = arith.subf %62, %50 : vector<512x20xf32>
    %64 = arith.mulf %52, %63 : vector<512x20xf32>
    %cst_19 = arith.constant dense<0.000000e+00> : vector<512xf32>
    %65 = vector.multi_reduction <add>, %64, %cst_19 [1] : vector<512x20xf32> to vector<512xf32>
    %66 = vector.shape_cast %65 : vector<512xf32> to vector<512x1xf32>
    %67 = arith.mulf %66, %4 : vector<512x1xf32>
    %68 = arith.subf %51, %3 : vector<512x1xf32>
    %69 = arith.mulf %68, %4 : vector<512x1xf32>
    %70 = vector.shape_cast %67 : vector<512x1xf32> to vector<1x512x1xf32>
    %cst_20 = arith.constant dense<0.000000e+00> : vector<1xf32>
    %71 = vector.multi_reduction <add>, %70, %cst_20 [1, 2] : vector<1x512x1xf32> to vector<1xf32>
    %72 = vector.shape_cast %71 : vector<1xf32> to vector<1x1x1xf32>
    %73 = vector.extract %72[0, 0, 0] : f32 from vector<1x1x1xf32>
    %74 = arith.mulf %69, %69 : vector<512x1xf32>
    %75 = vector.shape_cast %74 : vector<512x1xf32> to vector<1x512x1xf32>
    %cst_21 = arith.constant dense<0.000000e+00> : vector<1xf32>
    %76 = vector.multi_reduction <add>, %75, %cst_21 [1, 2] : vector<1x512x1xf32> to vector<1xf32>
    %77 = vector.shape_cast %76 : vector<1xf32> to vector<1x1x1xf32>
    %78 = vector.extract %77[0, 0, 0] : f32 from vector<1x1x1xf32>
    %79 = tpu.iota {dimensions = array<i32: 0>} : vector<2x128xi32>
    %c0_i32 = arith.constant 0 : i32
    %80 = vector.broadcast %c0_i32 : i32 to vector<2x128xi32>
    %81 = arith.cmpi eq, %79, %80 : vector<2x128xi32>
    %82 = vector.broadcast %73 : f32 to vector<2x128xf32>
    %83 = vector.broadcast %78 : f32 to vector<2x128xf32>
    %84 = arith.select %81, %82, %83 : vector<2x128xi1>, vector<2x128xf32>
    %c0_22 = arith.constant 0 : index
    %c0_23 = arith.constant 0 : index
    %c0_24 = arith.constant 0 : index
    %85 = vector.load %arg7[%c0_22, %c0_23, %c0_24] : memref<1x2x128xf32, #tpu.memory_space<vmem>>, vector<1x2x128xf32>
    %86 = vector.shape_cast %85 : vector<1x2x128xf32> to vector<2x128xf32>
    %87 = vector.shape_cast %84 : vector<2x128xf32> to vector<1x2x128xf32>
    tpu.vector_store %arg7[%c0_22, %c0_23, %c0_24], %87 {strides = array<i32>} : memref<1x2x128xf32, #tpu.memory_space<vmem>>, vector<1x2x128xf32>,
    return
  }
  func.func @transform_0(%arg0: i32) -> (i32, i32) {
    %c0_i32 = arith.constant 0 : i32
    %c0_i32_0 = arith.constant 0 : i32
    return %arg0, %c0_i32 : i32, i32
  }
  func.func @transform_1(%arg0: i32) -> (i32, i32) {
    %c0_i32 = arith.constant 0 : i32
    %c0_i32_0 = arith.constant 0 : i32
    %c0_i32_1 = arith.constant 0 : i32
    return %c0_i32, %c0_i32_0 : i32, i32
  }
  func.func @transform_2(%arg0: i32) -> (i32, i32) {
    %c0_i32 = arith.constant 0 : i32
    %c0_i32_0 = arith.constant 0 : i32
    %c0_i32_1 = arith.constant 0 : i32
    return %c0_i32, %c0_i32_0 : i32, i32
  }
  func.func @transform_3(%arg0: i32) -> (i32, i32) {
    %c0_i32 = arith.constant 0 : i32
    %c0_i32_0 = arith.constant 0 : i32
    %c0_i32_1 = arith.constant 0 : i32
    return %c0_i32, %c0_i32_0 : i32, i32
  }
  func.func @transform_4(%arg0: i32) -> (i32, i32) {
    %c0_i32 = arith.constant 0 : i32
    %c0_i32_0 = arith.constant 0 : i32
    %c0_i32_1 = arith.constant 0 : i32
    return %c0_i32, %c0_i32_0 : i32, i32
  }
  func.func @transform_5(%arg0: i32) -> (i32, i32) {
    %c0_i32 = arith.constant 0 : i32
    %c0_i32_0 = arith.constant 0 : i32
    return %arg0, %c0_i32 : i32, i32
  }
  func.func @transform_6(%arg0: i32) -> (i32, i32, i32) {
    %c0_i32 = arith.constant 0 : i32
    %c0_i32_0 = arith.constant 0 : i32
    %c0_i32_1 = arith.constant 0 : i32
    return %arg0, %c0_i32, %c0_i32_0 : i32, i32, i32
  }
}

</mosaic_0001>

<llo_original>
// kernel: sparse_digress_forward.3
$region0: #{sparse_digress_forward.3}
  #allocation0 [shape = 'u32[]', space=smem, size = 0x4, offset = 0x4, fixed_abs, tag = 'smem constant byte address 0x4 - core index']
  #allocation1 [shape = 'u32[144,128]{1,0:T(1,128)}', space=vmem, size = 0x12000, scoped, tag = 'internal scratch']
  %s0 = inlined_call_operand.vmem [shape: f32[1024,32], index: 0, kind: input, shape index: {}]
  %s1 = inlined_call_operand.vmem [shape: f32[32,32], index: 1, kind: input, shape index: {}]
  %s2 = inlined_call_operand.vmem [shape: f32[1,32], index: 2, kind: input, shape index: {}]
  %s3 = inlined_call_operand.vmem [shape: f32[32,128], index: 3, kind: input, shape index: {}]
  %s4 = inlined_call_operand.vmem [shape: f32[1,128], index: 4, kind: input, shape index: {}]
  %s5 = inlined_call_operand.vmem [shape: bf16[1024,128], index: 5, kind: output, shape index: {0}]
  %s6 = inlined_call_operand.vmem [shape: f32[2,2,128], index: 6, kind: output, shape index: {1}]
  %7 = xla_tuple %s5, %s6
  %s8 = sld [smem:[#allocation0]]
  $region61: #{sparse_digress_forward.3} parent=0
    _
  %s10 = ssub.s32 1, %s8
  %s11 = scalar_select 0, %s10, %s8
  loop: start=0, step=1, limit=4
  $region2: #{sparse_digress_forward.3} parent=0 // loop_pre_header
    _
  $region3: #{sparse_digress_forward.3} parent=0 // loop_header
    %s13 = sphi 0, %s17
    %p14 = scmp.ge.s32.totalorder %s13, 4
    %s23 = sphi 0, %s25
    %s26 = sphi 0, %s23
    %s27 = sphi 0, %s26
    %s43 = sphi 0, %s27
    %s47 = sphi 0, %s47
    %s49 = sphi 0, %s47
    %s50 = sphi 0, %s49
    %s64 = sphi 0, %s50
    %s68 = sphi 0, %s68
    %s70 = sphi 0, %s68
    %s71 = sphi 0, %s70
    %s85 = sphi 0, %s71
    %s89 = sphi 0, %s89
    %s91 = sphi 0, %s89
    %s92 = sphi 0, %s91
    %s106 = sphi 0, %s92
    %s110 = sphi 0, %s110
    %s112 = sphi 0, %s110
    %s113 = sphi 0, %s112
    %s127 = sphi 0, %s113
    %s133 = sphi 0, %s135
    %s136 = sphi 0, %s133
    %s137 = sphi 0, %s136
    %s153 = sphi 0, %s137
    %s159 = sphi 0, %s161
    %s162 = sphi 0, %s159
    %s163 = sphi 0, %s162
    %s179 = sphi 0, %s163
  $region4: #{sparse_digress_forward.3} parent=0 // loop_header_branch
    %16 = sbr.rel (%p14) target = $region8
  $region5: #{sparse_digress_forward.3} parent=0 // loop_body
    %s18 = ssub.s32 %s13, 1
    %s19 = ssub.s32 %s13, 2
    %s20 = sadd.s32 %s13, 1
    %s21 = ssub.s32 %s13, %s20
    %p22 = scmp.eq.s32.totalorder %s21, 0
    %s24 = sadd.s32 %s23, 1
    %s25 = scalar_select %p22, %s23, %s24
    %p28 = pneg %p22
    %p29 = scmp.eq.s32.totalorder %s13, 1
    %p30 = por %p28, %p29
    %p31 = scmp.ne.s32.totalorder %s23, %s26
    %p32 = scmp.eq.s32.totalorder %s13, 0
    %p33 = por %p31, %p32
    %p34 = scmp.ne.s32.totalorder %s23, %s26
    %p35 = scmp.eq.s32.totalorder %s18, 1
    %p36 = por %p34, %p35
    %p37 = scmp.ne.s32.totalorder %s26, %s27
    %p38 = scmp.eq.s32.totalorder %s18, 0
    %p39 = por %p37, %p38
    %p40 = scmp.ne.s32.totalorder %s26, %s27
    %p41 = scmp.eq.s32.totalorder %s19, 1
    %p42 = por %p40, %p41
    %p44 = scmp.ne.s32.totalorder %s27, %s43
    %p45 = scmp.eq.s32.totalorder %s19, 0
    %p46 = por %p44, %p45
    %s48 = sadd.s32 %s47, 1
    %p51 = scmp.eq.s32.totalorder %s13, 1
    %p52 = scmp.ne.s32.totalorder %s47, %s49
    %p53 = scmp.eq.s32.totalorder %s13, 0
    %p54 = por %p52, %p53
    %p55 = scmp.ne.s32.totalorder %s47, %s49
    %p56 = scmp.eq.s32.totalorder %s18, 1
    %p57 = por %p55, %p56
    %p58 = scmp.ne.s32.totalorder %s49, %s50
    %p59 = scmp.eq.s32.totalorder %s18, 0
    %p60 = por %p58, %p59
    %p61 = scmp.ne.s32.totalorder %s49, %s50
    %p62 = scmp.eq.s32.totalorder %s19, 1
    %p63 = por %p61, %p62
    %p65 = scmp.ne.s32.totalorder %s50, %s64
    %p66 = scmp.eq.s32.totalorder %s19, 0
    %p67 = por %p65, %p66
    %s69 = sadd.s32 %s68, 1
    %p72 = scmp.eq.s32.totalorder %s13, 1
    %p73 = scmp.ne.s32.totalorder %s68, %s70
    %p74 = scmp.eq.s32.totalorder %s13, 0
    %p75 = por %p73, %p74
    %p76 = scmp.ne.s32.totalorder %s68, %s70
    %p77 = scmp.eq.s32.totalorder %s18, 1
    %p78 = por %p76, %p77
    %p79 = scmp.ne.s32.totalorder %s70, %s71
    %p80 = scmp.eq.s32.totalorder %s18, 0
    %p81 = por %p79, %p80
    %p82 = scmp.ne.s32.totalorder %s70, %s71
    %p83 = scmp.eq.s32.totalorder %s19, 1
    %p84 = por %p82, %p83
    %p86 = scmp.ne.s32.totalorder %s71, %s85
    %p87 = scmp.eq.s32.totalorder %s19, 0
    %p88 = por %p86, %p87
    %s90 = sadd.s32 %s89, 1
    %p93 = scmp.eq.s32.totalorder %s13, 1
    %p94 = scmp.ne.s32.totalorder %s89, %s91
    %p95 = scmp.eq.s32.totalorder %s13, 0
    %p96 = por %p94, %p95
    %p97 = scmp.ne.s32.totalorder %s89, %s91
    %p98 = scmp.eq.s32.totalorder %s18, 1
    %p99 = por %p97, %p98
    %p100 = scmp.ne.s32.totalorder %s91, %s92
    %p101 = scmp.eq.s32.totalorder %s18, 0
    %p102 = por %p100, %p101
    %p103 = scmp.ne.s32.totalorder %s91, %s92
    %p104 = scmp.eq.s32.totalorder %s19, 1
    %p105 = por %p103, %p104
    %p107 = scmp.ne.s32.totalorder %s92, %s106
    %p108 = scmp.eq.s32.totalorder %s19, 0
    %p109 = por %p107, %p108
    %s111 = sadd.s32 %s110, 1
    %p114 = scmp.eq.s32.totalorder %s13, 1
    %p115 = scmp.ne.s32.totalorder %s110, %s112
    %p116 = scmp.eq.s32.totalorder %s13, 0
    %p117 = por %p115, %p116
    %p118 = scmp.ne.s32.totalorder %s110, %s112
    %p119 = scmp.eq.s32.totalorder %s18, 1
    %p120 = por %p118, %p119
    %p121 = scmp.ne.s32.totalorder %s112, %s113
    %p122 = scmp.eq.s32.totalorder %s18, 0
    %p123 = por %p121, %p122
    %p124 = scmp.ne.s32.totalorder %s112, %s113
    %p125 = scmp.eq.s32.totalorder %s19, 1
    %p126 = por %p124, %p125
    %p128 = scmp.ne.s32.totalorder %s113, %s127
    %p129 = scmp.eq.s32.totalorder %s19, 0
    %p130 = por %p128, %p129
    %s131 = ssub.s32 %s13, %s20
    %p132 = scmp.eq.s32.totalorder %s131, 0
    %s134 = sadd.s32 %s133, 1
    %s135 = scalar_select %p132, %s133, %s134
    %p138 = pneg %p132
    %p139 = scmp.eq.s32.totalorder %s13, 1
    %p140 = por %p138, %p139
    %p141 = scmp.ne.s32.totalorder %s133, %s136
    %p142 = scmp.eq.s32.totalorder %s13, 0
    %p143 = por %p141, %p142
    %p144 = scmp.ne.s32.totalorder %s133, %s136
    %p145 = scmp.eq.s32.totalorder %s18, 1
    %p146 = por %p144, %p145
    %p147 = scmp.ne.s32.totalorder %s136, %s137
    %p148 = scmp.eq.s32.totalorder %s18, 0
    %p149 = por %p147, %p148
    %p150 = scmp.ne.s32.totalorder %s136, %s137
    %p151 = scmp.eq.s32.totalorder %s19, 1
    %p152 = por %p150, %p151
    %p154 = scmp.ne.s32.totalorder %s137, %s153
    %p155 = scmp.eq.s32.totalorder %s19, 0
    %p156 = por %p154, %p155
    %s157 = ssub.s32 %s13, %s20
    %p158 = scmp.eq.s32.totalorder %s157, 0
    %s160 = sadd.s32 %s159, 1
    %s161 = scalar_select %p158, %s159, %s160
    %p164 = pneg %p158
    %p165 = scmp.eq.s32.totalorder %s13, 1
    %p166 = por %p164, %p165
    %p167 = scmp.ne.s32.totalorder %s159, %s162
    %p168 = scmp.eq.s32.totalorder %s13, 0
    %p169 = por %p167, %p168
    %p170 = scmp.ne.s32.totalorder %s159, %s162
    %p171 = scmp.eq.s32.totalorder %s18, 1
    %p172 = por %p170, %p171
    %p173 = scmp.ne.s32.totalorder %s162, %s163
    %p174 = scmp.eq.s32.totalorder %s18, 0
    %p175 = por %p173, %p174
    %p176 = scmp.ne.s32.totalorder %s162, %s163
    %p177 = scmp.eq.s32.totalorder %s19, 1
    %p178 = por %p176, %p177
    %p180 = scmp.ne.s32.totalorder %s163, %s179
    %p181 = scmp.eq.s32.totalorder %s19, 0
    %p182 = por %p180, %p181
    %p183 = scmp.le.s32.totalorder 1, %s13
    %p184 = scmp.lt.s32.totalorder %s13, 3
    %p185 = pnand %p183, %p184
    %p186 = pneg %p185
    // Predicated region
    $region9: #{sparse_digress_forward.3} parent=5 // pred_check
      _
    $region10: #{sparse_digress_forward.3} parent=5 // pred_check_branch
      %188 = sbr.rel (%p185) target = $region12
    $region11: #{sparse_digress_forward.3} parent=5 // pred_region
      %s189 = ssub.s32 %s13, 1
      // Predicated region
      $region13: #{sparse_digress_forward.3} parent=11 // pred_check
        %p190 = pneg %p60
      $region14: #{sparse_digress_forward.3} parent=11 // pred_check_branch
        %192 = sbr.rel (%p190) target = $region16
      $region15: #{sparse_digress_forward.3} parent=11 // pred_region
        _
      $region16: #{sparse_digress_forward.3} parent=11 // pred_fallthru
        _
      // Predicated region
      $region17: #{sparse_digress_forward.3} parent=11 // pred_check
        %p193 = pneg %p81
      $region18: #{sparse_digress_forward.3} parent=11 // pred_check_branch
        %195 = sbr.rel (%p193) target = $region20
      $region19: #{sparse_digress_forward.3} parent=11 // pred_region
        _
      $region20: #{sparse_digress_forward.3} parent=11 // pred_fallthru
        _
      // Predicated region
      $region21: #{sparse_digress_forward.3} parent=11 // pred_check
        %p196 = pneg %p102
      $region22: #{sparse_digress_forward.3} parent=11 // pred_check_branch
        %198 = sbr.rel (%p196) target = $region24
      $region23: #{sparse_digress_forward.3} parent=11 // pred_region
        _
      $region24: #{sparse_digress_forward.3} parent=11 // pred_fallthru
        _
      // Predicated region
      $region25: #{sparse_digress_forward.3} parent=11 // pred_check
        %p199 = pneg %p123
      $region26: #{sparse_digress_forward.3} parent=11 // pred_check_branch
        %201 = sbr.rel (%p199) target = $region28
      $region27: #{sparse_digress_forward.3} parent=11 // pred_region
        _
      $region28: #{sparse_digress_forward.3} parent=11 // pred_fallthru
        _
    $region12: #{sparse_digress_forward.3} parent=5 // pred_fallthru
      _
    %p202 = scmp.lt.s32.totalorder %s13, 2
    // Predicated region
    $region29: #{sparse_digress_forward.3} parent=5 // pred_check
      %p203 = pneg %p202
    $region30: #{sparse_digress_forward.3} parent=5 // pred_check_branch
      %205 = sbr.rel (%p203) target = $region32
    $region31: #{sparse_digress_forward.3} parent=5 // pred_region
      // Predicated region
      $region33: #{sparse_digress_forward.3} parent=31 // pred_check
        %p206 = pneg %p33
      $region34: #{sparse_digress_forward.3} parent=31 // pred_check_branch
        %208 = sbr.rel (%p206) target = $region36
      $region35: #{sparse_digress_forward.3} parent=31 // pred_region
        %s209 = smul.u32 64, %s13
        %p210 = scmp.lt.s32.totalorder %s209, 127
        %s211 = scalar_select %p210, %s209, 127
        %s212 = smul.addr %s211, 8
        %s213 = scalar_lea.vmem %s0, %s212
        %s214 = smul.u32 64, %s13
      $region36: #{sparse_digress_forward.3} parent=31 // pred_fallthru
        _
    $region32: #{sparse_digress_forward.3} parent=5 // pred_fallthru
      _
    %p215 = scmp.le.s32.totalorder 1, %s13
    %p216 = scmp.lt.s32.totalorder %s13, 3
    %p217 = pnand %p215, %p216
    %p218 = pneg %p217
    // Predicated region
    $region37: #{sparse_digress_forward.3} parent=5 // pred_check
      _
    $region38: #{sparse_digress_forward.3} parent=5 // pred_check_branch
      %220 = sbr.rel (%p217) target = $region40
    $region39: #{sparse_digress_forward.3} parent=5 // pred_region
      %s221 = ssub.s32 %s13, 1
      %s222 = smul.u32 64, %s18
      %p223 = scmp.lt.s32.totalorder %s222, 127
      %s224 = scalar_select %p223, %s222, 127
      %s225 = smul.addr %s224, 8
      %s226 = scalar_lea.vmem %s0, %s225
      %p227 = pneg %p39
      %p228 = pneg %p36
      %p229 = pneg %p60
      %p230 = pneg %p57
      %p231 = pneg %p81
      %p232 = pneg %p78
      %p233 = pneg %p102
      %p234 = pneg %p99
      %p235 = pneg %p123
      %p236 = pneg %p120
      %p237 = pneg %p149
      %p238 = pneg %p146
      %s239 = smul.u32 64, %s18
      %p240 = scmp.lt.s32.totalorder %s239, 127
      %s241 = scalar_select %p240, %s239, 127
      %s242 = smul.addr %s241, 4
      %s243 = scalar_lea.vmem %s5, %s242
      %p244 = pneg %p175
      %p245 = pneg %p172
      %p246 = scmp.lt.s32.totalorder %s18, 1
      %s247 = scalar_select %p246, %s18, 1
      %s248 = smul.addr %s247, 2
      %s249 = scalar_lea.vmem %s6, %s248
      %s250 = smul.u32 64, %s18
      %p251 = scmp.lt.s32.totalorder %s250, 127
      %s252 = scalar_select %p251, %s250, 127
      %s253 = smul.addr %s252, 8
      %s254 = scalar_lea.vmem %s0, %s253
      %s255 = smul.u32 64, %s18
      %s256 = smul.u32 64, %s18
      %p257 = scmp.lt.s32.totalorder %s256, 127
      %s258 = scalar_select %p257, %s256, 127
      %s259 = smul.addr %s258, 4
      %s260 = scalar_lea.vmem %s5, %s259
      %s261 = smul.u32 64, %s18
      %p262 = scmp.lt.s32.totalorder %s18, 1
      %s263 = scalar_select %p262, %s18, 1
      %s264 = smul.addr %s263, 2
      %s265 = scalar_lea.vmem %s6, %s264
      %v266 = vld [vmem:[%s254] sm:$0xff]
      %v267 = vld [vmem:[%s254 + $0x8] sm:$0xff]
      %v268 = vld [vmem:[%s254 + $0x10] sm:$0xff]
      %v269 = vld [vmem:[%s254 + $0x18] sm:$0xff]
      %v270 = vld [vmem:[%s254 + $0x20] sm:$0xff]
      %v271 = vld [vmem:[%s254 + $0x28] sm:$0xff]
      %v272 = vld [vmem:[%s254 + $0x30] sm:$0xff]
      %v273 = vld [vmem:[%s254 + $0x38] sm:$0xff]
      %v274 = vld [vmem:[%s254 + $0x40] sm:$0xff]
      %v275 = vld [vmem:[%s254 + $0x48] sm:$0xff]
      %v276 = vld [vmem:[%s254 + $0x50] sm:$0xff]
      %v277 = vld [vmem:[%s254 + $0x58] sm:$0xff]
      %v278 = vld [vmem:[%s254 + $0x60] sm:$0xff]
      %v279 = vld [vmem:[%s254 + $0x68] sm:$0xff]
      %v280 = vld [vmem:[%s254 + $0x70] sm:$0xff]
      %v281 = vld [vmem:[%s254 + $0x78] sm:$0xff]
      %v282 = vld [vmem:[%s254 + $0x80] sm:$0xff]
      %v283 = vld [vmem:[%s254 + $0x88] sm:$0xff]
      %v284 = vld [vmem:[%s254 + $0x90] sm:$0xff]
      %v285 = vld [vmem:[%s254 + $0x98] sm:$0xff]
      %v286 = vld [vmem:[%s254 + $0xa0] sm:$0xff]
      %v287 = vld [vmem:[%s254 + $0xa8] sm:$0xff]
      %v288 = vld [vmem:[%s254 + $0xb0] sm:$0xff]
      %v289 = vld [vmem:[%s254 + $0xb8] sm:$0xff]
      %v290 = vld [vmem:[%s254 + $0xc0] sm:$0xff]
      %v291 = vld [vmem:[%s254 + $0xc8] sm:$0xff]
      %v292 = vld [vmem:[%s254 + $0xd0] sm:$0xff]
      %v293 = vld [vmem:[%s254 + $0xd8] sm:$0xff]
      %v294 = vld [vmem:[%s254 + $0xe0] sm:$0xff]
      %v295 = vld [vmem:[%s254 + $0xe8] sm:$0xff]
      %v296 = vld [vmem:[%s254 + $0xf0] sm:$0xff]
      %v297 = vld [vmem:[%s254 + $0xf8] sm:$0xff]
      %v298 = vld [vmem:[%s254 + $0x100] sm:$0xff]
      %v299 = vld [vmem:[%s254 + $0x108] sm:$0xff]
      %v300 = vld [vmem:[%s254 + $0x110] sm:$0xff]
      %v301 = vld [vmem:[%s254 + $0x118] sm:$0xff]
      %v302 = vld [vmem:[%s254 + $0x120] sm:$0xff]
      %v303 = vld [vmem:[%s254 + $0x128] sm:$0xff]
      %v304 = vld [vmem:[%s254 + $0x130] sm:$0xff]
      %v305 = vld [vmem:[%s254 + $0x138] sm:$0xff]
      %v306 = vld [vmem:[%s254 + $0x140] sm:$0xff]
      %v307 = vld [vmem:[%s254 + $0x148] sm:$0xff]
      %v308 = vld [vmem:[%s254 + $0x150] sm:$0xff]
      %v309 = vld [vmem:[%s254 + $0x158] sm:$0xff]
      %v310 = vld [vmem:[%s254 + $0x160] sm:$0xff]
      %v311 = vld [vmem:[%s254 + $0x168] sm:$0xff]
      %v312 = vld [vmem:[%s254 + $0x170] sm:$0xff]
      %v313 = vld [vmem:[%s254 + $0x178] sm:$0xff]
      %v314 = vld [vmem:[%s254 + $0x180] sm:$0xff]
      %v315 = vld [vmem:[%s254 + $0x188] sm:$0xff]
      %v316 = vld [vmem:[%s254 + $0x190] sm:$0xff]
      %v317 = vld [vmem:[%s254 + $0x198] sm:$0xff]
      %v318 = vld [vmem:[%s254 + $0x1a0] sm:$0xff]
      %v319 = vld [vmem:[%s254 + $0x1a8] sm:$0xff]
      %v320 = vld [vmem:[%s254 + $0x1b0] sm:$0xff]
      %v321 = vld [vmem:[%s254 + $0x1b8] sm:$0xff]
      %v322 = vld [vmem:[%s254 + $0x1c0] sm:$0xff]
      %v323 = vld [vmem:[%s254 + $0x1c8] sm:$0xff]
      %v324 = vld [vmem:[%s254 + $0x1d0] sm:$0xff]
      %v325 = vld [vmem:[%s254 + $0x1d8] sm:$0xff]
      %v326 = vld [vmem:[%s254 + $0x1e0] sm:$0xff]
      %v327 = vld [vmem:[%s254 + $0x1e8] sm:$0xff]
      %v328 = vld [vmem:[%s254 + $0x1f0] sm:$0xff]
      %v329 = vld [vmem:[%s254 + $0x1f8] sm:$0xff]
      %v330 = vlaneseq
      %v331 = vand.u32 %v330, 127
      %v332 = vmul.f32 %v266, 20.0
      %v333 = vmul.f32 %v267, 20.0
      %v334 = vmul.f32 %v268, 20.0
      %v335 = vmul.f32 %v269, 20.0
      %v336 = vmul.f32 %v270, 20.0
      %v337 = vmul.f32 %v271, 20.0
      %v338 = vmul.f32 %v272, 20.0
      %v339 = vmul.f32 %v273, 20.0
      %v340 = vmul.f32 %v274, 20.0
      %v341 = vmul.f32 %v275, 20.0
      %v342 = vmul.f32 %v276, 20.0
      %v343 = vmul.f32 %v277, 20.0
      %v344 = vmul.f32 %v278, 20.0
      %v345 = vmul.f32 %v279, 20.0
      %v346 = vmul.f32 %v280, 20.0
      %v347 = vmul.f32 %v281, 20.0
      %v348 = vmul.f32 %v282, 20.0
      %v349 = vmul.f32 %v283, 20.0
      %v350 = vmul.f32 %v284, 20.0
      %v351 = vmul.f32 %v285, 20.0
      %v352 = vmul.f32 %v286, 20.0
      %v353 = vmul.f32 %v287, 20.0
      %v354 = vmul.f32 %v288, 20.0
      %v355 = vmul.f32 %v289, 20.0
      %v356 = vmul.f32 %v290, 20.0
      %v357 = vmul.f32 %v291, 20.0
      %v358 = vmul.f32 %v292, 20.0
      %v359 = vmul.f32 %v293, 20.0
      %v360 = vmul.f32 %v294, 20.0
      %v361 = vmul.f32 %v295, 20.0
      %v362 = vmul.f32 %v296, 20.0
      %v363 = vmul.f32 %v297, 20.0
      %v364 = vmul.f32 %v298, 20.0
      %v365 = vmul.f32 %v299, 20.0
      %v366 = vmul.f32 %v300, 20.0
      %v367 = vmul.f32 %v301, 20.0
      %v368 = vmul.f32 %v302, 20.0
      %v369 = vmul.f32 %v303, 20.0
      %v370 = vmul.f32 %v304, 20.0
      %v371 = vmul.f32 %v305, 20.0
      %v372 = vmul.f32 %v306, 20.0
      %v373 = vmul.f32 %v307, 20.0
      %v374 = vmul.f32 %v308, 20.0
      %v375 = vmul.f32 %v309, 20.0
      %v376 = vmul.f32 %v310, 20.0
      %v377 = vmul.f32 %v311, 20.0
      %v378 = vmul.f32 %v312, 20.0
      %v379 = vmul.f32 %v313, 20.0
      %v380 = vmul.f32 %v314, 20.0
      %v381 = vmul.f32 %v315, 20.0
      %v382 = vmul.f32 %v316, 20.0
      %v383 = vmul.f32 %v317, 20.0
      %v384 = vmul.f32 %v318, 20.0
      %v385 = vmul.f32 %v319, 20.0
      %v386 = vmul.f32 %v320, 20.0
      %v387 = vmul.f32 %v321, 20.0
      %v388 = vmul.f32 %v322, 20.0
      %v389 = vmul.f32 %v323, 20.0
      %v390 = vmul.f32 %v324, 20.0
      %v391 = vmul.f32 %v325, 20.0
      %v392 = vmul.f32 %v326, 20.0
      %v393 = vmul.f32 %v327, 20.0
      %v394 = vmul.f32 %v328, 20.0
      %v395 = vmul.f32 %v329, 20.0
      %v396 = vfloor.f32 %v332
      %v397 = vfloor.f32 %v333
      %v398 = vfloor.f32 %v334
      %v399 = vfloor.f32 %v335
      %v400 = vfloor.f32 %v336
      %v401 = vfloor.f32 %v337
      %v402 = vfloor.f32 %v338
      %v403 = vfloor.f32 %v339
      %v404 = vfloor.f32 %v340
      %v405 = vfloor.f32 %v341
      %v406 = vfloor.f32 %v342
      %v407 = vfloor.f32 %v343
      %v408 = vfloor.f32 %v344
      %v409 = vfloor.f32 %v345
      %v410 = vfloor.f32 %v346
      %v411 = vfloor.f32 %v347
      %v412 = vfloor.f32 %v348
      %v413 = vfloor.f32 %v349
      %v414 = vfloor.f32 %v350
      %v415 = vfloor.f32 %v351
      %v416 = vfloor.f32 %v352
      %v417 = vfloor.f32 %v353
      %v418 = vfloor.f32 %v354
      %v419 = vfloor.f32 %v355
      %v420 = vfloor.f32 %v356
      %v421 = vfloor.f32 %v357
      %v422 = vfloor.f32 %v358
      %v423 = vfloor.f32 %v359
      %v424 = vfloor.f32 %v360
      %v425 = vfloor.f32 %v361
      %v426 = vfloor.f32 %v362
      %v427 = vfloor.f32 %v363
      %v428 = vfloor.f32 %v364
      %v429 = vfloor.f32 %v365
      %v430 = vfloor.f32 %v366
      %v431 = vfloor.f32 %v367
      %v432 = vfloor.f32 %v368
      %v433 = vfloor.f32 %v369
      %v434 = vfloor.f32 %v370
      %v435 = vfloor.f32 %v371
      %v436 = vfloor.f32 %v372
      %v437 = vfloor.f32 %v373
      %v438 = vfloor.f32 %v374
      %v439 = vfloor.f32 %v375
      %v440 = vfloor.f32 %v376
      %v441 = vfloor.f32 %v377
      %v442 = vfloor.f32 %v378
      %v443 = vfloor.f32 %v379
      %v444 = vfloor.f32 %v380
      %v445 = vfloor.f32 %v381
      %v446 = vfloor.f32 %v382
      %v447 = vfloor.f32 %v383
      %v448 = vfloor.f32 %v384
      %v449 = vfloor.f32 %v385
      %v450 = vfloor.f32 %v386
      %v451 = vfloor.f32 %v387
      %v452 = vfloor.f32 %v388
      %v453 = vfloor.f32 %v389
      %v454 = vfloor.f32 %v390
      %v455 = vfloor.f32 %v391
      %v456 = vfloor.f32 %v392
      %v457 = vfloor.f32 %v393
      %v458 = vfloor.f32 %v394
      %v459 = vfloor.f32 %v395
      %v460 = vmin.f32 %v396, 19.0
      %v461 = vmin.f32 %v397, 19.0
      %v462 = vmin.f32 %v398, 19.0
      %v463 = vmin.f32 %v399, 19.0
      %v464 = vmin.f32 %v400, 19.0
      %v465 = vmin.f32 %v401, 19.0
      %v466 = vmin.f32 %v402, 19.0
      %v467 = vmin.f32 %v403, 19.0
      %v468 = vmin.f32 %v404, 19.0
      %v469 = vmin.f32 %v405, 19.0
      %v470 = vmin.f32 %v406, 19.0
      %v471 = vmin.f32 %v407, 19.0
      %v472 = vmin.f32 %v408, 19.0
      %v473 = vmin.f32 %v409, 19.0
      %v474 = vmin.f32 %v410, 19.0
      %v475 = vmin.f32 %v411, 19.0
      %v476 = vmin.f32 %v412, 19.0
      %v477 = vmin.f32 %v413, 19.0
      %v478 = vmin.f32 %v414, 19.0
      %v479 = vmin.f32 %v415, 19.0
      %v480 = vmin.f32 %v416, 19.0
      %v481 = vmin.f32 %v417, 19.0
      %v482 = vmin.f32 %v418, 19.0
      %v483 = vmin.f32 %v419, 19.0
      %v484 = vmin.f32 %v420, 19.0
      %v485 = vmin.f32 %v421, 19.0
      %v486 = vmin.f32 %v422, 19.0
      %v487 = vmin.f32 %v423, 19.0
      %v488 = vmin.f32 %v424, 19.0
      %v489 = vmin.f32 %v425, 19.0
      %v490 = vmin.f32 %v426, 19.0
      %v491 = vmin.f32 %v427, 19.0
      %v492 = vmin.f32 %v428, 19.0
      %v493 = vmin.f32 %v429, 19.0
      %v494 = vmin.f32 %v430, 19.0
      %v495 = vmin.f32 %v431, 19.0
      %v496 = vmin.f32 %v432, 19.0
      %v497 = vmin.f32 %v433, 19.0
      %v498 = vmin.f32 %v434, 19.0
      %v499 = vmin.f32 %v435, 19.0
      %v500 = vmin.f32 %v436, 19.0
      %v501 = vmin.f32 %v437, 19.0
      %v502 = vmin.f32 %v438, 19.0
      %v503 = vmin.f32 %v439, 19.0
      %v504 = vmin.f32 %v440, 19.0
      %v505 = vmin.f32 %v441, 19.0
      %v506 = vmin.f32 %v442, 19.0
      %v507 = vmin.f32 %v443, 19.0
      %v508 = vmin.f32 %v444, 19.0
      %v509 = vmin.f32 %v445, 19.0
      %v510 = vmin.f32 %v446, 19.0
      %v511 = vmin.f32 %v447, 19.0
      %v512 = vmin.f32 %v448, 19.0
      %v513 = vmin.f32 %v449, 19.0
      %v514 = vmin.f32 %v450, 19.0
      %v515 = vmin.f32 %v451, 19.0
      %v516 = vmin.f32 %v452, 19.0
      %v517 = vmin.f32 %v453, 19.0
      %v518 = vmin.f32 %v454, 19.0
      %v519 = vmin.f32 %v455, 19.0
      %v520 = vmin.f32 %v456, 19.0
      %v521 = vmin.f32 %v457, 19.0
      %v522 = vmin.f32 %v458, 19.0
      %v523 = vmin.f32 %v459, 19.0
      %v524 = vcvt.f32.s32.to.zero.pseudo %v460
      %v525 = vcvt.f32.s32.to.zero.pseudo %v461
      %v526 = vcvt.f32.s32.to.zero.pseudo %v462
      %v527 = vcvt.f32.s32.to.zero.pseudo %v463
      %v528 = vcvt.f32.s32.to.zero.pseudo %v464
      %v529 = vcvt.f32.s32.to.zero.pseudo %v465
      %v530 = vcvt.f32.s32.to.zero.pseudo %v466
      %v531 = vcvt.f32.s32.to.zero.pseudo %v467
      %v532 = vcvt.f32.s32.to.zero.pseudo %v468
      %v533 = vcvt.f32.s32.to.zero.pseudo %v469
      %v534 = vcvt.f32.s32.to.zero.pseudo %v470
      %v535 = vcvt.f32.s32.to.zero.pseudo %v471
      %v536 = vcvt.f32.s32.to.zero.pseudo %v472
      %v537 = vcvt.f32.s32.to.zero.pseudo %v473
      %v538 = vcvt.f32.s32.to.zero.pseudo %v474
      %v539 = vcvt.f32.s32.to.zero.pseudo %v475
      %v540 = vcvt.f32.s32.to.zero.pseudo %v476
      %v541 = vcvt.f32.s32.to.zero.pseudo %v477
      %v542 = vcvt.f32.s32.to.zero.pseudo %v478
      %v543 = vcvt.f32.s32.to.zero.pseudo %v479
      %v544 = vcvt.f32.s32.to.zero.pseudo %v480
      %v545 = vcvt.f32.s32.to.zero.pseudo %v481
      %v546 = vcvt.f32.s32.to.zero.pseudo %v482
      %v547 = vcvt.f32.s32.to.zero.pseudo %v483
      %v548 = vcvt.f32.s32.to.zero.pseudo %v484
      %v549 = vcvt.f32.s32.to.zero.pseudo %v485
      %v550 = vcvt.f32.s32.to.zero.pseudo %v486
      %v551 = vcvt.f32.s32.to.zero.pseudo %v487
      %v552 = vcvt.f32.s32.to.zero.pseudo %v488
      %v553 = vcvt.f32.s32.to.zero.pseudo %v489
      %v554 = vcvt.f32.s32.to.zero.pseudo %v490
      %v555 = vcvt.f32.s32.to.zero.pseudo %v491
      %v556 = vcvt.f32.s32.to.zero.pseudo %v492
      %v557 = vcvt.f32.s32.to.zero.pseudo %v493
      %v558 = vcvt.f32.s32.to.zero.pseudo %v494
      %v559 = vcvt.f32.s32.to.zero.pseudo %v495
      %v560 = vcvt.f32.s32.to.zero.pseudo %v496
      %v561 = vcvt.f32.s32.to.zero.pseudo %v497
      %v562 = vcvt.f32.s32.to.zero.pseudo %v498
      %v563 = vcvt.f32.s32.to.zero.pseudo %v499
      %v564 = vcvt.f32.s32.to.zero.pseudo %v500
      %v565 = vcvt.f32.s32.to.zero.pseudo %v501
      %v566 = vcvt.f32.s32.to.zero.pseudo %v502
      %v567 = vcvt.f32.s32.to.zero.pseudo %v503
      %v568 = vcvt.f32.s32.to.zero.pseudo %v504
      %v569 = vcvt.f32.s32.to.zero.pseudo %v505
      %v570 = vcvt.f32.s32.to.zero.pseudo %v506
      %v571 = vcvt.f32.s32.to.zero.pseudo %v507
      %v572 = vcvt.f32.s32.to.zero.pseudo %v508
      %v573 = vcvt.f32.s32.to.zero.pseudo %v509
      %v574 = vcvt.f32.s32.to.zero.pseudo %v510
      %v575 = vcvt.f32.s32.to.zero.pseudo %v511
      %v576 = vcvt.f32.s32.to.zero.pseudo %v512
      %v577 = vcvt.f32.s32.to.zero.pseudo %v513
      %v578 = vcvt.f32.s32.to.zero.pseudo %v514
      %v579 = vcvt.f32.s32.to.zero.pseudo %v515
      %v580 = vcvt.f32.s32.to.zero.pseudo %v516
      %v581 = vcvt.f32.s32.to.zero.pseudo %v517
      %v582 = vcvt.f32.s32.to.zero.pseudo %v518
      %v583 = vcvt.f32.s32.to.zero.pseudo %v519
      %v584 = vcvt.f32.s32.to.zero.pseudo %v520
      %v585 = vcvt.f32.s32.to.zero.pseudo %v521
      %v586 = vcvt.f32.s32.to.zero.pseudo %v522
      %v587 = vcvt.f32.s32.to.zero.pseudo %v523
      %588 = vset.pattern.permute.xlu0 25
      %589 = vperm.xlu0 %588, %v524
      %v590 = vpop.permute.xlu0 %589
      %591 = vset.pattern.permute.xlu0 25
      %592 = vperm.xlu0 %591, %v525
      %v593 = vpop.permute.xlu0 %592
      %594 = vset.pattern.permute.xlu0 25
      %595 = vperm.xlu0 %594, %v526
      %v596 = vpop.permute.xlu0 %595
      %597 = vset.pattern.permute.xlu0 25
      %598 = vperm.xlu0 %597, %v527
      %v599 = vpop.permute.xlu0 %598
      %600 = vset.pattern.permute.xlu0 25
      %601 = vperm.xlu0 %600, %v528
      %v602 = vpop.permute.xlu0 %601
      %603 = vset.pattern.permute.xlu0 25
      %604 = vperm.xlu0 %603, %v529
      %v605 = vpop.permute.xlu0 %604
      %606 = vset.pattern.permute.xlu0 25
      %607 = vperm.xlu0 %606, %v530
      %v608 = vpop.permute.xlu0 %607
      %609 = vset.pattern.permute.xlu0 25
      %610 = vperm.xlu0 %609, %v531
      %v611 = vpop.permute.xlu0 %610
      %612 = vset.pattern.permute.xlu0 25
      %613 = vperm.xlu0 %612, %v532
      %v614 = vpop.permute.xlu0 %613
      %615 = vset.pattern.permute.xlu0 25
      %616 = vperm.xlu0 %615, %v533
      %v617 = vpop.permute.xlu0 %616
      %618 = vset.pattern.permute.xlu0 25
      %619 = vperm.xlu0 %618, %v534
      %v620 = vpop.permute.xlu0 %619
      %621 = vset.pattern.permute.xlu0 25
      %622 = vperm.xlu0 %621, %v535
      %v623 = vpop.permute.xlu0 %622
      %624 = vset.pattern.permute.xlu0 25
      %625 = vperm.xlu0 %624, %v536
      %v626 = vpop.permute.xlu0 %625
      %627 = vset.pattern.permute.xlu0 25
      %628 = vperm.xlu0 %627, %v537
      %v629 = vpop.permute.xlu0 %628
      %630 = vset.pattern.permute.xlu0 25
      %631 = vperm.xlu0 %630, %v538
      %v632 = vpop.permute.xlu0 %631
      %633 = vset.pattern.permute.xlu0 25
      %634 = vperm.xlu0 %633, %v539
      %v635 = vpop.permute.xlu0 %634
      %636 = vset.pattern.permute.xlu0 25
      %637 = vperm.xlu0 %636, %v540
      %v638 = vpop.permute.xlu0 %637
      %639 = vset.pattern.permute.xlu0 25
      %640 = vperm.xlu0 %639, %v541
      %v641 = vpop.permute.xlu0 %640
      %642 = vset.pattern.permute.xlu0 25
      %643 = vperm.xlu0 %642, %v542
      %v644 = vpop.permute.xlu0 %643
      %645 = vset.pattern.permute.xlu0 25
      %646 = vperm.xlu0 %645, %v543
      %v647 = vpop.permute.xlu0 %646
      %648 = vset.pattern.permute.xlu0 25
      %649 = vperm.xlu0 %648, %v544
      %v650 = vpop.permute.xlu0 %649
      %651 = vset.pattern.permute.xlu0 25
      %652 = vperm.xlu0 %651, %v545
      %v653 = vpop.permute.xlu0 %652
      %654 = vset.pattern.permute.xlu0 25
      %655 = vperm.xlu0 %654, %v546
      %v656 = vpop.permute.xlu0 %655
      %657 = vset.pattern.permute.xlu0 25
      %658 = vperm.xlu0 %657, %v547
      %v659 = vpop.permute.xlu0 %658
      %660 = vset.pattern.permute.xlu0 25
      %661 = vperm.xlu0 %660, %v548
      %v662 = vpop.permute.xlu0 %661
      %663 = vset.pattern.permute.xlu0 25
      %664 = vperm.xlu0 %663, %v549
      %v665 = vpop.permute.xlu0 %664
      %666 = vset.pattern.permute.xlu0 25
      %667 = vperm.xlu0 %666, %v550
      %v668 = vpop.permute.xlu0 %667
      %669 = vset.pattern.permute.xlu0 25
      %670 = vperm.xlu0 %669, %v551
      %v671 = vpop.permute.xlu0 %670
      %672 = vset.pattern.permute.xlu0 25
      %673 = vperm.xlu0 %672, %v552
      %v674 = vpop.permute.xlu0 %673
      %675 = vset.pattern.permute.xlu0 25
      %676 = vperm.xlu0 %675, %v553
      %v677 = vpop.permute.xlu0 %676
      %678 = vset.pattern.permute.xlu0 25
      %679 = vperm.xlu0 %678, %v554
      %v680 = vpop.permute.xlu0 %679
      %681 = vset.pattern.permute.xlu0 25
      %682 = vperm.xlu0 %681, %v555
      %v683 = vpop.permute.xlu0 %682
      %684 = vset.pattern.permute.xlu0 25
      %685 = vperm.xlu0 %684, %v556
      %v686 = vpop.permute.xlu0 %685
      %687 = vset.pattern.permute.xlu0 25
      %688 = vperm.xlu0 %687, %v557
      %v689 = vpop.permute.xlu0 %688
      %690 = vset.pattern.permute.xlu0 25
      %691 = vperm.xlu0 %690, %v558
      %v692 = vpop.permute.xlu0 %691
      %693 = vset.pattern.permute.xlu0 25
      %694 = vperm.xlu0 %693, %v559
      %v695 = vpop.permute.xlu0 %694
      %696 = vset.pattern.permute.xlu0 25
      %697 = vperm.xlu0 %696, %v560
      %v698 = vpop.permute.xlu0 %697
      %699 = vset.pattern.permute.xlu0 25
      %700 = vperm.xlu0 %699, %v561
      %v701 = vpop.permute.xlu0 %700
      %702 = vset.pattern.permute.xlu0 25
      %703 = vperm.xlu0 %702, %v562
      %v704 = vpop.permute.xlu0 %703
      %705 = vset.pattern.permute.xlu0 25
      %706 = vperm.xlu0 %705, %v563
      %v707 = vpop.permute.xlu0 %706
      %708 = vset.pattern.permute.xlu0 25
      %709 = vperm.xlu0 %708, %v564
      %v710 = vpop.permute.xlu0 %709
      %711 = vset.pattern.permute.xlu0 25
      %712 = vperm.xlu0 %711, %v565
      %v713 = vpop.permute.xlu0 %712
      %714 = vset.pattern.permute.xlu0 25
      %715 = vperm.xlu0 %714, %v566
      %v716 = vpop.permute.xlu0 %715
      %717 = vset.pattern.permute.xlu0 25
      %718 = vperm.xlu0 %717, %v567
      %v719 = vpop.permute.xlu0 %718
      %720 = vset.pattern.permute.xlu0 25
      %721 = vperm.xlu0 %720, %v568
      %v722 = vpop.permute.xlu0 %721
      %723 = vset.pattern.permute.xlu0 25
      %724 = vperm.xlu0 %723, %v569
      %v725 = vpop.permute.xlu0 %724
      %726 = vset.pattern.permute.xlu0 25
      %727 = vperm.xlu0 %726, %v570
      %v728 = vpop.permute.xlu0 %727
      %729 = vset.pattern.permute.xlu0 25
      %730 = vperm.xlu0 %729, %v571
      %v731 = vpop.permute.xlu0 %730
      %732 = vset.pattern.permute.xlu0 25
      %733 = vperm.xlu0 %732, %v572
      %v734 = vpop.permute.xlu0 %733
      %735 = vset.pattern.permute.xlu0 25
      %736 = vperm.xlu0 %735, %v573
      %v737 = vpop.permute.xlu0 %736
      %738 = vset.pattern.permute.xlu0 25
      %739 = vperm.xlu0 %738, %v574
      %v740 = vpop.permute.xlu0 %739
      %741 = vset.pattern.permute.xlu0 25
      %742 = vperm.xlu0 %741, %v575
      %v743 = vpop.permute.xlu0 %742
      %744 = vset.pattern.permute.xlu0 25
      %745 = vperm.xlu0 %744, %v576
      %v746 = vpop.permute.xlu0 %745
      %747 = vset.pattern.permute.xlu0 25
      %748 = vperm.xlu0 %747, %v577
      %v749 = vpop.permute.xlu0 %748
      %750 = vset.pattern.permute.xlu0 25
      %751 = vperm.xlu0 %750, %v578
      %v752 = vpop.permute.xlu0 %751
      %753 = vset.pattern.permute.xlu0 25
      %754 = vperm.xlu0 %753, %v579
      %v755 = vpop.permute.xlu0 %754
      %756 = vset.pattern.permute.xlu0 25
      %757 = vperm.xlu0 %756, %v580
      %v758 = vpop.permute.xlu0 %757
      %759 = vset.pattern.permute.xlu0 25
      %760 = vperm.xlu0 %759, %v581
      %v761 = vpop.permute.xlu0 %760
      %762 = vset.pattern.permute.xlu0 25
      %763 = vperm.xlu0 %762, %v582
      %v764 = vpop.permute.xlu0 %763
      %765 = vset.pattern.permute.xlu0 25
      %766 = vperm.xlu0 %765, %v583
      %v767 = vpop.permute.xlu0 %766
      %768 = vset.pattern.permute.xlu0 25
      %769 = vperm.xlu0 %768, %v584
      %v770 = vpop.permute.xlu0 %769
      %771 = vset.pattern.permute.xlu0 25
      %772 = vperm.xlu0 %771, %v585
      %v773 = vpop.permute.xlu0 %772
      %774 = vset.pattern.permute.xlu0 25
      %775 = vperm.xlu0 %774, %v586
      %v776 = vpop.permute.xlu0 %775
      %777 = vset.pattern.permute.xlu0 25
      %778 = vperm.xlu0 %777, %v587
      %v779 = vpop.permute.xlu0 %778
      %vm780 = vcmp.eq.s32.totalorder %v331, %v590
      %vm781 = vcmp.eq.s32.totalorder %v331, %v593
      %vm782 = vcmp.eq.s32.totalorder %v331, %v596
      %vm783 = vcmp.eq.s32.totalorder %v331, %v599
      %vm784 = vcmp.eq.s32.totalorder %v331, %v602
      %vm785 = vcmp.eq.s32.totalorder %v331, %v605
      %vm786 = vcmp.eq.s32.totalorder %v331, %v608
      %vm787 = vcmp.eq.s32.totalorder %v331, %v611
      %vm788 = vcmp.eq.s32.totalorder %v331, %v614
      %vm789 = vcmp.eq.s32.totalorder %v331, %v617
      %vm790 = vcmp.eq.s32.totalorder %v331, %v620
      %vm791 = vcmp.eq.s32.totalorder %v331, %v623
      %vm792 = vcmp.eq.s32.totalorder %v331, %v626
      %vm793 = vcmp.eq.s32.totalorder %v331, %v629
      %vm794 = vcmp.eq.s32.totalorder %v331, %v632
      %vm795 = vcmp.eq.s32.totalorder %v331, %v635
      %vm796 = vcmp.eq.s32.totalorder %v331, %v638
      %vm797 = vcmp.eq.s32.totalorder %v331, %v641
      %vm798 = vcmp.eq.s32.totalorder %v331, %v644
      %vm799 = vcmp.eq.s32.totalorder %v331, %v647
      %vm800 = vcmp.eq.s32.totalorder %v331, %v650
      %vm801 = vcmp.eq.s32.totalorder %v331, %v653
      %vm802 = vcmp.eq.s32.totalorder %v331, %v656
      %vm803 = vcmp.eq.s32.totalorder %v331, %v659
      %vm804 = vcmp.eq.s32.totalorder %v331, %v662
      %vm805 = vcmp.eq.s32.totalorder %v331, %v665
      %vm806 = vcmp.eq.s32.totalorder %v331, %v668
      %vm807 = vcmp.eq.s32.totalorder %v331, %v671
      %vm808 = vcmp.eq.s32.totalorder %v331, %v674
      %vm809 = vcmp.eq.s32.totalorder %v331, %v677
      %vm810 = vcmp.eq.s32.totalorder %v331, %v680
      %vm811 = vcmp.eq.s32.totalorder %v331, %v683
      %vm812 = vcmp.eq.s32.totalorder %v331, %v686
      %vm813 = vcmp.eq.s32.totalorder %v331, %v689
      %vm814 = vcmp.eq.s32.totalorder %v331, %v692
      %vm815 = vcmp.eq.s32.totalorder %v331, %v695
      %vm816 = vcmp.eq.s32.totalorder %v331, %v698
      %vm817 = vcmp.eq.s32.totalorder %v331, %v701
      %vm818 = vcmp.eq.s32.totalorder %v331, %v704
      %vm819 = vcmp.eq.s32.totalorder %v331, %v707
      %vm820 = vcmp.eq.s32.totalorder %v331, %v710
      %vm821 = vcmp.eq.s32.totalorder %v331, %v713
      %vm822 = vcmp.eq.s32.totalorder %v331, %v716
      %vm823 = vcmp.eq.s32.totalorder %v331, %v719
      %vm824 = vcmp.eq.s32.totalorder %v331, %v722
      %vm825 = vcmp.eq.s32.totalorder %v331, %v725
      %vm826 = vcmp.eq.s32.totalorder %v331, %v728
      %vm827 = vcmp.eq.s32.totalorder %v331, %v731
      %vm828 = vcmp.eq.s32.totalorder %v331, %v734
      %vm829 = vcmp.eq.s32.totalorder %v331, %v737
      %vm830 = vcmp.eq.s32.totalorder %v331, %v740
      %vm831 = vcmp.eq.s32.totalorder %v331, %v743
      %vm832 = vcmp.eq.s32.totalorder %v331, %v746
      %vm833 = vcmp.eq.s32.totalorder %v331, %v749
      %vm834 = vcmp.eq.s32.totalorder %v331, %v752
      %vm835 = vcmp.eq.s32.totalorder %v331, %v755
      %vm836 = vcmp.eq.s32.totalorder %v331, %v758
      %vm837 = vcmp.eq.s32.totalorder %v331, %v761
      %vm838 = vcmp.eq.s32.totalorder %v331, %v764
      %vm839 = vcmp.eq.s32.totalorder %v331, %v767
      %vm840 = vcmp.eq.s32.totalorder %v331, %v770
      %vm841 = vcmp.eq.s32.totalorder %v331, %v773
      %vm842 = vcmp.eq.s32.totalorder %v331, %v776
      %vm843 = vcmp.eq.s32.totalorder %v331, %v779
      %v844 = vsel %vm780, 1, 0
      %v845 = vsel %vm781, 1, 0
      %v846 = vsel %vm782, 1, 0
      %v847 = vsel %vm783, 1, 0
      %v848 = vsel %vm784, 1, 0
      %v849 = vsel %vm785, 1, 0
      %v850 = vsel %vm786, 1, 0
      %v851 = vsel %vm787, 1, 0
      %v852 = vsel %vm788, 1, 0
      %v853 = vsel %vm789, 1, 0
      %v854 = vsel %vm790, 1, 0
      %v855 = vsel %vm791, 1, 0
      %v856 = vsel %vm792, 1, 0
      %v857 = vsel %vm793, 1, 0
      %v858 = vsel %vm794, 1, 0
      %v859 = vsel %vm795, 1, 0
      %v860 = vsel %vm796, 1, 0
      %v861 = vsel %vm797, 1, 0
      %v862 = vsel %vm798, 1, 0
      %v863 = vsel %vm799, 1, 0
      %v864 = vsel %vm800, 1, 0
      %v865 = vsel %vm801, 1, 0
      %v866 = vsel %vm802, 1, 0
      %v867 = vsel %vm803, 1, 0
      %v868 = vsel %vm804, 1, 0
      %v869 = vsel %vm805, 1, 0
      %v870 = vsel %vm806, 1, 0
      %v871 = vsel %vm807, 1, 0
      %v872 = vsel %vm808, 1, 0
      %v873 = vsel %vm809, 1, 0
      %v874 = vsel %vm810, 1, 0
      %v875 = vsel %vm811, 1, 0
      %v876 = vsel %vm812, 1, 0
      %v877 = vsel %vm813, 1, 0
      %v878 = vsel %vm814, 1, 0
      %v879 = vsel %vm815, 1, 0
      %v880 = vsel %vm816, 1, 0
      %v881 = vsel %vm817, 1, 0
      %v882 = vsel %vm818, 1, 0
      %v883 = vsel %vm819, 1, 0
      %v884 = vsel %vm820, 1, 0
      %v885 = vsel %vm821, 1, 0
      %v886 = vsel %vm822, 1, 0
      %v887 = vsel %vm823, 1, 0
      %v888 = vsel %vm824, 1, 0
      %v889 = vsel %vm825, 1, 0
      %v890 = vsel %vm826, 1, 0
      %v891 = vsel %vm827, 1, 0
      %v892 = vsel %vm828, 1, 0
      %v893 = vsel %vm829, 1, 0
      %v894 = vsel %vm830, 1, 0
      %v895 = vsel %vm831, 1, 0
      %v896 = vsel %vm832, 1, 0
      %v897 = vsel %vm833, 1, 0
      %v898 = vsel %vm834, 1, 0
      %v899 = vsel %vm835, 1, 0
      %v900 = vsel %vm836, 1, 0
      %v901 = vsel %vm837, 1, 0
      %v902 = vsel %vm838, 1, 0
      %v903 = vsel %vm839, 1, 0
      %v904 = vsel %vm840, 1, 0
      %v905 = vsel %vm841, 1, 0
      %v906 = vsel %vm842, 1, 0
      %v907 = vsel %vm843, 1, 0
      %v908 = vcvt.s32.f32 %v844
      %v909 = vcvt.s32.f32 %v845
      %v910 = vcvt.s32.f32 %v846
      %v911 = vcvt.s32.f32 %v847
      %v912 = vcvt.s32.f32 %v848
      %v913 = vcvt.s32.f32 %v849
      %v914 = vcvt.s32.f32 %v850
      %v915 = vcvt.s32.f32 %v851
      %v916 = vcvt.s32.f32 %v852
      %v917 = vcvt.s32.f32 %v853
      %v918 = vcvt.s32.f32 %v854
      %v919 = vcvt.s32.f32 %v855
      %v920 = vcvt.s32.f32 %v856
      %v921 = vcvt.s32.f32 %v857
      %v922 = vcvt.s32.f32 %v858
      %v923 = vcvt.s32.f32 %v859
      %v924 = vcvt.s32.f32 %v860
      %v925 = vcvt.s32.f32 %v861
      %v926 = vcvt.s32.f32 %v862
      %v927 = vcvt.s32.f32 %v863
      %v928 = vcvt.s32.f32 %v864
      %v929 = vcvt.s32.f32 %v865
      %v930 = vcvt.s32.f32 %v866
      %v931 = vcvt.s32.f32 %v867
      %v932 = vcvt.s32.f32 %v868
      %v933 = vcvt.s32.f32 %v869
      %v934 = vcvt.s32.f32 %v870
      %v935 = vcvt.s32.f32 %v871
      %v936 = vcvt.s32.f32 %v872
      %v937 = vcvt.s32.f32 %v873
      %v938 = vcvt.s32.f32 %v874
      %v939 = vcvt.s32.f32 %v875
      %v940 = vcvt.s32.f32 %v876
      %v941 = vcvt.s32.f32 %v877
      %v942 = vcvt.s32.f32 %v878
      %v943 = vcvt.s32.f32 %v879
      %v944 = vcvt.s32.f32 %v880
      %v945 = vcvt.s32.f32 %v881
      %v946 = vcvt.s32.f32 %v882
      %v947 = vcvt.s32.f32 %v883
      %v948 = vcvt.s32.f32 %v884
      %v949 = vcvt.s32.f32 %v885
      %v950 = vcvt.s32.f32 %v886
      %v951 = vcvt.s32.f32 %v887
      %v952 = vcvt.s32.f32 %v888
      %v953 = vcvt.s32.f32 %v889
      %v954 = vcvt.s32.f32 %v890
      %v955 = vcvt.s32.f32 %v891
      %v956 = vcvt.s32.f32 %v892
      %v957 = vcvt.s32.f32 %v893
      %v958 = vcvt.s32.f32 %v894
      %v959 = vcvt.s32.f32 %v895
      %v960 = vcvt.s32.f32 %v896
      %v961 = vcvt.s32.f32 %v897
      %v962 = vcvt.s32.f32 %v898
      %v963 = vcvt.s32.f32 %v899
      %v964 = vcvt.s32.f32 %v900
      %v965 = vcvt.s32.f32 %v901
      %v966 = vcvt.s32.f32 %v902
      %v967 = vcvt.s32.f32 %v903
      %v968 = vcvt.s32.f32 %v904
      %v969 = vcvt.s32.f32 %v905
      %v970 = vcvt.s32.f32 %v906
      %v971 = vcvt.s32.f32 %v907
      %vm972 = vcmp.lt.s32.totalorder %v331, 20
      %v973 = vsel %vm972, 1, 0
      %vm974 = vcmp.eq.s32.totalorder %v973, 1
      %v975 = vsel %vm974, %v266, 0.0
      %v976 = vsel %vm974, %v267, 0.0
      %v977 = vsel %vm974, %v268, 0.0
      %v978 = vsel %vm974, %v269, 0.0
      %v979 = vsel %vm974, %v270, 0.0
      %v980 = vsel %vm974, %v271, 0.0
      %v981 = vsel %vm974, %v272, 0.0
      %v982 = vsel %vm974, %v273, 0.0
      %v983 = vsel %vm974, %v274, 0.0
      %v984 = vsel %vm974, %v275, 0.0
      %v985 = vsel %vm974, %v276, 0.0
      %v986 = vsel %vm974, %v277, 0.0
      %v987 = vsel %vm974, %v278, 0.0
      %v988 = vsel %vm974, %v279, 0.0
      %v989 = vsel %vm974, %v280, 0.0
      %v990 = vsel %vm974, %v281, 0.0
      %v991 = vsel %vm974, %v282, 0.0
      %v992 = vsel %vm974, %v283, 0.0
      %v993 = vsel %vm974, %v284, 0.0
      %v994 = vsel %vm974, %v285, 0.0
      %v995 = vsel %vm974, %v286, 0.0
      %v996 = vsel %vm974, %v287, 0.0
      %v997 = vsel %vm974, %v288, 0.0
      %v998 = vsel %vm974, %v289, 0.0
      %v999 = vsel %vm974, %v290, 0.0
      %v1000 = vsel %vm974, %v291, 0.0
      %v1001 = vsel %vm974, %v292, 0.0
      %v1002 = vsel %vm974, %v293, 0.0
      %v1003 = vsel %vm974, %v294, 0.0
      %v1004 = vsel %vm974, %v295, 0.0
      %v1005 = vsel %vm974, %v296, 0.0
      %v1006 = vsel %vm974, %v297, 0.0
      %v1007 = vsel %vm974, %v298, 0.0
      %v1008 = vsel %vm974, %v299, 0.0
      %v1009 = vsel %vm974, %v300, 0.0
      %v1010 = vsel %vm974, %v301, 0.0
      %v1011 = vsel %vm974, %v302, 0.0
      %v1012 = vsel %vm974, %v303, 0.0
      %v1013 = vsel %vm974, %v304, 0.0
      %v1014 = vsel %vm974, %v305, 0.0
      %v1015 = vsel %vm974, %v306, 0.0
      %v1016 = vsel %vm974, %v307, 0.0
      %v1017 = vsel %vm974, %v308, 0.0
      %v1018 = vsel %vm974, %v309, 0.0
      %v1019 = vsel %vm974, %v310, 0.0
      %v1020 = vsel %vm974, %v311, 0.0
      %v1021 = vsel %vm974, %v312, 0.0
      %v1022 = vsel %vm974, %v313, 0.0
      %v1023 = vsel %vm974, %v314, 0.0
      %v1024 = vsel %vm974, %v315, 0.0
      %v1025 = vsel %vm974, %v316, 0.0
      %v1026 = vsel %vm974, %v317, 0.0
      %v1027 = vsel %vm974, %v318, 0.0
      %v1028 = vsel %vm974, %v319, 0.0
      %v1029 = vsel %vm974, %v320, 0.0
      %v1030 = vsel %vm974, %v321, 0.0
      %v1031 = vsel %vm974, %v322, 0.0
      %v1032 = vsel %vm974, %v323, 0.0
      %v1033 = vsel %vm974, %v324, 0.0
      %v1034 = vsel %vm974, %v325, 0.0
      %v1035 = vsel %vm974, %v326, 0.0
      %v1036 = vsel %vm974, %v327, 0.0
      %v1037 = vsel %vm974, %v328, 0.0
      %v1038 = vsel %vm974, %v329, 0.0
      %1103 = vrot.lane.b32.xlu0 %v266, 4
      %v1104 = vpop.permute.xlu0 %1103
      %1105 = vrot.lane.b32.xlu0 %v267, 4
      %v1106 = vpop.permute.xlu0 %1105
      %1107 = vrot.lane.b32.xlu0 %v268, 4
      %v1108 = vpop.permute.xlu0 %1107
      %1109 = vrot.lane.b32.xlu0 %v269, 4
      %v1110 = vpop.permute.xlu0 %1109
      %1111 = vrot.lane.b32.xlu0 %v270, 4
      %v1112 = vpop.permute.xlu0 %1111
      %1113 = vrot.lane.b32.xlu0 %v271, 4
      %v1114 = vpop.permute.xlu0 %1113
      %1115 = vrot.lane.b32.xlu0 %v272, 4
      %v1116 = vpop.permute.xlu0 %1115
      %1117 = vrot.lane.b32.xlu0 %v273, 4
      %v1118 = vpop.permute.xlu0 %1117
      %1119 = vrot.lane.b32.xlu0 %v274, 4
      %v1120 = vpop.permute.xlu0 %1119
      %1121 = vrot.lane.b32.xlu0 %v275, 4
      %v1122 = vpop.permute.xlu0 %1121
      %1123 = vrot.lane.b32.xlu0 %v276, 4
      %v1124 = vpop.permute.xlu0 %1123
      %1125 = vrot.lane.b32.xlu0 %v277, 4
      %v1126 = vpop.permute.xlu0 %1125
      %1127 = vrot.lane.b32.xlu0 %v278, 4
      %v1128 = vpop.permute.xlu0 %1127
      %1129 = vrot.lane.b32.xlu0 %v279, 4
      %v1130 = vpop.permute.xlu0 %1129
      %1131 = vrot.lane.b32.xlu0 %v280, 4
      %v1132 = vpop.permute.xlu0 %1131
      %1133 = vrot.lane.b32.xlu0 %v281, 4
      %v1134 = vpop.permute.xlu0 %1133
      %1135 = vrot.lane.b32.xlu0 %v282, 4
      %v1136 = vpop.permute.xlu0 %1135
      %1137 = vrot.lane.b32.xlu0 %v283, 4
      %v1138 = vpop.permute.xlu0 %1137
      %1139 = vrot.lane.b32.xlu0 %v284, 4
      %v1140 = vpop.permute.xlu0 %1139
      %1141 = vrot.lane.b32.xlu0 %v285, 4
      %v1142 = vpop.permute.xlu0 %1141
      %1143 = vrot.lane.b32.xlu0 %v286, 4
      %v1144 = vpop.permute.xlu0 %1143
      %1145 = vrot.lane.b32.xlu0 %v287, 4
      %v1146 = vpop.permute.xlu0 %1145
      %1147 = vrot.lane.b32.xlu0 %v288, 4
      %v1148 = vpop.permute.xlu0 %1147
      %1149 = vrot.lane.b32.xlu0 %v289, 4
      %v1150 = vpop.permute.xlu0 %1149
      %1151 = vrot.lane.b32.xlu0 %v290, 4
      %v1152 = vpop.permute.xlu0 %1151
      %1153 = vrot.lane.b32.xlu0 %v291, 4
      %v1154 = vpop.permute.xlu0 %1153
      %1155 = vrot.lane.b32.xlu0 %v292, 4
      %v1156 = vpop.permute.xlu0 %1155
      %1157 = vrot.lane.b32.xlu0 %v293, 4
      %v1158 = vpop.permute.xlu0 %1157
      %1159 = vrot.lane.b32.xlu0 %v294, 4
      %v1160 = vpop.permute.xlu0 %1159
      %1161 = vrot.lane.b32.xlu0 %v295, 4
      %v1162 = vpop.permute.xlu0 %1161
      %1163 = vrot.lane.b32.xlu0 %v296, 4
      %v1164 = vpop.permute.xlu0 %1163
      %1165 = vrot.lane.b32.xlu0 %v297, 4
      %v1166 = vpop.permute.xlu0 %1165
      %1167 = vrot.lane.b32.xlu0 %v298, 4
      %v1168 = vpop.permute.xlu0 %1167
      %1169 = vrot.lane.b32.xlu0 %v299, 4
      %v1170 = vpop.permute.xlu0 %1169
      %1171 = vrot.lane.b32.xlu0 %v300, 4
      %v1172 = vpop.permute.xlu0 %1171
      %1173 = vrot.lane.b32.xlu0 %v301, 4
      %v1174 = vpop.permute.xlu0 %1173
      %1175 = vrot.lane.b32.xlu0 %v302, 4
      %v1176 = vpop.permute.xlu0 %1175
      %1177 = vrot.lane.b32.xlu0 %v303, 4
      %v1178 = vpop.permute.xlu0 %1177
      %1179 = vrot.lane.b32.xlu0 %v304, 4
      %v1180 = vpop.permute.xlu0 %1179
      %1181 = vrot.lane.b32.xlu0 %v305, 4
      %v1182 = vpop.permute.xlu0 %1181
      %1183 = vrot.lane.b32.xlu0 %v306, 4
      %v1184 = vpop.permute.xlu0 %1183
      %1185 = vrot.lane.b32.xlu0 %v307, 4
      %v1186 = vpop.permute.xlu0 %1185
      %1187 = vrot.lane.b32.xlu0 %v308, 4
      %v1188 = vpop.permute.xlu0 %1187
      %1189 = vrot.lane.b32.xlu0 %v309, 4
      %v1190 = vpop.permute.xlu0 %1189
      %1191 = vrot.lane.b32.xlu0 %v310, 4
      %v1192 = vpop.permute.xlu0 %1191
      %1193 = vrot.lane.b32.xlu0 %v311, 4
      %v1194 = vpop.permute.xlu0 %1193
      %1195 = vrot.lane.b32.xlu0 %v312, 4
      %v1196 = vpop.permute.xlu0 %1195
      %1197 = vrot.lane.b32.xlu0 %v313, 4
      %v1198 = vpop.permute.xlu0 %1197
      %1199 = vrot.lane.b32.xlu0 %v314, 4
      %v1200 = vpop.permute.xlu0 %1199
      %1201 = vrot.lane.b32.xlu0 %v315, 4
      %v1202 = vpop.permute.xlu0 %1201
      %1203 = vrot.lane.b32.xlu0 %v316, 4
      %v1204 = vpop.permute.xlu0 %1203
      %1205 = vrot.lane.b32.xlu0 %v317, 4
      %v1206 = vpop.permute.xlu0 %1205
      %1207 = vrot.lane.b32.xlu0 %v318, 4
      %v1208 = vpop.permute.xlu0 %1207
      %1209 = vrot.lane.b32.xlu0 %v319, 4
      %v1210 = vpop.permute.xlu0 %1209
      %1211 = vrot.lane.b32.xlu0 %v320, 4
      %v1212 = vpop.permute.xlu0 %1211
      %1213 = vrot.lane.b32.xlu0 %v321, 4
      %v1214 = vpop.permute.xlu0 %1213
      %1215 = vrot.lane.b32.xlu0 %v322, 4
      %v1216 = vpop.permute.xlu0 %1215
      %1217 = vrot.lane.b32.xlu0 %v323, 4
      %v1218 = vpop.permute.xlu0 %1217
      %1219 = vrot.lane.b32.xlu0 %v324, 4
      %v1220 = vpop.permute.xlu0 %1219
      %1221 = vrot.lane.b32.xlu0 %v325, 4
      %v1222 = vpop.permute.xlu0 %1221
      %1223 = vrot.lane.b32.xlu0 %v326, 4
      %v1224 = vpop.permute.xlu0 %1223
      %1225 = vrot.lane.b32.xlu0 %v327, 4
      %v1226 = vpop.permute.xlu0 %1225
      %1227 = vrot.lane.b32.xlu0 %v328, 4
      %v1228 = vpop.permute.xlu0 %1227
      %1229 = vrot.lane.b32.xlu0 %v329, 4
      %v1230 = vpop.permute.xlu0 %1229
      %vm1295 = vcmp.lt.f32.partialorder %v266, %v1104
      %vm1296 = vcmp.lt.f32.partialorder %v267, %v1106
      %vm1297 = vcmp.lt.f32.partialorder %v268, %v1108
      %vm1298 = vcmp.lt.f32.partialorder %v269, %v1110
      %vm1299 = vcmp.lt.f32.partialorder %v270, %v1112
      %vm1300 = vcmp.lt.f32.partialorder %v271, %v1114
      %vm1301 = vcmp.lt.f32.partialorder %v272, %v1116
      %vm1302 = vcmp.lt.f32.partialorder %v273, %v1118
      %vm1303 = vcmp.lt.f32.partialorder %v274, %v1120
      %vm1304 = vcmp.lt.f32.partialorder %v275, %v1122
      %vm1305 = vcmp.lt.f32.partialorder %v276, %v1124
      %vm1306 = vcmp.lt.f32.partialorder %v277, %v1126
      %vm1307 = vcmp.lt.f32.partialorder %v278, %v1128
      %vm1308 = vcmp.lt.f32.partialorder %v279, %v1130
      %vm1309 = vcmp.lt.f32.partialorder %v280, %v1132
      %vm1310 = vcmp.lt.f32.partialorder %v281, %v1134
      %vm1311 = vcmp.lt.f32.partialorder %v282, %v1136
      %vm1312 = vcmp.lt.f32.partialorder %v283, %v1138
      %vm1313 = vcmp.lt.f32.partialorder %v284, %v1140
      %vm1314 = vcmp.lt.f32.partialorder %v285, %v1142
      %vm1315 = vcmp.lt.f32.partialorder %v286, %v1144
      %vm1316 = vcmp.lt.f32.partialorder %v287, %v1146
      %vm1317 = vcmp.lt.f32.partialorder %v288, %v1148
      %vm1318 = vcmp.lt.f32.partialorder %v289, %v1150
      %vm1319 = vcmp.lt.f32.partialorder %v290, %v1152
      %vm1320 = vcmp.lt.f32.partialorder %v291, %v1154
      %vm1321 = vcmp.lt.f32.partialorder %v292, %v1156
      %vm1322 = vcmp.lt.f32.partialorder %v293, %v1158
      %vm1323 = vcmp.lt.f32.partialorder %v294, %v1160
      %vm1324 = vcmp.lt.f32.partialorder %v295, %v1162
      %vm1325 = vcmp.lt.f32.partialorder %v296, %v1164
      %vm1326 = vcmp.lt.f32.partialorder %v297, %v1166
      %vm1327 = vcmp.lt.f32.partialorder %v298, %v1168
      %vm1328 = vcmp.lt.f32.partialorder %v299, %v1170
      %vm1329 = vcmp.lt.f32.partialorder %v300, %v1172
      %vm1330 = vcmp.lt.f32.partialorder %v301, %v1174
      %vm1331 = vcmp.lt.f32.partialorder %v302, %v1176
      %vm1332 = vcmp.lt.f32.partialorder %v303, %v1178
      %vm1333 = vcmp.lt.f32.partialorder %v304, %v1180
      %vm1334 = vcmp.lt.f32.partialorder %v305, %v1182
      %vm1335 = vcmp.lt.f32.partialorder %v306, %v1184
      %vm1336 = vcmp.lt.f32.partialorder %v307, %v1186
      %vm1337 = vcmp.lt.f32.partialorder %v308, %v1188
      %vm1338 = vcmp.lt.f32.partialorder %v309, %v1190
      %vm1339 = vcmp.lt.f32.partialorder %v310, %v1192
      %vm1340 = vcmp.lt.f32.partialorder %v311, %v1194
      %vm1341 = vcmp.lt.f32.partialorder %v312, %v1196
      %vm1342 = vcmp.lt.f32.partialorder %v313, %v1198
      %vm1343 = vcmp.lt.f32.partialorder %v314, %v1200
      %vm1344 = vcmp.lt.f32.partialorder %v315, %v1202
      %vm1345 = vcmp.lt.f32.partialorder %v316, %v1204
      %vm1346 = vcmp.lt.f32.partialorder %v317, %v1206
      %vm1347 = vcmp.lt.f32.partialorder %v318, %v1208
      %vm1348 = vcmp.lt.f32.partialorder %v319, %v1210
      %vm1349 = vcmp.lt.f32.partialorder %v320, %v1212
      %vm1350 = vcmp.lt.f32.partialorder %v321, %v1214
      %vm1351 = vcmp.lt.f32.partialorder %v322, %v1216
      %vm1352 = vcmp.lt.f32.partialorder %v323, %v1218
      %vm1353 = vcmp.lt.f32.partialorder %v324, %v1220
      %vm1354 = vcmp.lt.f32.partialorder %v325, %v1222
      %vm1355 = vcmp.lt.f32.partialorder %v326, %v1224
      %vm1356 = vcmp.lt.f32.partialorder %v327, %v1226
      %vm1357 = vcmp.lt.f32.partialorder %v328, %v1228
      %vm1358 = vcmp.lt.f32.partialorder %v329, %v1230
      %v1359 = vsel %vm1295, 1, 0
      %v1360 = vsel %vm1296, 1, 0
      %v1361 = vsel %vm1297, 1, 0
      %v1362 = vsel %vm1298, 1, 0
      %v1363 = vsel %vm1299, 1, 0
      %v1364 = vsel %vm1300, 1, 0
      %v1365 = vsel %vm1301, 1, 0
      %v1366 = vsel %vm1302, 1, 0
      %v1367 = vsel %vm1303, 1, 0
      %v1368 = vsel %vm1304, 1, 0
      %v1369 = vsel %vm1305, 1, 0
      %v1370 = vsel %vm1306, 1, 0
      %v1371 = vsel %vm1307, 1, 0
      %v1372 = vsel %vm1308, 1, 0
      %v1373 = vsel %vm1309, 1, 0
      %v1374 = vsel %vm1310, 1, 0
      %v1375 = vsel %vm1311, 1, 0
      %v1376 = vsel %vm1312, 1, 0
      %v1377 = vsel %vm1313, 1, 0
      %v1378 = vsel %vm1314, 1, 0
      %v1379 = vsel %vm1315, 1, 0
      %v1380 = vsel %vm1316, 1, 0
      %v1381 = vsel %vm1317, 1, 0
      %v1382 = vsel %vm1318, 1, 0
      %v1383 = vsel %vm1319, 1, 0
      %v1384 = vsel %vm1320, 1, 0
      %v1385 = vsel %vm1321, 1, 0
      %v1386 = vsel %vm1322, 1, 0
      %v1387 = vsel %vm1323, 1, 0
      %v1388 = vsel %vm1324, 1, 0
      %v1389 = vsel %vm1325, 1, 0
      %v1390 = vsel %vm1326, 1, 0
      %v1391 = vsel %vm1327, 1, 0
      %v1392 = vsel %vm1328, 1, 0
      %v1393 = vsel %vm1329, 1, 0
      %v1394 = vsel %vm1330, 1, 0
      %v1395 = vsel %vm1331, 1, 0
      %v1396 = vsel %vm1332, 1, 0
      %v1397 = vsel %vm1333, 1, 0
      %v1398 = vsel %vm1334, 1, 0
      %v1399 = vsel %vm1335, 1, 0
      %v1400 = vsel %vm1336, 1, 0
      %v1401 = vsel %vm1337, 1, 0
      %v1402 = vsel %vm1338, 1, 0
      %v1403 = vsel %vm1339, 1, 0
      %v1404 = vsel %vm1340, 1, 0
      %v1405 = vsel %vm1341, 1, 0
      %v1406 = vsel %vm1342, 1, 0
      %v1407 = vsel %vm1343, 1, 0
      %v1408 = vsel %vm1344, 1, 0
      %v1409 = vsel %vm1345, 1, 0
      %v1410 = vsel %vm1346, 1, 0
      %v1411 = vsel %vm1347, 1, 0
      %v1412 = vsel %vm1348, 1, 0
      %v1413 = vsel %vm1349, 1, 0
      %v1414 = vsel %vm1350, 1, 0
      %v1415 = vsel %vm1351, 1, 0
      %v1416 = vsel %vm1352, 1, 0
      %v1417 = vsel %vm1353, 1, 0
      %v1418 = vsel %vm1354, 1, 0
      %v1419 = vsel %vm1355, 1, 0
      %v1420 = vsel %vm1356, 1, 0
      %v1421 = vsel %vm1357, 1, 0
      %v1422 = vsel %vm1358, 1, 0
      %1423 = vset.pattern.permute.xlu0 24
      %1424 = vperm.xlu0 %1423, %v1359
      %v1425 = vpop.permute.xlu0 %1424
      %1426 = vset.pattern.permute.xlu0 24
      %1427 = vperm.xlu0 %1426, %v1360
      %v1428 = vpop.permute.xlu0 %1427
      %1429 = vset.pattern.permute.xlu0 24
      %1430 = vperm.xlu0 %1429, %v1361
      %v1431 = vpop.permute.xlu0 %1430
      %1432 = vset.pattern.permute.xlu0 24
      %1433 = vperm.xlu0 %1432, %v1362
      %v1434 = vpop.permute.xlu0 %1433
      %1435 = vset.pattern.permute.xlu0 24
      %1436 = vperm.xlu0 %1435, %v1363
      %v1437 = vpop.permute.xlu0 %1436
      %1438 = vset.pattern.permute.xlu0 24
      %1439 = vperm.xlu0 %1438, %v1364
      %v1440 = vpop.permute.xlu0 %1439
      %1441 = vset.pattern.permute.xlu0 24
      %1442 = vperm.xlu0 %1441, %v1365
      %v1443 = vpop.permute.xlu0 %1442
      %1444 = vset.pattern.permute.xlu0 24
      %1445 = vperm.xlu0 %1444, %v1366
      %v1446 = vpop.permute.xlu0 %1445
      %1447 = vset.pattern.permute.xlu0 24
      %1448 = vperm.xlu0 %1447, %v1367
      %v1449 = vpop.permute.xlu0 %1448
      %1450 = vset.pattern.permute.xlu0 24
      %1451 = vperm.xlu0 %1450, %v1368
      %v1452 = vpop.permute.xlu0 %1451
      %1453 = vset.pattern.permute.xlu0 24
      %1454 = vperm.xlu0 %1453, %v1369
      %v1455 = vpop.permute.xlu0 %1454
      %1456 = vset.pattern.permute.xlu0 24
      %1457 = vperm.xlu0 %1456, %v1370
      %v1458 = vpop.permute.xlu0 %1457
      %1459 = vset.pattern.permute.xlu0 24
      %1460 = vperm.xlu0 %1459, %v1371
      %v1461 = vpop.permute.xlu0 %1460
      %1462 = vset.pattern.permute.xlu0 24
      %1463 = vperm.xlu0 %1462, %v1372
      %v1464 = vpop.permute.xlu0 %1463
      %1465 = vset.pattern.permute.xlu0 24
      %1466 = vperm.xlu0 %1465, %v1373
      %v1467 = vpop.permute.xlu0 %1466
      %1468 = vset.pattern.permute.xlu0 24
      %1469 = vperm.xlu0 %1468, %v1374
      %v1470 = vpop.permute.xlu0 %1469
      %1471 = vset.pattern.permute.xlu0 24
      %1472 = vperm.xlu0 %1471, %v1375
      %v1473 = vpop.permute.xlu0 %1472
      %1474 = vset.pattern.permute.xlu0 24
      %1475 = vperm.xlu0 %1474, %v1376
      %v1476 = vpop.permute.xlu0 %1475
      %1477 = vset.pattern.permute.xlu0 24
      %1478 = vperm.xlu0 %1477, %v1377
      %v1479 = vpop.permute.xlu0 %1478
      %1480 = vset.pattern.permute.xlu0 24
      %1481 = vperm.xlu0 %1480, %v1378
      %v1482 = vpop.permute.xlu0 %1481
      %1483 = vset.pattern.permute.xlu0 24
      %1484 = vperm.xlu0 %1483, %v1379
      %v1485 = vpop.permute.xlu0 %1484
      %1486 = vset.pattern.permute.xlu0 24
      %1487 = vperm.xlu0 %1486, %v1380
      %v1488 = vpop.permute.xlu0 %1487
      %1489 = vset.pattern.permute.xlu0 24
      %1490 = vperm.xlu0 %1489, %v1381
      %v1491 = vpop.permute.xlu0 %1490
      %1492 = vset.pattern.permute.xlu0 24
      %1493 = vperm.xlu0 %1492, %v1382
      %v1494 = vpop.permute.xlu0 %1493
      %1495 = vset.pattern.permute.xlu0 24
      %1496 = vperm.xlu0 %1495, %v1383
      %v1497 = vpop.permute.xlu0 %1496
      %1498 = vset.pattern.permute.xlu0 24
      %1499 = vperm.xlu0 %1498, %v1384
      %v1500 = vpop.permute.xlu0 %1499
      %1501 = vset.pattern.permute.xlu0 24
      %1502 = vperm.xlu0 %1501, %v1385
      %v1503 = vpop.permute.xlu0 %1502
      %1504 = vset.pattern.permute.xlu0 24
      %1505 = vperm.xlu0 %1504, %v1386
      %v1506 = vpop.permute.xlu0 %1505
      %1507 = vset.pattern.permute.xlu0 24
      %1508 = vperm.xlu0 %1507, %v1387
      %v1509 = vpop.permute.xlu0 %1508
      %1510 = vset.pattern.permute.xlu0 24
      %1511 = vperm.xlu0 %1510, %v1388
      %v1512 = vpop.permute.xlu0 %1511
      %1513 = vset.pattern.permute.xlu0 24
      %1514 = vperm.xlu0 %1513, %v1389
      %v1515 = vpop.permute.xlu0 %1514
      %1516 = vset.pattern.permute.xlu0 24
      %1517 = vperm.xlu0 %1516, %v1390
      %v1518 = vpop.permute.xlu0 %1517
      %1519 = vset.pattern.permute.xlu0 24
      %1520 = vperm.xlu0 %1519, %v1391
      %v1521 = vpop.permute.xlu0 %1520
      %1522 = vset.pattern.permute.xlu0 24
      %1523 = vperm.xlu0 %1522, %v1392
      %v1524 = vpop.permute.xlu0 %1523
      %1525 = vset.pattern.permute.xlu0 24
      %1526 = vperm.xlu0 %1525, %v1393
      %v1527 = vpop.permute.xlu0 %1526
      %1528 = vset.pattern.permute.xlu0 24
      %1529 = vperm.xlu0 %1528, %v1394
      %v1530 = vpop.permute.xlu0 %1529
      %1531 = vset.pattern.permute.xlu0 24
      %1532 = vperm.xlu0 %1531, %v1395
      %v1533 = vpop.permute.xlu0 %1532
      %1534 = vset.pattern.permute.xlu0 24
      %1535 = vperm.xlu0 %1534, %v1396
      %v1536 = vpop.permute.xlu0 %1535
      %1537 = vset.pattern.permute.xlu0 24
      %1538 = vperm.xlu0 %1537, %v1397
      %v1539 = vpop.permute.xlu0 %1538
      %1540 = vset.pattern.permute.xlu0 24
      %1541 = vperm.xlu0 %1540, %v1398
      %v1542 = vpop.permute.xlu0 %1541
      %1543 = vset.pattern.permute.xlu0 24
      %1544 = vperm.xlu0 %1543, %v1399
      %v1545 = vpop.permute.xlu0 %1544
      %1546 = vset.pattern.permute.xlu0 24
      %1547 = vperm.xlu0 %1546, %v1400
      %v1548 = vpop.permute.xlu0 %1547
      %1549 = vset.pattern.permute.xlu0 24
      %1550 = vperm.xlu0 %1549, %v1401
      %v1551 = vpop.permute.xlu0 %1550
      %1552 = vset.pattern.permute.xlu0 24
      %1553 = vperm.xlu0 %1552, %v1402
      %v1554 = vpop.permute.xlu0 %1553
      %1555 = vset.pattern.permute.xlu0 24
      %1556 = vperm.xlu0 %1555, %v1403
      %v1557 = vpop.permute.xlu0 %1556
      %1558 = vset.pattern.permute.xlu0 24
      %1559 = vperm.xlu0 %1558, %v1404
      %v1560 = vpop.permute.xlu0 %1559
      %1561 = vset.pattern.permute.xlu0 24
      %1562 = vperm.xlu0 %1561, %v1405
      %v1563 = vpop.permute.xlu0 %1562
      %1564 = vset.pattern.permute.xlu0 24
      %1565 = vperm.xlu0 %1564, %v1406
      %v1566 = vpop.permute.xlu0 %1565
      %1567 = vset.pattern.permute.xlu0 24
      %1568 = vperm.xlu0 %1567, %v1407
      %v1569 = vpop.permute.xlu0 %1568
      %1570 = vset.pattern.permute.xlu0 24
      %1571 = vperm.xlu0 %1570, %v1408
      %v1572 = vpop.permute.xlu0 %1571
      %1573 = vset.pattern.permute.xlu0 24
      %1574 = vperm.xlu0 %1573, %v1409
      %v1575 = vpop.permute.xlu0 %1574
      %1576 = vset.pattern.permute.xlu0 24
      %1577 = vperm.xlu0 %1576, %v1410
      %v1578 = vpop.permute.xlu0 %1577
      %1579 = vset.pattern.permute.xlu0 24
      %1580 = vperm.xlu0 %1579, %v1411
      %v1581 = vpop.permute.xlu0 %1580
      %1582 = vset.pattern.permute.xlu0 24
      %1583 = vperm.xlu0 %1582, %v1412
      %v1584 = vpop.permute.xlu0 %1583
      %1585 = vset.pattern.permute.xlu0 24
      %1586 = vperm.xlu0 %1585, %v1413
      %v1587 = vpop.permute.xlu0 %1586
      %1588 = vset.pattern.permute.xlu0 24
      %1589 = vperm.xlu0 %1588, %v1414
      %v1590 = vpop.permute.xlu0 %1589
      %1591 = vset.pattern.permute.xlu0 24
      %1592 = vperm.xlu0 %1591, %v1415
      %v1593 = vpop.permute.xlu0 %1592
      %1594 = vset.pattern.permute.xlu0 24
      %1595 = vperm.xlu0 %1594, %v1416
      %v1596 = vpop.permute.xlu0 %1595
      %1597 = vset.pattern.permute.xlu0 24
      %1598 = vperm.xlu0 %1597, %v1417
      %v1599 = vpop.permute.xlu0 %1598
      %1600 = vset.pattern.permute.xlu0 24
      %1601 = vperm.xlu0 %1600, %v1418
      %v1602 = vpop.permute.xlu0 %1601
      %1603 = vset.pattern.permute.xlu0 24
      %1604 = vperm.xlu0 %1603, %v1419
      %v1605 = vpop.permute.xlu0 %1604
      %1606 = vset.pattern.permute.xlu0 24
      %1607 = vperm.xlu0 %1606, %v1420
      %v1608 = vpop.permute.xlu0 %1607
      %1609 = vset.pattern.permute.xlu0 24
      %1610 = vperm.xlu0 %1609, %v1421
      %v1611 = vpop.permute.xlu0 %1610
      %1612 = vset.pattern.permute.xlu0 24
      %1613 = vperm.xlu0 %1612, %v1422
      %v1614 = vpop.permute.xlu0 %1613
      %vm1615 = vcmp.eq.s32.totalorder %v1425, 1
      %vm1616 = vcmp.eq.s32.totalorder %v1428, 1
      %vm1617 = vcmp.eq.s32.totalorder %v1431, 1
      %vm1618 = vcmp.eq.s32.totalorder %v1434, 1
      %vm1619 = vcmp.eq.s32.totalorder %v1437, 1
      %vm1620 = vcmp.eq.s32.totalorder %v1440, 1
      %vm1621 = vcmp.eq.s32.totalorder %v1443, 1
      %vm1622 = vcmp.eq.s32.totalorder %v1446, 1
      %vm1623 = vcmp.eq.s32.totalorder %v1449, 1
      %vm1624 = vcmp.eq.s32.totalorder %v1452, 1
      %vm1625 = vcmp.eq.s32.totalorder %v1455, 1
      %vm1626 = vcmp.eq.s32.totalorder %v1458, 1
      %vm1627 = vcmp.eq.s32.totalorder %v1461, 1
      %vm1628 = vcmp.eq.s32.totalorder %v1464, 1
      %vm1629 = vcmp.eq.s32.totalorder %v1467, 1
      %vm1630 = vcmp.eq.s32.totalorder %v1470, 1
      %vm1631 = vcmp.eq.s32.totalorder %v1473, 1
      %vm1632 = vcmp.eq.s32.totalorder %v1476, 1
      %vm1633 = vcmp.eq.s32.totalorder %v1479, 1
      %vm1634 = vcmp.eq.s32.totalorder %v1482, 1
      %vm1635 = vcmp.eq.s32.totalorder %v1485, 1
      %vm1636 = vcmp.eq.s32.totalorder %v1488, 1
      %vm1637 = vcmp.eq.s32.totalorder %v1491, 1
      %vm1638 = vcmp.eq.s32.totalorder %v1494, 1
      %vm1639 = vcmp.eq.s32.totalorder %v1497, 1
      %vm1640 = vcmp.eq.s32.totalorder %v1500, 1
      %vm1641 = vcmp.eq.s32.totalorder %v1503, 1
      %vm1642 = vcmp.eq.s32.totalorder %v1506, 1
      %vm1643 = vcmp.eq.s32.totalorder %v1509, 1
      %vm1644 = vcmp.eq.s32.totalorder %v1512, 1
      %vm1645 = vcmp.eq.s32.totalorder %v1515, 1
      %vm1646 = vcmp.eq.s32.totalorder %v1518, 1
      %vm1647 = vcmp.eq.s32.totalorder %v1521, 1
      %vm1648 = vcmp.eq.s32.totalorder %v1524, 1
      %vm1649 = vcmp.eq.s32.totalorder %v1527, 1
      %vm1650 = vcmp.eq.s32.totalorder %v1530, 1
      %vm1651 = vcmp.eq.s32.totalorder %v1533, 1
      %vm1652 = vcmp.eq.s32.totalorder %v1536, 1
      %vm1653 = vcmp.eq.s32.totalorder %v1539, 1
      %vm1654 = vcmp.eq.s32.totalorder %v1542, 1
      %vm1655 = vcmp.eq.s32.totalorder %v1545, 1
      %vm1656 = vcmp.eq.s32.totalorder %v1548, 1
      %vm1657 = vcmp.eq.s32.totalorder %v1551, 1
      %vm1658 = vcmp.eq.s32.totalorder %v1554, 1
      %vm1659 = vcmp.eq.s32.totalorder %v1557, 1
      %vm1660 = vcmp.eq.s32.totalorder %v1560, 1
      %vm1661 = vcmp.eq.s32.totalorder %v1563, 1
      %vm1662 = vcmp.eq.s32.totalorder %v1566, 1
      %vm1663 = vcmp.eq.s32.totalorder %v1569, 1
      %vm1664 = vcmp.eq.s32.totalorder %v1572, 1
      %vm1665 = vcmp.eq.s32.totalorder %v1575, 1
      %vm1666 = vcmp.eq.s32.totalorder %v1578, 1
      %vm1667 = vcmp.eq.s32.totalorder %v1581, 1
      %vm1668 = vcmp.eq.s32.totalorder %v1584, 1
      %vm1669 = vcmp.eq.s32.totalorder %v1587, 1
      %vm1670 = vcmp.eq.s32.totalorder %v1590, 1
      %vm1671 = vcmp.eq.s32.totalorder %v1593, 1
      %vm1672 = vcmp.eq.s32.totalorder %v1596, 1
      %vm1673 = vcmp.eq.s32.totalorder %v1599, 1
      %vm1674 = vcmp.eq.s32.totalorder %v1602, 1
      %vm1675 = vcmp.eq.s32.totalorder %v1605, 1
      %vm1676 = vcmp.eq.s32.totalorder %v1608, 1
      %vm1677 = vcmp.eq.s32.totalorder %v1611, 1
      %vm1678 = vcmp.eq.s32.totalorder %v1614, 1
      %v1679 = vsel %vm1615, %v975, %v908
      %v1680 = vsel %vm1616, %v976, %v909
      %v1681 = vsel %vm1617, %v977, %v910
      %v1682 = vsel %vm1618, %v978, %v911
      %v1683 = vsel %vm1619, %v979, %v912
      %v1684 = vsel %vm1620, %v980, %v913
      %v1685 = vsel %vm1621, %v981, %v914
      %v1686 = vsel %vm1622, %v982, %v915
      %v1687 = vsel %vm1623, %v983, %v916
      %v1688 = vsel %vm1624, %v984, %v917
      %v1689 = vsel %vm1625, %v985, %v918
      %v1690 = vsel %vm1626, %v986, %v919
      %v1691 = vsel %vm1627, %v987, %v920
      %v1692 = vsel %vm1628, %v988, %v921
      %v1693 = vsel %vm1629, %v989, %v922
      %v1694 = vsel %vm1630, %v990, %v923
      %v1695 = vsel %vm1631, %v991, %v924
      %v1696 = vsel %vm1632, %v992, %v925
      %v1697 = vsel %vm1633, %v993, %v926
      %v1698 = vsel %vm1634, %v994, %v927
      %v1699 = vsel %vm1635, %v995, %v928
      %v1700 = vsel %vm1636, %v996, %v929
      %v1701 = vsel %vm1637, %v997, %v930
      %v1702 = vsel %vm1638, %v998, %v931
      %v1703 = vsel %vm1639, %v999, %v932
      %v1704 = vsel %vm1640, %v1000, %v933
      %v1705 = vsel %vm1641, %v1001, %v934
      %v1706 = vsel %vm1642, %v1002, %v935
      %v1707 = vsel %vm1643, %v1003, %v936
      %v1708 = vsel %vm1644, %v1004, %v937
      %v1709 = vsel %vm1645, %v1005, %v938
      %v1710 = vsel %vm1646, %v1006, %v939
      %v1711 = vsel %vm1647, %v1007, %v940
      %v1712 = vsel %vm1648, %v1008, %v941
      %v1713 = vsel %vm1649, %v1009, %v942
      %v1714 = vsel %vm1650, %v1010, %v943
      %v1715 = vsel %vm1651, %v1011, %v944
      %v1716 = vsel %vm1652, %v1012, %v945
      %v1717 = vsel %vm1653, %v1013, %v946
      %v1718 = vsel %vm1654, %v1014, %v947
      %v1719 = vsel %vm1655, %v1015, %v948
      %v1720 = vsel %vm1656, %v1016, %v949
      %v1721 = vsel %vm1657, %v1017, %v950
      %v1722 = vsel %vm1658, %v1018, %v951
      %v1723 = vsel %vm1659, %v1019, %v952
      %v1724 = vsel %vm1660, %v1020, %v953
      %v1725 = vsel %vm1661, %v1021, %v954
      %v1726 = vsel %vm1662, %v1022, %v955
      %v1727 = vsel %vm1663, %v1023, %v956
      %v1728 = vsel %vm1664, %v1024, %v957
      %v1729 = vsel %vm1665, %v1025, %v958
      %v1730 = vsel %vm1666, %v1026, %v959
      %v1731 = vsel %vm1667, %v1027, %v960
      %v1732 = vsel %vm1668, %v1028, %v961
      %v1733 = vsel %vm1669, %v1029, %v962
      %v1734 = vsel %vm1670, %v1030, %v963
      %v1735 = vsel %vm1671, %v1031, %v964
      %v1736 = vsel %vm1672, %v1032, %v965
      %v1737 = vsel %vm1673, %v1033, %v966
      %v1738 = vsel %vm1674, %v1034, %v967
      %v1739 = vsel %vm1675, %v1035, %v968
      %v1740 = vsel %vm1676, %v1036, %v969
      %v1741 = vsel %vm1677, %v1037, %v970
      %v1742 = vsel %vm1678, %v1038, %v971
      %vm1743 = vcmp.eq.s32.totalorder %v331, 20
      %v1744 = vsel %vm1743, 1, 0
      %vm1745 = vcmp.eq.s32.totalorder %v1744, 1
      %1746 = vset.pattern.permute.xlu0 21
      %1747 = vperm.xlu0 %1746, %v266
      %v1748 = vpop.permute.xlu0 %1747
      %1750 = vset.pattern.permute.xlu0 21
      %1751 = vperm.xlu0 %1750, %v267
      %v1752 = vpop.permute.xlu0 %1751
      %1754 = vset.pattern.permute.xlu0 21
      %1755 = vperm.xlu0 %1754, %v268
      %v1756 = vpop.permute.xlu0 %1755
      %1758 = vset.pattern.permute.xlu0 21
      %1759 = vperm.xlu0 %1758, %v269
      %v1760 = vpop.permute.xlu0 %1759
      %1762 = vset.pattern.permute.xlu0 21
      %1763 = vperm.xlu0 %1762, %v270
      %v1764 = vpop.permute.xlu0 %1763
      %1766 = vset.pattern.permute.xlu0 21
      %1767 = vperm.xlu0 %1766, %v271
      %v1768 = vpop.permute.xlu0 %1767
      %1770 = vset.pattern.permute.xlu0 21
      %1771 = vperm.xlu0 %1770, %v272
      %v1772 = vpop.permute.xlu0 %1771
      %1774 = vset.pattern.permute.xlu0 21
      %1775 = vperm.xlu0 %1774, %v273
      %v1776 = vpop.permute.xlu0 %1775
      %1778 = vset.pattern.permute.xlu0 21
      %1779 = vperm.xlu0 %1778, %v274
      %v1780 = vpop.permute.xlu0 %1779
      %1782 = vset.pattern.permute.xlu0 21
      %1783 = vperm.xlu0 %1782, %v275
      %v1784 = vpop.permute.xlu0 %1783
      %1786 = vset.pattern.permute.xlu0 21
      %1787 = vperm.xlu0 %1786, %v276
      %v1788 = vpop.permute.xlu0 %1787
      %1790 = vset.pattern.permute.xlu0 21
      %1791 = vperm.xlu0 %1790, %v277
      %v1792 = vpop.permute.xlu0 %1791
      %1794 = vset.pattern.permute.xlu0 21
      %1795 = vperm.xlu0 %1794, %v278
      %v1796 = vpop.permute.xlu0 %1795
      %1798 = vset.pattern.permute.xlu0 21
      %1799 = vperm.xlu0 %1798, %v279
      %v1800 = vpop.permute.xlu0 %1799
      %1802 = vset.pattern.permute.xlu0 21
      %1803 = vperm.xlu0 %1802, %v280
      %v1804 = vpop.permute.xlu0 %1803
      %1806 = vset.pattern.permute.xlu0 21
      %1807 = vperm.xlu0 %1806, %v281
      %v1808 = vpop.permute.xlu0 %1807
      %1810 = vset.pattern.permute.xlu0 21
      %1811 = vperm.xlu0 %1810, %v282
      %v1812 = vpop.permute.xlu0 %1811
      %1814 = vset.pattern.permute.xlu0 21
      %1815 = vperm.xlu0 %1814, %v283
      %v1816 = vpop.permute.xlu0 %1815
      %1818 = vset.pattern.permute.xlu0 21
      %1819 = vperm.xlu0 %1818, %v284
      %v1820 = vpop.permute.xlu0 %1819
      %1822 = vset.pattern.permute.xlu0 21
      %1823 = vperm.xlu0 %1822, %v285
      %v1824 = vpop.permute.xlu0 %1823
      %1826 = vset.pattern.permute.xlu0 21
      %1827 = vperm.xlu0 %1826, %v286
      %v1828 = vpop.permute.xlu0 %1827
      %1830 = vset.pattern.permute.xlu0 21
      %1831 = vperm.xlu0 %1830, %v287
      %v1832 = vpop.permute.xlu0 %1831
      %1834 = vset.pattern.permute.xlu0 21
      %1835 = vperm.xlu0 %1834, %v288
      %v1836 = vpop.permute.xlu0 %1835
      %1838 = vset.pattern.permute.xlu0 21
      %1839 = vperm.xlu0 %1838, %v289
      %v1840 = vpop.permute.xlu0 %1839
      %1842 = vset.pattern.permute.xlu0 21
      %1843 = vperm.xlu0 %1842, %v290
      %v1844 = vpop.permute.xlu0 %1843
      %1846 = vset.pattern.permute.xlu0 21
      %1847 = vperm.xlu0 %1846, %v291
      %v1848 = vpop.permute.xlu0 %1847
      %1850 = vset.pattern.permute.xlu0 21
      %1851 = vperm.xlu0 %1850, %v292
      %v1852 = vpop.permute.xlu0 %1851
      %1854 = vset.pattern.permute.xlu0 21
      %1855 = vperm.xlu0 %1854, %v293
      %v1856 = vpop.permute.xlu0 %1855
      %1858 = vset.pattern.permute.xlu0 21
      %1859 = vperm.xlu0 %1858, %v294
      %v1860 = vpop.permute.xlu0 %1859
      %1862 = vset.pattern.permute.xlu0 21
      %1863 = vperm.xlu0 %1862, %v295
      %v1864 = vpop.permute.xlu0 %1863
      %1866 = vset.pattern.permute.xlu0 21
      %1867 = vperm.xlu0 %1866, %v296
      %v1868 = vpop.permute.xlu0 %1867
      %1870 = vset.pattern.permute.xlu0 21
      %1871 = vperm.xlu0 %1870, %v297
      %v1872 = vpop.permute.xlu0 %1871
      %1874 = vset.pattern.permute.xlu0 21
      %1875 = vperm.xlu0 %1874, %v298
      %v1876 = vpop.permute.xlu0 %1875
      %1878 = vset.pattern.permute.xlu0 21
      %1879 = vperm.xlu0 %1878, %v299
      %v1880 = vpop.permute.xlu0 %1879
      %1882 = vset.pattern.permute.xlu0 21
      %1883 = vperm.xlu0 %1882, %v300
      %v1884 = vpop.permute.xlu0 %1883
      %1886 = vset.pattern.permute.xlu0 21
      %1887 = vperm.xlu0 %1886, %v301
      %v1888 = vpop.permute.xlu0 %1887
      %1890 = vset.pattern.permute.xlu0 21
      %1891 = vperm.xlu0 %1890, %v302
      %v1892 = vpop.permute.xlu0 %1891
      %1894 = vset.pattern.permute.xlu0 21
      %1895 = vperm.xlu0 %1894, %v303
      %v1896 = vpop.permute.xlu0 %1895
      %1898 = vset.pattern.permute.xlu0 21
      %1899 = vperm.xlu0 %1898, %v304
      %v1900 = vpop.permute.xlu0 %1899
      %1902 = vset.pattern.permute.xlu0 21
      %1903 = vperm.xlu0 %1902, %v305
      %v1904 = vpop.permute.xlu0 %1903
      %1906 = vset.pattern.permute.xlu0 21
      %1907 = vperm.xlu0 %1906, %v306
      %v1908 = vpop.permute.xlu0 %1907
      %1910 = vset.pattern.permute.xlu0 21
      %1911 = vperm.xlu0 %1910, %v307
      %v1912 = vpop.permute.xlu0 %1911
      %1914 = vset.pattern.permute.xlu0 21
      %1915 = vperm.xlu0 %1914, %v308
      %v1916 = vpop.permute.xlu0 %1915
      %1918 = vset.pattern.permute.xlu0 21
      %1919 = vperm.xlu0 %1918, %v309
      %v1920 = vpop.permute.xlu0 %1919
      %1922 = vset.pattern.permute.xlu0 21
      %1923 = vperm.xlu0 %1922, %v310
      %v1924 = vpop.permute.xlu0 %1923
      %1926 = vset.pattern.permute.xlu0 21
      %1927 = vperm.xlu0 %1926, %v311
      %v1928 = vpop.permute.xlu0 %1927
      %1930 = vset.pattern.permute.xlu0 21
      %1931 = vperm.xlu0 %1930, %v312
      %v1932 = vpop.permute.xlu0 %1931
      %1934 = vset.pattern.permute.xlu0 21
      %1935 = vperm.xlu0 %1934, %v313
      %v1936 = vpop.permute.xlu0 %1935
      %1938 = vset.pattern.permute.xlu0 21
      %1939 = vperm.xlu0 %1938, %v314
      %v1940 = vpop.permute.xlu0 %1939
      %1942 = vset.pattern.permute.xlu0 21
      %1943 = vperm.xlu0 %1942, %v315
      %v1944 = vpop.permute.xlu0 %1943
      %1946 = vset.pattern.permute.xlu0 21
      %1947 = vperm.xlu0 %1946, %v316
      %v1948 = vpop.permute.xlu0 %1947
      %1950 = vset.pattern.permute.xlu0 21
      %1951 = vperm.xlu0 %1950, %v317
      %v1952 = vpop.permute.xlu0 %1951
      %1954 = vset.pattern.permute.xlu0 21
      %1955 = vperm.xlu0 %1954, %v318
      %v1956 = vpop.permute.xlu0 %1955
      %1958 = vset.pattern.permute.xlu0 21
      %1959 = vperm.xlu0 %1958, %v319
      %v1960 = vpop.permute.xlu0 %1959
      %1962 = vset.pattern.permute.xlu0 21
      %1963 = vperm.xlu0 %1962, %v320
      %v1964 = vpop.permute.xlu0 %1963
      %1966 = vset.pattern.permute.xlu0 21
      %1967 = vperm.xlu0 %1966, %v321
      %v1968 = vpop.permute.xlu0 %1967
      %1970 = vset.pattern.permute.xlu0 21
      %1971 = vperm.xlu0 %1970, %v322
      %v1972 = vpop.permute.xlu0 %1971
      %1974 = vset.pattern.permute.xlu0 21
      %1975 = vperm.xlu0 %1974, %v323
      %v1976 = vpop.permute.xlu0 %1975
      %1978 = vset.pattern.permute.xlu0 21
      %1979 = vperm.xlu0 %1978, %v324
      %v1980 = vpop.permute.xlu0 %1979
      %1982 = vset.pattern.permute.xlu0 21
      %1983 = vperm.xlu0 %1982, %v325
      %v1984 = vpop.permute.xlu0 %1983
      %1986 = vset.pattern.permute.xlu0 21
      %1987 = vperm.xlu0 %1986, %v326
      %v1988 = vpop.permute.xlu0 %1987
      %1990 = vset.pattern.permute.xlu0 21
      %1991 = vperm.xlu0 %1990, %v327
      %v1992 = vpop.permute.xlu0 %1991
      %1994 = vset.pattern.permute.xlu0 21
      %1995 = vperm.xlu0 %1994, %v328
      %v1996 = vpop.permute.xlu0 %1995
      %1998 = vset.pattern.permute.xlu0 21
      %1999 = vperm.xlu0 %1998, %v329
      %v2000 = vpop.permute.xlu0 %1999
      %v2002 = vsel %vm1745, %v1748, %v1679
      %v2003 = vsel %vm1745, %v1752, %v1680
      %v2004 = vsel %vm1745, %v1756, %v1681
      %v2005 = vsel %vm1745, %v1760, %v1682
      %v2006 = vsel %vm1745, %v1764, %v1683
      %v2007 = vsel %vm1745, %v1768, %v1684
      %v2008 = vsel %vm1745, %v1772, %v1685
      %v2009 = vsel %vm1745, %v1776, %v1686
      %v2010 = vsel %vm1745, %v1780, %v1687
      %v2011 = vsel %vm1745, %v1784, %v1688
      %v2012 = vsel %vm1745, %v1788, %v1689
      %v2013 = vsel %vm1745, %v1792, %v1690
      %v2014 = vsel %vm1745, %v1796, %v1691
      %v2015 = vsel %vm1745, %v1800, %v1692
      %v2016 = vsel %vm1745, %v1804, %v1693
      %v2017 = vsel %vm1745, %v1808, %v1694
      %v2018 = vsel %vm1745, %v1812, %v1695
      %v2019 = vsel %vm1745, %v1816, %v1696
      %v2020 = vsel %vm1745, %v1820, %v1697
      %v2021 = vsel %vm1745, %v1824, %v1698
      %v2022 = vsel %vm1745, %v1828, %v1699
      %v2023 = vsel %vm1745, %v1832, %v1700
      %v2024 = vsel %vm1745, %v1836, %v1701
      %v2025 = vsel %vm1745, %v1840, %v1702
      %v2026 = vsel %vm1745, %v1844, %v1703
      %v2027 = vsel %vm1745, %v1848, %v1704
      %v2028 = vsel %vm1745, %v1852, %v1705
      %v2029 = vsel %vm1745, %v1856, %v1706
      %v2030 = vsel %vm1745, %v1860, %v1707
      %v2031 = vsel %vm1745, %v1864, %v1708
      %v2032 = vsel %vm1745, %v1868, %v1709
      %v2033 = vsel %vm1745, %v1872, %v1710
      %v2034 = vsel %vm1745, %v1876, %v1711
      %v2035 = vsel %vm1745, %v1880, %v1712
      %v2036 = vsel %vm1745, %v1884, %v1713
      %v2037 = vsel %vm1745, %v1888, %v1714
      %v2038 = vsel %vm1745, %v1892, %v1715
      %v2039 = vsel %vm1745, %v1896, %v1716
      %v2040 = vsel %vm1745, %v1900, %v1717
      %v2041 = vsel %vm1745, %v1904, %v1718
      %v2042 = vsel %vm1745, %v1908, %v1719
      %v2043 = vsel %vm1745, %v1912, %v1720
      %v2044 = vsel %vm1745, %v1916, %v1721
      %v2045 = vsel %vm1745, %v1920, %v1722
      %v2046 = vsel %vm1745, %v1924, %v1723
      %v2047 = vsel %vm1745, %v1928, %v1724
      %v2048 = vsel %vm1745, %v1932, %v1725
      %v2049 = vsel %vm1745, %v1936, %v1726
      %v2050 = vsel %vm1745, %v1940, %v1727
      %v2051 = vsel %vm1745, %v1944, %v1728
      %v2052 = vsel %vm1745, %v1948, %v1729
      %v2053 = vsel %vm1745, %v1952, %v1730
      %v2054 = vsel %vm1745, %v1956, %v1731
      %v2055 = vsel %vm1745, %v1960, %v1732
      %v2056 = vsel %vm1745, %v1964, %v1733
      %v2057 = vsel %vm1745, %v1968, %v1734
      %v2058 = vsel %vm1745, %v1972, %v1735
      %v2059 = vsel %vm1745, %v1976, %v1736
      %v2060 = vsel %vm1745, %v1980, %v1737
      %v2061 = vsel %vm1745, %v1984, %v1738
      %v2062 = vsel %vm1745, %v1988, %v1739
      %v2063 = vsel %vm1745, %v1992, %v1740
      %v2064 = vsel %vm1745, %v1996, %v1741
      %v2065 = vsel %vm1745, %v2000, %v1742
      %v2066 = vld [vmem:[%s1] sm:$0xff]
      %v2067 = vld [vmem:[%s1 + $0x8] sm:$0xff]
      %v2068 = vld [vmem:[%s1 + $0x10] sm:$0xff]
      %v2069 = vld [vmem:[%s1 + $0x18] sm:$0xff]
      %v2070 = vld [vmem:[%s2] sm:$0x1]
      %v2072 = vlaneseq
      %v2073 = vshrl.u32 %v2072, 7
      %v2074 = vsub.s32 0, %v2073
      %v2075 = vrot.slane %v2070, %v2074
      %vm2077 = vcmask 261120
      %v2079 = vsel %vm2077, %v2002, 0
      %v2082 = vsel %vm2077, %v2003, 0
      %v2085 = vsel %vm2077, %v2004, 0
      %v2088 = vsel %vm2077, %v2005, 0
      %v2091 = vsel %vm2077, %v2006, 0
      %v2094 = vsel %vm2077, %v2007, 0
      %v2097 = vsel %vm2077, %v2008, 0
      %v2100 = vsel %vm2077, %v2009, 0
      %v2103 = vsel %vm2077, %v2010, 0
      %v2106 = vsel %vm2077, %v2011, 0
      %v2109 = vsel %vm2077, %v2012, 0
      %v2112 = vsel %vm2077, %v2013, 0
      %v2115 = vsel %vm2077, %v2014, 0
      %v2118 = vsel %vm2077, %v2015, 0
      %v2121 = vsel %vm2077, %v2016, 0
      %v2124 = vsel %vm2077, %v2017, 0
      %v2127 = vsel %vm2077, %v2018, 0
      %v2130 = vsel %vm2077, %v2019, 0
      %v2133 = vsel %vm2077, %v2020, 0
      %v2136 = vsel %vm2077, %v2021, 0
      %v2139 = vsel %vm2077, %v2022, 0
      %v2142 = vsel %vm2077, %v2023, 0
      %v2145 = vsel %vm2077, %v2024, 0
      %v2148 = vsel %vm2077, %v2025, 0
      %v2151 = vsel %vm2077, %v2026, 0
      %v2154 = vsel %vm2077, %v2027, 0
      %v2157 = vsel %vm2077, %v2028, 0
      %v2160 = vsel %vm2077, %v2029, 0
      %v2163 = vsel %vm2077, %v2030, 0
      %v2166 = vsel %vm2077, %v2031, 0
      %v2169 = vsel %vm2077, %v2032, 0
      %v2172 = vsel %vm2077, %v2033, 0
      %v2175 = vsel %vm2077, %v2034, 0
      %v2178 = vsel %vm2077, %v2035, 0
      %v2181 = vsel %vm2077, %v2036, 0
      %v2184 = vsel %vm2077, %v2037, 0
      %v2187 = vsel %vm2077, %v2038, 0
      %v2190 = vsel %vm2077, %v2039, 0
      %v2193 = vsel %vm2077, %v2040, 0
      %v2196 = vsel %vm2077, %v2041, 0
      %v2199 = vsel %vm2077, %v2042, 0
      %v2202 = vsel %vm2077, %v2043, 0
      %v2205 = vsel %vm2077, %v2044, 0
      %v2208 = vsel %vm2077, %v2045, 0
      %v2211 = vsel %vm2077, %v2046, 0
      %v2214 = vsel %vm2077, %v2047, 0
      %v2217 = vsel %vm2077, %v2048, 0
      %v2220 = vsel %vm2077, %v2049, 0
      %v2223 = vsel %vm2077, %v2050, 0
      %v2226 = vsel %vm2077, %v2051, 0
      %v2229 = vsel %vm2077, %v2052, 0
      %v2232 = vsel %vm2077, %v2053, 0
      %v2235 = vsel %vm2077, %v2054, 0
      %v2238 = vsel %vm2077, %v2055, 0
      %v2241 = vsel %vm2077, %v2056, 0
      %v2244 = vsel %vm2077, %v2057, 0
      %v2247 = vsel %vm2077, %v2058, 0
      %v2250 = vsel %vm2077, %v2059, 0
      %v2253 = vsel %vm2077, %v2060, 0
      %v2256 = vsel %vm2077, %v2061, 0
      %v2259 = vsel %vm2077, %v2062, 0
      %v2262 = vsel %vm2077, %v2063, 0
      %v2265 = vsel %vm2077, %v2064, 0
      %v2268 = vsel %vm2077, %v2065, 0
      %2270 = vmatprep.subr.mxu0 0.0
      %2271 = vmatpush1.msra.mxu0 0.0
      %2272 = vmatprep.subr.mxu0 0.0
      %2273 = vmatpush1.msra.mxu0 0.0
      %2274 = vmatprep.subr.mxu0 0.0
      %2275 = vmatpush1.msra.mxu0 0.0
      %2276 = vmatprep.subr.mxu0 0.0
      %2277 = vmatpush1.msra.mxu0 0.0
      %2278 = vmatprep.subr.mxu0 0.0
      %2279 = vmatpush1.msra.mxu0 0.0
      %2280 = vmatprep.subr.mxu0 0.0
      %2281 = vmatpush1.msra.mxu0 0.0
      %2282 = vmatprep.subr.mxu0 0.0
      %2283 = vmatpush1.msra.mxu0 0.0
      %2284 = vmatprep.subr.mxu0 0.0
      %2285 = vmatpush1.msra.mxu0 0.0
      %2286 = vmatprep.subr.mxu0 0.0
      %2287 = vmatpush1.msra.mxu0 0.0
      %2288 = vmatprep.subr.mxu0 0.0
      %2289 = vmatpush1.msra.mxu0 0.0
      %2290 = vmatprep.subr.mxu0 0.0
      %2291 = vmatpush1.msra.mxu0 0.0
      %2292 = vmatprep.subr.mxu0 0.0
      %2293 = vmatpush1.msra.mxu0 0.0
      %2294 = vmatprep.subr.mxu0 0.0
      %2295 = vmatpush1.msra.mxu0 %v2069
      %2296 = vmatprep.subr.mxu0 0.0
      %2297 = vmatpush1.msra.mxu0 %v2068
      %2298 = vmatprep.subr.mxu0 0.0
      %2299 = vmatpush1.msra.mxu0 %v2067
      %2300 = vmatprep.subr.mxu0 0.0
      %2301 = vmatpush1.msra.mxu0 %v2066
      %2302 = vmatprep.subr.mxu0 0.0
      %2303 = vmatpush2.msra.mxu0 0.0
      %2304 = vmatprep.subr.mxu0 0.0
      %2305 = vmatpush2.msra.mxu0 0.0
      %2306 = vmatprep.subr.mxu0 0.0
      %2307 = vmatpush2.msra.mxu0 0.0
      %2308 = vmatprep.subr.mxu0 0.0
      %2309 = vmatpush2.msra.mxu0 0.0
      %2310 = vmatprep.subr.mxu0 0.0
      %2311 = vmatpush2.msra.mxu0 0.0
      %2312 = vmatprep.subr.mxu0 0.0
      %2313 = vmatpush2.msra.mxu0 0.0
      %2314 = vmatprep.subr.mxu0 0.0
      %2315 = vmatpush2.msra.mxu0 0.0
      %2316 = vmatprep.subr.mxu0 0.0
      %2317 = vmatpush2.msra.mxu0 0.0
      %2318 = vmatprep.subr.mxu0 0.0
      %2319 = vmatpush2.msra.mxu0 0.0
      %2320 = vmatprep.subr.mxu0 0.0
      %2321 = vmatpush2.msra.mxu0 0.0
      %2322 = vmatprep.subr.mxu0 0.0
      %2323 = vmatpush2.msra.mxu0 0.0
      %2324 = vmatprep.subr.mxu0 0.0
      %2325 = vmatpush2.msra.mxu0 0.0
      %2326 = vmatprep.subr.mxu0 0.0
      %2327 = vmatpush2.msra.mxu0 0.0
      %2328 = vmatprep.subr.mxu0 0.0
      %2329 = vmatpush2.msra.mxu0 0.0
      %2330 = vmatprep.subr.mxu0 0.0
      %2331 = vmatpush2.msra.mxu0 0.0
      %2332 = vmatprep.subr.mxu0 0.0
      %2333 = vmatpush2.msra.mxu0 0.0
      %2334 = vmatprep.mubr.f32.mxu0 0.0
      %2335 = vmatmul.mubr.f32.gmra.mxu0 %v2079
      %v2336 = vpop.f32.mrf.mxu0
      %v2337 = vadd.f32 %v2075, %v2336
      %v2338 = vpop.f32.mrf.mxu0
      %2339 = vmatprep.mubr.f32.mxu0 0.0
      %2340 = vmatmul.mubr.f32.gmra.mxu0 %v2082
      %v2341 = vpop.f32.mrf.mxu0
      %v2342 = vadd.f32 %v2075, %v2341
      %v2343 = vpop.f32.mrf.mxu0
      %2344 = vmatprep.mubr.f32.mxu0 0.0
      %2345 = vmatmul.mubr.f32.gmra.mxu0 %v2085
      %v2346 = vpop.f32.mrf.mxu0
      %v2347 = vadd.f32 %v2075, %v2346
      %v2348 = vpop.f32.mrf.mxu0
      %2349 = vmatprep.mubr.f32.mxu0 0.0
      %2350 = vmatmul.mubr.f32.gmra.mxu0 %v2088
      %v2351 = vpop.f32.mrf.mxu0
      %v2352 = vadd.f32 %v2075, %v2351
      %v2353 = vpop.f32.mrf.mxu0
      %2354 = vmatprep.mubr.f32.mxu0 0.0
      %2355 = vmatmul.mubr.f32.gmra.mxu0 %v2091
      %v2356 = vpop.f32.mrf.mxu0
      %v2357 = vadd.f32 %v2075, %v2356
      %v2358 = vpop.f32.mrf.mxu0
      %2359 = vmatprep.mubr.f32.mxu0 0.0
      %2360 = vmatmul.mubr.f32.gmra.mxu0 %v2094
      %v2361 = vpop.f32.mrf.mxu0
      %v2362 = vadd.f32 %v2075, %v2361
      %v2363 = vpop.f32.mrf.mxu0
      %2364 = vmatprep.mubr.f32.mxu0 0.0
      %2365 = vmatmul.mubr.f32.gmra.mxu0 %v2097
      %v2366 = vpop.f32.mrf.mxu0
      %v2367 = vadd.f32 %v2075, %v2366
      %v2368 = vpop.f32.mrf.mxu0
      %2369 = vmatprep.mubr.f32.mxu0 0.0
      %2370 = vmatmul.mubr.f32.gmra.mxu0 %v2100
      %v2371 = vpop.f32.mrf.mxu0
      %v2372 = vadd.f32 %v2075, %v2371
      %v2373 = vpop.f32.mrf.mxu0
      %2374 = vmatprep.mubr.f32.mxu0 0.0
      %2375 = vmatmul.mubr.f32.gmra.mxu0 %v2103
      %v2376 = vpop.f32.mrf.mxu0
      %v2377 = vadd.f32 %v2075, %v2376
      %v2378 = vpop.f32.mrf.mxu0
      %2379 = vmatprep.mubr.f32.mxu0 0.0
      %2380 = vmatmul.mubr.f32.gmra.mxu0 %v2106
      %v2381 = vpop.f32.mrf.mxu0
      %v2382 = vadd.f32 %v2075, %v2381
      %v2383 = vpop.f32.mrf.mxu0
      %2384 = vmatprep.mubr.f32.mxu0 0.0
      %2385 = vmatmul.mubr.f32.gmra.mxu0 %v2109
      %v2386 = vpop.f32.mrf.mxu0
      %v2387 = vadd.f32 %v2075, %v2386
      %v2388 = vpop.f32.mrf.mxu0
      %2389 = vmatprep.mubr.f32.mxu0 0.0
      %2390 = vmatmul.mubr.f32.gmra.mxu0 %v2112
      %v2391 = vpop.f32.mrf.mxu0
      %v2392 = vadd.f32 %v2075, %v2391
      %v2393 = vpop.f32.mrf.mxu0
      %2394 = vmatprep.mubr.f32.mxu0 0.0
      %2395 = vmatmul.mubr.f32.gmra.mxu0 %v2115
      %v2396 = vpop.f32.mrf.mxu0
      %v2397 = vadd.f32 %v2075, %v2396
      %v2398 = vpop.f32.mrf.mxu0
      %2399 = vmatprep.mubr.f32.mxu0 0.0
      %2400 = vmatmul.mubr.f32.gmra.mxu0 %v2118
      %v2401 = vpop.f32.mrf.mxu0
      %v2402 = vadd.f32 %v2075, %v2401
      %v2403 = vpop.f32.mrf.mxu0
      %2404 = vmatprep.mubr.f32.mxu0 0.0
      %2405 = vmatmul.mubr.f32.gmra.mxu0 %v2121
      %v2406 = vpop.f32.mrf.mxu0
      %v2407 = vadd.f32 %v2075, %v2406
      %v2408 = vpop.f32.mrf.mxu0
      %2409 = vmatprep.mubr.f32.mxu0 0.0
      %2410 = vmatmul.mubr.f32.gmra.mxu0 %v2124
      %v2411 = vpop.f32.mrf.mxu0
      %v2412 = vadd.f32 %v2075, %v2411
      %v2413 = vpop.f32.mrf.mxu0
      %2414 = vmatprep.mubr.f32.mxu0 0.0
      %2415 = vmatmul.mubr.f32.gmra.mxu0 %v2127
      %v2416 = vpop.f32.mrf.mxu0
      %v2417 = vadd.f32 %v2075, %v2416
      %v2418 = vpop.f32.mrf.mxu0
      %2419 = vmatprep.mubr.f32.mxu0 0.0
      %2420 = vmatmul.mubr.f32.gmra.mxu0 %v2130
      %v2421 = vpop.f32.mrf.mxu0
      %v2422 = vadd.f32 %v2075, %v2421
      %v2423 = vpop.f32.mrf.mxu0
      %2424 = vmatprep.mubr.f32.mxu0 0.0
      %2425 = vmatmul.mubr.f32.gmra.mxu0 %v2133
      %v2426 = vpop.f32.mrf.mxu0
      %v2427 = vadd.f32 %v2075, %v2426
      %v2428 = vpop.f32.mrf.mxu0
      %2429 = vmatprep.mubr.f32.mxu0 0.0
      %2430 = vmatmul.mubr.f32.gmra.mxu0 %v2136
      %v2431 = vpop.f32.mrf.mxu0
      %v2432 = vadd.f32 %v2075, %v2431
      %v2433 = vpop.f32.mrf.mxu0
      %2434 = vmatprep.mubr.f32.mxu0 0.0
      %2435 = vmatmul.mubr.f32.gmra.mxu0 %v2139
      %v2436 = vpop.f32.mrf.mxu0
      %v2437 = vadd.f32 %v2075, %v2436
      %v2438 = vpop.f32.mrf.mxu0
      %2439 = vmatprep.mubr.f32.mxu0 0.0
      %2440 = vmatmul.mubr.f32.gmra.mxu0 %v2142
      %v2441 = vpop.f32.mrf.mxu0
      %v2442 = vadd.f32 %v2075, %v2441
      %v2443 = vpop.f32.mrf.mxu0
      %2444 = vmatprep.mubr.f32.mxu0 0.0
      %2445 = vmatmul.mubr.f32.gmra.mxu0 %v2145
      %v2446 = vpop.f32.mrf.mxu0
      %v2447 = vadd.f32 %v2075, %v2446
      %v2448 = vpop.f32.mrf.mxu0
      %2449 = vmatprep.mubr.f32.mxu0 0.0
      %2450 = vmatmul.mubr.f32.gmra.mxu0 %v2148
      %v2451 = vpop.f32.mrf.mxu0
      %v2452 = vadd.f32 %v2075, %v2451
      %v2453 = vpop.f32.mrf.mxu0
      %2454 = vmatprep.mubr.f32.mxu0 0.0
      %2455 = vmatmul.mubr.f32.gmra.mxu0 %v2151
      %v2456 = vpop.f32.mrf.mxu0
      %v2457 = vadd.f32 %v2075, %v2456
      %v2458 = vpop.f32.mrf.mxu0
      %2459 = vmatprep.mubr.f32.mxu0 0.0
      %2460 = vmatmul.mubr.f32.gmra.mxu0 %v2154
      %v2461 = vpop.f32.mrf.mxu0
      %v2462 = vadd.f32 %v2075, %v2461
      %v2463 = vpop.f32.mrf.mxu0
      %2464 = vmatprep.mubr.f32.mxu0 0.0
      %2465 = vmatmul.mubr.f32.gmra.mxu0 %v2157
      %v2466 = vpop.f32.mrf.mxu0
      %v2467 = vadd.f32 %v2075, %v2466
      %v2468 = vpop.f32.mrf.mxu0
      %2469 = vmatprep.mubr.f32.mxu0 0.0
      %2470 = vmatmul.mubr.f32.gmra.mxu0 %v2160
      %v2471 = vpop.f32.mrf.mxu0
      %v2472 = vadd.f32 %v2075, %v2471
      %v2473 = vpop.f32.mrf.mxu0
      %2474 = vmatprep.mubr.f32.mxu0 0.0
      %2475 = vmatmul.mubr.f32.gmra.mxu0 %v2163
      %v2476 = vpop.f32.mrf.mxu0
      %v2477 = vadd.f32 %v2075, %v2476
      %v2478 = vpop.f32.mrf.mxu0
      %2479 = vmatprep.mubr.f32.mxu0 0.0
      %2480 = vmatmul.mubr.f32.gmra.mxu0 %v2166
      %v2481 = vpop.f32.mrf.mxu0
      %v2482 = vadd.f32 %v2075, %v2481
      %v2483 = vpop.f32.mrf.mxu0
      %2484 = vmatprep.mubr.f32.mxu0 0.0
      %2485 = vmatmul.mubr.f32.gmra.mxu0 %v2169
      %v2486 = vpop.f32.mrf.mxu0
      %v2487 = vadd.f32 %v2075, %v2486
      %v2488 = vpop.f32.mrf.mxu0
      %2489 = vmatprep.mubr.f32.mxu0 0.0
      %2490 = vmatmul.mubr.f32.gmra.mxu0 %v2172
      %v2491 = vpop.f32.mrf.mxu0
      %v2492 = vadd.f32 %v2075, %v2491
      %v2493 = vpop.f32.mrf.mxu0
      %2494 = vmatprep.mubr.f32.mxu0 0.0
      %2495 = vmatmul.mubr.f32.gmra.mxu0 %v2175
      %v2496 = vpop.f32.mrf.mxu0
      %v2497 = vadd.f32 %v2075, %v2496
      %v2498 = vpop.f32.mrf.mxu0
      %2499 = vmatprep.mubr.f32.mxu0 0.0
      %2500 = vmatmul.mubr.f32.gmra.mxu0 %v2178
      %v2501 = vpop.f32.mrf.mxu0
      %v2502 = vadd.f32 %v2075, %v2501
      %v2503 = vpop.f32.mrf.mxu0
      %2504 = vmatprep.mubr.f32.mxu0 0.0
      %2505 = vmatmul.mubr.f32.gmra.mxu0 %v2181
      %v2506 = vpop.f32.mrf.mxu0
      %v2507 = vadd.f32 %v2075, %v2506
      %v2508 = vpop.f32.mrf.mxu0
      %2509 = vmatprep.mubr.f32.mxu0 0.0
      %2510 = vmatmul.mubr.f32.gmra.mxu0 %v2184
      %v2511 = vpop.f32.mrf.mxu0
      %v2512 = vadd.f32 %v2075, %v2511
      %v2513 = vpop.f32.mrf.mxu0
      %2514 = vmatprep.mubr.f32.mxu0 0.0
      %2515 = vmatmul.mubr.f32.gmra.mxu0 %v2187
      %v2516 = vpop.f32.mrf.mxu0
      %v2517 = vadd.f32 %v2075, %v2516
      %v2518 = vpop.f32.mrf.mxu0
      %2519 = vmatprep.mubr.f32.mxu0 0.0
      %2520 = vmatmul.mubr.f32.gmra.mxu0 %v2190
      %v2521 = vpop.f32.mrf.mxu0
      %v2522 = vadd.f32 %v2075, %v2521
      %v2523 = vpop.f32.mrf.mxu0
      %2524 = vmatprep.mubr.f32.mxu0 0.0
      %2525 = vmatmul.mubr.f32.gmra.mxu0 %v2193
      %v2526 = vpop.f32.mrf.mxu0
      %v2527 = vadd.f32 %v2075, %v2526
      %v2528 = vpop.f32.mrf.mxu0
      %2529 = vmatprep.mubr.f32.mxu0 0.0
      %2530 = vmatmul.mubr.f32.gmra.mxu0 %v2196
      %v2531 = vpop.f32.mrf.mxu0
      %v2532 = vadd.f32 %v2075, %v2531
      %v2533 = vpop.f32.mrf.mxu0
      %2534 = vmatprep.mubr.f32.mxu0 0.0
      %2535 = vmatmul.mubr.f32.gmra.mxu0 %v2199
      %v2536 = vpop.f32.mrf.mxu0
      %v2537 = vadd.f32 %v2075, %v2536
      %v2538 = vpop.f32.mrf.mxu0
      %2539 = vmatprep.mubr.f32.mxu0 0.0
      %2540 = vmatmul.mubr.f32.gmra.mxu0 %v2202
      %v2541 = vpop.f32.mrf.mxu0
      %v2542 = vadd.f32 %v2075, %v2541
      %v2543 = vpop.f32.mrf.mxu0
      %2544 = vmatprep.mubr.f32.mxu0 0.0
      %2545 = vmatmul.mubr.f32.gmra.mxu0 %v2205
      %v2546 = vpop.f32.mrf.mxu0
      %v2547 = vadd.f32 %v2075, %v2546
      %v2548 = vpop.f32.mrf.mxu0
      %2549 = vmatprep.mubr.f32.mxu0 0.0
      %2550 = vmatmul.mubr.f32.gmra.mxu0 %v2208
      %v2551 = vpop.f32.mrf.mxu0
      %v2552 = vadd.f32 %v2075, %v2551
      %v2553 = vpop.f32.mrf.mxu0
      %2554 = vmatprep.mubr.f32.mxu0 0.0
      %2555 = vmatmul.mubr.f32.gmra.mxu0 %v2211
      %v2556 = vpop.f32.mrf.mxu0
      %v2557 = vadd.f32 %v2075, %v2556
      %v2558 = vpop.f32.mrf.mxu0
      %2559 = vmatprep.mubr.f32.mxu0 0.0
      %2560 = vmatmul.mubr.f32.gmra.mxu0 %v2214
      %v2561 = vpop.f32.mrf.mxu0
      %v2562 = vadd.f32 %v2075, %v2561
      %v2563 = vpop.f32.mrf.mxu0
      %2564 = vmatprep.mubr.f32.mxu0 0.0
      %2565 = vmatmul.mubr.f32.gmra.mxu0 %v2217
      %v2566 = vpop.f32.mrf.mxu0
      %v2567 = vadd.f32 %v2075, %v2566
      %v2568 = vpop.f32.mrf.mxu0
      %2569 = vmatprep.mubr.f32.mxu0 0.0
      %2570 = vmatmul.mubr.f32.gmra.mxu0 %v2220
      %v2571 = vpop.f32.mrf.mxu0
      %v2572 = vadd.f32 %v2075, %v2571
      %v2573 = vpop.f32.mrf.mxu0
      %2574 = vmatprep.mubr.f32.mxu0 0.0
      %2575 = vmatmul.mubr.f32.gmra.mxu0 %v2223
      %v2576 = vpop.f32.mrf.mxu0
      %v2577 = vadd.f32 %v2075, %v2576
      %v2578 = vpop.f32.mrf.mxu0
      %2579 = vmatprep.mubr.f32.mxu0 0.0
      %2580 = vmatmul.mubr.f32.gmra.mxu0 %v2226
      %v2581 = vpop.f32.mrf.mxu0
      %v2582 = vadd.f32 %v2075, %v2581
      %v2583 = vpop.f32.mrf.mxu0
      %2584 = vmatprep.mubr.f32.mxu0 0.0
      %2585 = vmatmul.mubr.f32.gmra.mxu0 %v2229
      %v2586 = vpop.f32.mrf.mxu0
      %v2587 = vadd.f32 %v2075, %v2586
      %v2588 = vpop.f32.mrf.mxu0
      %2589 = vmatprep.mubr.f32.mxu0 0.0
      %2590 = vmatmul.mubr.f32.gmra.mxu0 %v2232
      %v2591 = vpop.f32.mrf.mxu0
      %v2592 = vadd.f32 %v2075, %v2591
      %v2593 = vpop.f32.mrf.mxu0
      %2594 = vmatprep.mubr.f32.mxu0 0.0
      %2595 = vmatmul.mubr.f32.gmra.mxu0 %v2235
      %v2596 = vpop.f32.mrf.mxu0
      %v2597 = vadd.f32 %v2075, %v2596
      %v2598 = vpop.f32.mrf.mxu0
      %2599 = vmatprep.mubr.f32.mxu0 0.0
      %2600 = vmatmul.mubr.f32.gmra.mxu0 %v2238
      %v2601 = vpop.f32.mrf.mxu0
      %v2602 = vadd.f32 %v2075, %v2601
      %v2603 = vpop.f32.mrf.mxu0
      %2604 = vmatprep.mubr.f32.mxu0 0.0
      %2605 = vmatmul.mubr.f32.gmra.mxu0 %v2241
      %v2606 = vpop.f32.mrf.mxu0
      %v2607 = vadd.f32 %v2075, %v2606
      %v2608 = vpop.f32.mrf.mxu0
      %2609 = vmatprep.mubr.f32.mxu0 0.0
      %2610 = vmatmul.mubr.f32.gmra.mxu0 %v2244
      %v2611 = vpop.f32.mrf.mxu0
      %v2612 = vadd.f32 %v2075, %v2611
      %v2613 = vpop.f32.mrf.mxu0
      %2614 = vmatprep.mubr.f32.mxu0 0.0
      %2615 = vmatmul.mubr.f32.gmra.mxu0 %v2247
      %v2616 = vpop.f32.mrf.mxu0
      %v2617 = vadd.f32 %v2075, %v2616
      %v2618 = vpop.f32.mrf.mxu0
      %2619 = vmatprep.mubr.f32.mxu0 0.0
      %2620 = vmatmul.mubr.f32.gmra.mxu0 %v2250
      %v2621 = vpop.f32.mrf.mxu0
      %v2622 = vadd.f32 %v2075, %v2621
      %v2623 = vpop.f32.mrf.mxu0
      %2624 = vmatprep.mubr.f32.mxu0 0.0
      %2625 = vmatmul.mubr.f32.gmra.mxu0 %v2253
      %v2626 = vpop.f32.mrf.mxu0
      %v2627 = vadd.f32 %v2075, %v2626
      %v2628 = vpop.f32.mrf.mxu0
      %2629 = vmatprep.mubr.f32.mxu0 0.0
      %2630 = vmatmul.mubr.f32.gmra.mxu0 %v2256
      %v2631 = vpop.f32.mrf.mxu0
      %v2632 = vadd.f32 %v2075, %v2631
      %v2633 = vpop.f32.mrf.mxu0
      %2634 = vmatprep.mubr.f32.mxu0 0.0
      %2635 = vmatmul.mubr.f32.gmra.mxu0 %v2259
      %v2636 = vpop.f32.mrf.mxu0
      %v2637 = vadd.f32 %v2075, %v2636
      %v2638 = vpop.f32.mrf.mxu0
      %2639 = vmatprep.mubr.f32.mxu0 0.0
      %2640 = vmatmul.mubr.f32.gmra.mxu0 %v2262
      %v2641 = vpop.f32.mrf.mxu0
      %v2642 = vadd.f32 %v2075, %v2641
      %v2643 = vpop.f32.mrf.mxu0
      %2644 = vmatprep.mubr.f32.mxu0 0.0
      %2645 = vmatmul.mubr.f32.gmra.mxu0 %v2265
      %v2646 = vpop.f32.mrf.mxu0
      %v2647 = vadd.f32 %v2075, %v2646
      %v2648 = vpop.f32.mrf.mxu0
      %2649 = vmatprep.mubr.f32.mxu0 0.0
      %2650 = vmatmul.mubr.f32.gmra.mxu0 %v2268
      %v2651 = vpop.f32.mrf.mxu0
      %v2652 = vadd.f32 %v2075, %v2651
      %v2653 = vpop.f32.mrf.mxu0
      %2654 = vdwg.mxu0
      %v2655 = vmax.f32 %v2337, 0.0
      %v2656 = vmax.f32 %v2342, 0.0
      %v2657 = vmax.f32 %v2347, 0.0
      %v2658 = vmax.f32 %v2352, 0.0
      %v2659 = vmax.f32 %v2357, 0.0
      %v2660 = vmax.f32 %v2362, 0.0
      %v2661 = vmax.f32 %v2367, 0.0
      %v2662 = vmax.f32 %v2372, 0.0
      %v2663 = vmax.f32 %v2377, 0.0
      %v2664 = vmax.f32 %v2382, 0.0
      %v2665 = vmax.f32 %v2387, 0.0
      %v2666 = vmax.f32 %v2392, 0.0
      %v2667 = vmax.f32 %v2397, 0.0
      %v2668 = vmax.f32 %v2402, 0.0
      %v2669 = vmax.f32 %v2407, 0.0
      %v2670 = vmax.f32 %v2412, 0.0
      %v2671 = vmax.f32 %v2417, 0.0
      %v2672 = vmax.f32 %v2422, 0.0
      %v2673 = vmax.f32 %v2427, 0.0
      %v2674 = vmax.f32 %v2432, 0.0
      %v2675 = vmax.f32 %v2437, 0.0
      %v2676 = vmax.f32 %v2442, 0.0
      %v2677 = vmax.f32 %v2447, 0.0
      %v2678 = vmax.f32 %v2452, 0.0
      %v2679 = vmax.f32 %v2457, 0.0
      %v2680 = vmax.f32 %v2462, 0.0
      %v2681 = vmax.f32 %v2467, 0.0
      %v2682 = vmax.f32 %v2472, 0.0
      %v2683 = vmax.f32 %v2477, 0.0
      %v2684 = vmax.f32 %v2482, 0.0
      %v2685 = vmax.f32 %v2487, 0.0
      %v2686 = vmax.f32 %v2492, 0.0
      %v2687 = vmax.f32 %v2497, 0.0
      %v2688 = vmax.f32 %v2502, 0.0
      %v2689 = vmax.f32 %v2507, 0.0
      %v2690 = vmax.f32 %v2512, 0.0
      %v2691 = vmax.f32 %v2517, 0.0
      %v2692 = vmax.f32 %v2522, 0.0
      %v2693 = vmax.f32 %v2527, 0.0
      %v2694 = vmax.f32 %v2532, 0.0
      %v2695 = vmax.f32 %v2537, 0.0
      %v2696 = vmax.f32 %v2542, 0.0
      %v2697 = vmax.f32 %v2547, 0.0
      %v2698 = vmax.f32 %v2552, 0.0
      %v2699 = vmax.f32 %v2557, 0.0
      %v2700 = vmax.f32 %v2562, 0.0
      %v2701 = vmax.f32 %v2567, 0.0
      %v2702 = vmax.f32 %v2572, 0.0
      %v2703 = vmax.f32 %v2577, 0.0
      %v2704 = vmax.f32 %v2582, 0.0
      %v2705 = vmax.f32 %v2587, 0.0
      %v2706 = vmax.f32 %v2592, 0.0
      %v2707 = vmax.f32 %v2597, 0.0
      %v2708 = vmax.f32 %v2602, 0.0
      %v2709 = vmax.f32 %v2607, 0.0
      %v2710 = vmax.f32 %v2612, 0.0
      %v2711 = vmax.f32 %v2617, 0.0
      %v2712 = vmax.f32 %v2622, 0.0
      %v2713 = vmax.f32 %v2627, 0.0
      %v2714 = vmax.f32 %v2632, 0.0
      %v2715 = vmax.f32 %v2637, 0.0
      %v2716 = vmax.f32 %v2642, 0.0
      %v2717 = vmax.f32 %v2647, 0.0
      %v2718 = vmax.f32 %v2652, 0.0
      %v2719 = vld [vmem:[%s3] sm:$0xff]
      %v2720 = vld [vmem:[%s3 + $0x8] sm:$0xff]
      %v2721 = vld [vmem:[%s3 + $0x10] sm:$0xff]
      %v2722 = vld [vmem:[%s3 + $0x18] sm:$0xff]
      %v2723 = vld [vmem:[%s4] sm:$0x1]
      %v2725 = vlaneseq
      %v2726 = vshrl.u32 %v2725, 7
      %v2727 = vsub.s32 0, %v2726
      %v2728 = vrot.slane %v2723, %v2727
      %v2731 = vsel %vm2077, %v2655, 0
      %v2734 = vsel %vm2077, %v2656, 0
      %v2737 = vsel %vm2077, %v2657, 0
      %v2740 = vsel %vm2077, %v2658, 0
      %v2743 = vsel %vm2077, %v2659, 0
      %v2746 = vsel %vm2077, %v2660, 0
      %v2749 = vsel %vm2077, %v2661, 0
      %v2752 = vsel %vm2077, %v2662, 0
      %v2755 = vsel %vm2077, %v2663, 0
      %v2758 = vsel %vm2077, %v2664, 0
      %v2761 = vsel %vm2077, %v2665, 0
      %v2764 = vsel %vm2077, %v2666, 0
      %v2767 = vsel %vm2077, %v2667, 0
      %v2770 = vsel %vm2077, %v2668, 0
      %v2773 = vsel %vm2077, %v2669, 0
      %v2776 = vsel %vm2077, %v2670, 0
      %v2779 = vsel %vm2077, %v2671, 0
      %v2782 = vsel %vm2077, %v2672, 0
      %v2785 = vsel %vm2077, %v2673, 0
      %v2788 = vsel %vm2077, %v2674, 0
      %v2791 = vsel %vm2077, %v2675, 0
      %v2794 = vsel %vm2077, %v2676, 0
      %v2797 = vsel %vm2077, %v2677, 0
      %v2800 = vsel %vm2077, %v2678, 0
      %v2803 = vsel %vm2077, %v2679, 0
      %v2806 = vsel %vm2077, %v2680, 0
      %v2809 = vsel %vm2077, %v2681, 0
      %v2812 = vsel %vm2077, %v2682, 0
      %v2815 = vsel %vm2077, %v2683, 0
      %v2818 = vsel %vm2077, %v2684, 0
      %v2821 = vsel %vm2077, %v2685, 0
      %v2824 = vsel %vm2077, %v2686, 0
      %v2827 = vsel %vm2077, %v2687, 0
      %v2830 = vsel %vm2077, %v2688, 0
      %v2833 = vsel %vm2077, %v2689, 0
      %v2836 = vsel %vm2077, %v2690, 0
      %v2839 = vsel %vm2077, %v2691, 0
      %v2842 = vsel %vm2077, %v2692, 0
      %v2845 = vsel %vm2077, %v2693, 0
      %v2848 = vsel %vm2077, %v2694, 0
      %v2851 = vsel %vm2077, %v2695, 0
      %v2854 = vsel %vm2077, %v2696, 0
      %v2857 = vsel %vm2077, %v2697, 0
      %v2860 = vsel %vm2077, %v2698, 0
      %v2863 = vsel %vm2077, %v2699, 0
      %v2866 = vsel %vm2077, %v2700, 0
      %v2869 = vsel %vm2077, %v2701, 0
      %v2872 = vsel %vm2077, %v2702, 0
      %v2875 = vsel %vm2077, %v2703, 0
      %v2878 = vsel %vm2077, %v2704, 0
      %v2881 = vsel %vm2077, %v2705, 0
      %v2884 = vsel %vm2077, %v2706, 0
      %v2887 = vsel %vm2077, %v2707, 0
      %v2890 = vsel %vm2077, %v2708, 0
      %v2893 = vsel %vm2077, %v2709, 0
      %v2896 = vsel %vm2077, %v2710, 0
      %v2899 = vsel %vm2077, %v2711, 0
      %v2902 = vsel %vm2077, %v2712, 0
      %v2905 = vsel %vm2077, %v2713, 0
      %v2908 = vsel %vm2077, %v2714, 0
      %v2911 = vsel %vm2077, %v2715, 0
      %v2914 = vsel %vm2077, %v2716, 0
      %v2917 = vsel %vm2077, %v2717, 0
      %v2920 = vsel %vm2077, %v2718, 0
      %2922 = vmatprep.subr.mxu0 0.0
      %2923 = vmatpush1.msra.mxu0 0.0
      %2924 = vmatprep.subr.mxu0 0.0
      %2925 = vmatpush1.msra.mxu0 0.0
      %2926 = vmatprep.subr.mxu0 0.0
      %2927 = vmatpush1.msra.mxu0 0.0
      %2928 = vmatprep.subr.mxu0 0.0
      %2929 = vmatpush1.msra.mxu0 0.0
      %2930 = vmatprep.subr.mxu0 0.0
      %2931 = vmatpush1.msra.mxu0 0.0
      %2932 = vmatprep.subr.mxu0 0.0
      %2933 = vmatpush1.msra.mxu0 0.0
      %2934 = vmatprep.subr.mxu0 0.0
      %2935 = vmatpush1.msra.mxu0 0.0
      %2936 = vmatprep.subr.mxu0 0.0
      %2937 = vmatpush1.msra.mxu0 0.0
      %2938 = vmatprep.subr.mxu0 0.0
      %2939 = vmatpush1.msra.mxu0 0.0
      %2940 = vmatprep.subr.mxu0 0.0
      %2941 = vmatpush1.msra.mxu0 0.0
      %2942 = vmatprep.subr.mxu0 0.0
      %2943 = vmatpush1.msra.mxu0 0.0
      %2944 = vmatprep.subr.mxu0 0.0
      %2945 = vmatpush1.msra.mxu0 0.0
      %2946 = vmatprep.subr.mxu0 0.0
      %2947 = vmatpush1.msra.mxu0 %v2722
      %2948 = vmatprep.subr.mxu0 0.0
      %2949 = vmatpush1.msra.mxu0 %v2721
      %2950 = vmatprep.subr.mxu0 0.0
      %2951 = vmatpush1.msra.mxu0 %v2720
      %2952 = vmatprep.subr.mxu0 0.0
      %2953 = vmatpush1.msra.mxu0 %v2719
      %2954 = vmatprep.subr.mxu0 0.0
      %2955 = vmatpush2.msra.mxu0 0.0
      %2956 = vmatprep.subr.mxu0 0.0
      %2957 = vmatpush2.msra.mxu0 0.0
      %2958 = vmatprep.subr.mxu0 0.0
      %2959 = vmatpush2.msra.mxu0 0.0
      %2960 = vmatprep.subr.mxu0 0.0
      %2961 = vmatpush2.msra.mxu0 0.0
      %2962 = vmatprep.subr.mxu0 0.0
      %2963 = vmatpush2.msra.mxu0 0.0
      %2964 = vmatprep.subr.mxu0 0.0
      %2965 = vmatpush2.msra.mxu0 0.0
      %2966 = vmatprep.subr.mxu0 0.0
      %2967 = vmatpush2.msra.mxu0 0.0
      %2968 = vmatprep.subr.mxu0 0.0
      %2969 = vmatpush2.msra.mxu0 0.0
      %2970 = vmatprep.subr.mxu0 0.0
      %2971 = vmatpush2.msra.mxu0 0.0
      %2972 = vmatprep.subr.mxu0 0.0
      %2973 = vmatpush2.msra.mxu0 0.0
      %2974 = vmatprep.subr.mxu0 0.0
      %2975 = vmatpush2.msra.mxu0 0.0
      %2976 = vmatprep.subr.mxu0 0.0
      %2977 = vmatpush2.msra.mxu0 0.0
      %2978 = vmatprep.subr.mxu0 0.0
      %2979 = vmatpush2.msra.mxu0 0.0
      %2980 = vmatprep.subr.mxu0 0.0
      %2981 = vmatpush2.msra.mxu0 0.0
      %2982 = vmatprep.subr.mxu0 0.0
      %2983 = vmatpush2.msra.mxu0 0.0
      %2984 = vmatprep.subr.mxu0 0.0
      %2985 = vmatpush2.msra.mxu0 0.0
      %2986 = vmatprep.mubr.f32.mxu0 0.0
      %2987 = vmatmul.mubr.f32.gmra.mxu0 %v2731
      %v2988 = vpop.f32.mrf.mxu0
      %v2989 = vadd.f32 %v2728, %v2988
      %v2990 = vpop.f32.mrf.mxu0
      %2991 = vmatprep.mubr.f32.mxu0 0.0
      %2992 = vmatmul.mubr.f32.gmra.mxu0 %v2734
      %v2993 = vpop.f32.mrf.mxu0
      %v2994 = vadd.f32 %v2728, %v2993
      %v2995 = vpop.f32.mrf.mxu0
      %2996 = vmatprep.mubr.f32.mxu0 0.0
      %2997 = vmatmul.mubr.f32.gmra.mxu0 %v2737
      %v2998 = vpop.f32.mrf.mxu0
      %v2999 = vadd.f32 %v2728, %v2998
      %v3000 = vpop.f32.mrf.mxu0
      %3001 = vmatprep.mubr.f32.mxu0 0.0
      %3002 = vmatmul.mubr.f32.gmra.mxu0 %v2740
      %v3003 = vpop.f32.mrf.mxu0
      %v3004 = vadd.f32 %v2728, %v3003
      %v3005 = vpop.f32.mrf.mxu0
      %3006 = vmatprep.mubr.f32.mxu0 0.0
      %3007 = vmatmul.mubr.f32.gmra.mxu0 %v2743
      %v3008 = vpop.f32.mrf.mxu0
      %v3009 = vadd.f32 %v2728, %v3008
      %v3010 = vpop.f32.mrf.mxu0
      %3011 = vmatprep.mubr.f32.mxu0 0.0
      %3012 = vmatmul.mubr.f32.gmra.mxu0 %v2746
      %v3013 = vpop.f32.mrf.mxu0
      %v3014 = vadd.f32 %v2728, %v3013
      %v3015 = vpop.f32.mrf.mxu0
      %3016 = vmatprep.mubr.f32.mxu0 0.0
      %3017 = vmatmul.mubr.f32.gmra.mxu0 %v2749
      %v3018 = vpop.f32.mrf.mxu0
      %v3019 = vadd.f32 %v2728, %v3018
      %v3020 = vpop.f32.mrf.mxu0
      %3021 = vmatprep.mubr.f32.mxu0 0.0
      %3022 = vmatmul.mubr.f32.gmra.mxu0 %v2752
      %v3023 = vpop.f32.mrf.mxu0
      %v3024 = vadd.f32 %v2728, %v3023
      %v3025 = vpop.f32.mrf.mxu0
      %3026 = vmatprep.mubr.f32.mxu0 0.0
      %3027 = vmatmul.mubr.f32.gmra.mxu0 %v2755
      %v3028 = vpop.f32.mrf.mxu0
      %v3029 = vadd.f32 %v2728, %v3028
      %v3030 = vpop.f32.mrf.mxu0
      %3031 = vmatprep.mubr.f32.mxu0 0.0
      %3032 = vmatmul.mubr.f32.gmra.mxu0 %v2758
      %v3033 = vpop.f32.mrf.mxu0
      %v3034 = vadd.f32 %v2728, %v3033
      %v3035 = vpop.f32.mrf.mxu0
      %3036 = vmatprep.mubr.f32.mxu0 0.0
      %3037 = vmatmul.mubr.f32.gmra.mxu0 %v2761
      %v3038 = vpop.f32.mrf.mxu0
      %v3039 = vadd.f32 %v2728, %v3038
      %v3040 = vpop.f32.mrf.mxu0
      %3041 = vmatprep.mubr.f32.mxu0 0.0
      %3042 = vmatmul.mubr.f32.gmra.mxu0 %v2764
      %v3043 = vpop.f32.mrf.mxu0
      %v3044 = vadd.f32 %v2728, %v3043
      %v3045 = vpop.f32.mrf.mxu0
      %3046 = vmatprep.mubr.f32.mxu0 0.0
      %3047 = vmatmul.mubr.f32.gmra.mxu0 %v2767
      %v3048 = vpop.f32.mrf.mxu0
      %v3049 = vadd.f32 %v2728, %v3048
      %v3050 = vpop.f32.mrf.mxu0
      %3051 = vmatprep.mubr.f32.mxu0 0.0
      %3052 = vmatmul.mubr.f32.gmra.mxu0 %v2770
      %v3053 = vpop.f32.mrf.mxu0
      %v3054 = vadd.f32 %v2728, %v3053
      %v3055 = vpop.f32.mrf.mxu0
      %3056 = vmatprep.mubr.f32.mxu0 0.0
      %3057 = vmatmul.mubr.f32.gmra.mxu0 %v2773
      %v3058 = vpop.f32.mrf.mxu0
      %v3059 = vadd.f32 %v2728, %v3058
      %v3060 = vpop.f32.mrf.mxu0
      %3061 = vmatprep.mubr.f32.mxu0 0.0
      %3062 = vmatmul.mubr.f32.gmra.mxu0 %v2776
      %v3063 = vpop.f32.mrf.mxu0
      %v3064 = vadd.f32 %v2728, %v3063
      %v3065 = vpop.f32.mrf.mxu0
      %3066 = vmatprep.mubr.f32.mxu0 0.0
      %3067 = vmatmul.mubr.f32.gmra.mxu0 %v2779
      %v3068 = vpop.f32.mrf.mxu0
      %v3069 = vadd.f32 %v2728, %v3068
      %v3070 = vpop.f32.mrf.mxu0
      %3071 = vmatprep.mubr.f32.mxu0 0.0
      %3072 = vmatmul.mubr.f32.gmra.mxu0 %v2782
      %v3073 = vpop.f32.mrf.mxu0
      %v3074 = vadd.f32 %v2728, %v3073
      %v3075 = vpop.f32.mrf.mxu0
      %3076 = vmatprep.mubr.f32.mxu0 0.0
      %3077 = vmatmul.mubr.f32.gmra.mxu0 %v2785
      %v3078 = vpop.f32.mrf.mxu0
      %v3079 = vadd.f32 %v2728, %v3078
      %v3080 = vpop.f32.mrf.mxu0
      %3081 = vmatprep.mubr.f32.mxu0 0.0
      %3082 = vmatmul.mubr.f32.gmra.mxu0 %v2788
      %v3083 = vpop.f32.mrf.mxu0
      %v3084 = vadd.f32 %v2728, %v3083
      %v3085 = vpop.f32.mrf.mxu0
      %3086 = vmatprep.mubr.f32.mxu0 0.0
      %3087 = vmatmul.mubr.f32.gmra.mxu0 %v2791
      %v3088 = vpop.f32.mrf.mxu0
      %v3089 = vadd.f32 %v2728, %v3088
      %v3090 = vpop.f32.mrf.mxu0
      %3091 = vmatprep.mubr.f32.mxu0 0.0
      %3092 = vmatmul.mubr.f32.gmra.mxu0 %v2794
      %v3093 = vpop.f32.mrf.mxu0
      %v3094 = vadd.f32 %v2728, %v3093
      %v3095 = vpop.f32.mrf.mxu0
      %3096 = vmatprep.mubr.f32.mxu0 0.0
      %3097 = vmatmul.mubr.f32.gmra.mxu0 %v2797
      %v3098 = vpop.f32.mrf.mxu0
      %v3099 = vadd.f32 %v2728, %v3098
      %v3100 = vpop.f32.mrf.mxu0
      %3101 = vmatprep.mubr.f32.mxu0 0.0
      %3102 = vmatmul.mubr.f32.gmra.mxu0 %v2800
      %v3103 = vpop.f32.mrf.mxu0
      %v3104 = vadd.f32 %v2728, %v3103
      %v3105 = vpop.f32.mrf.mxu0
      %3106 = vmatprep.mubr.f32.mxu0 0.0
      %3107 = vmatmul.mubr.f32.gmra.mxu0 %v2803
      %v3108 = vpop.f32.mrf.mxu0
      %v3109 = vadd.f32 %v2728, %v3108
      %v3110 = vpop.f32.mrf.mxu0
      %3111 = vmatprep.mubr.f32.mxu0 0.0
      %3112 = vmatmul.mubr.f32.gmra.mxu0 %v2806
      %v3113 = vpop.f32.mrf.mxu0
      %v3114 = vadd.f32 %v2728, %v3113
      %v3115 = vpop.f32.mrf.mxu0
      %3116 = vmatprep.mubr.f32.mxu0 0.0
      %3117 = vmatmul.mubr.f32.gmra.mxu0 %v2809
      %v3118 = vpop.f32.mrf.mxu0
      %v3119 = vadd.f32 %v2728, %v3118
      %v3120 = vpop.f32.mrf.mxu0
      %3121 = vmatprep.mubr.f32.mxu0 0.0
      %3122 = vmatmul.mubr.f32.gmra.mxu0 %v2812
      %v3123 = vpop.f32.mrf.mxu0
      %v3124 = vadd.f32 %v2728, %v3123
      %v3125 = vpop.f32.mrf.mxu0
      %3126 = vmatprep.mubr.f32.mxu0 0.0
      %3127 = vmatmul.mubr.f32.gmra.mxu0 %v2815
      %v3128 = vpop.f32.mrf.mxu0
      %v3129 = vadd.f32 %v2728, %v3128
      %v3130 = vpop.f32.mrf.mxu0
      %3131 = vmatprep.mubr.f32.mxu0 0.0
      %3132 = vmatmul.mubr.f32.gmra.mxu0 %v2818
      %v3133 = vpop.f32.mrf.mxu0
      %v3134 = vadd.f32 %v2728, %v3133
      %v3135 = vpop.f32.mrf.mxu0
      %3136 = vmatprep.mubr.f32.mxu0 0.0
      %3137 = vmatmul.mubr.f32.gmra.mxu0 %v2821
      %v3138 = vpop.f32.mrf.mxu0
      %v3139 = vadd.f32 %v2728, %v3138
      %v3140 = vpop.f32.mrf.mxu0
      %3141 = vmatprep.mubr.f32.mxu0 0.0
      %3142 = vmatmul.mubr.f32.gmra.mxu0 %v2824
      %v3143 = vpop.f32.mrf.mxu0
      %v3144 = vadd.f32 %v2728, %v3143
      %v3145 = vpop.f32.mrf.mxu0
      %3146 = vmatprep.mubr.f32.mxu0 0.0
      %3147 = vmatmul.mubr.f32.gmra.mxu0 %v2827
      %v3148 = vpop.f32.mrf.mxu0
      %v3149 = vadd.f32 %v2728, %v3148
      %v3150 = vpop.f32.mrf.mxu0
      %3151 = vmatprep.mubr.f32.mxu0 0.0
      %3152 = vmatmul.mubr.f32.gmra.mxu0 %v2830
      %v3153 = vpop.f32.mrf.mxu0
      %v3154 = vadd.f32 %v2728, %v3153
      %v3155 = vpop.f32.mrf.mxu0
      %3156 = vmatprep.mubr.f32.mxu0 0.0
      %3157 = vmatmul.mubr.f32.gmra.mxu0 %v2833
      %v3158 = vpop.f32.mrf.mxu0
      %v3159 = vadd.f32 %v2728, %v3158
      %v3160 = vpop.f32.mrf.mxu0
      %3161 = vmatprep.mubr.f32.mxu0 0.0
      %3162 = vmatmul.mubr.f32.gmra.mxu0 %v2836
      %v3163 = vpop.f32.mrf.mxu0
      %v3164 = vadd.f32 %v2728, %v3163
      %v3165 = vpop.f32.mrf.mxu0
      %3166 = vmatprep.mubr.f32.mxu0 0.0
      %3167 = vmatmul.mubr.f32.gmra.mxu0 %v2839
      %v3168 = vpop.f32.mrf.mxu0
      %v3169 = vadd.f32 %v2728, %v3168
      %v3170 = vpop.f32.mrf.mxu0
      %3171 = vmatprep.mubr.f32.mxu0 0.0
      %3172 = vmatmul.mubr.f32.gmra.mxu0 %v2842
      %v3173 = vpop.f32.mrf.mxu0
      %v3174 = vadd.f32 %v2728, %v3173
      %v3175 = vpop.f32.mrf.mxu0
      %3176 = vmatprep.mubr.f32.mxu0 0.0
      %3177 = vmatmul.mubr.f32.gmra.mxu0 %v2845
      %v3178 = vpop.f32.mrf.mxu0
      %v3179 = vadd.f32 %v2728, %v3178
      %v3180 = vpop.f32.mrf.mxu0
      %3181 = vmatprep.mubr.f32.mxu0 0.0
      %3182 = vmatmul.mubr.f32.gmra.mxu0 %v2848
      %v3183 = vpop.f32.mrf.mxu0
      %v3184 = vadd.f32 %v2728, %v3183
      %v3185 = vpop.f32.mrf.mxu0
      %3186 = vmatprep.mubr.f32.mxu0 0.0
      %3187 = vmatmul.mubr.f32.gmra.mxu0 %v2851
      %v3188 = vpop.f32.mrf.mxu0
      %v3189 = vadd.f32 %v2728, %v3188
      %v3190 = vpop.f32.mrf.mxu0
      %3191 = vmatprep.mubr.f32.mxu0 0.0
      %3192 = vmatmul.mubr.f32.gmra.mxu0 %v2854
      %v3193 = vpop.f32.mrf.mxu0
      %v3194 = vadd.f32 %v2728, %v3193
      %v3195 = vpop.f32.mrf.mxu0
      %3196 = vmatprep.mubr.f32.mxu0 0.0
      %3197 = vmatmul.mubr.f32.gmra.mxu0 %v2857
      %v3198 = vpop.f32.mrf.mxu0
      %v3199 = vadd.f32 %v2728, %v3198
      %v3200 = vpop.f32.mrf.mxu0
      %3201 = vmatprep.mubr.f32.mxu0 0.0
      %3202 = vmatmul.mubr.f32.gmra.mxu0 %v2860
      %v3203 = vpop.f32.mrf.mxu0
      %v3204 = vadd.f32 %v2728, %v3203
      %v3205 = vpop.f32.mrf.mxu0
      %3206 = vmatprep.mubr.f32.mxu0 0.0
      %3207 = vmatmul.mubr.f32.gmra.mxu0 %v2863
      %v3208 = vpop.f32.mrf.mxu0
      %v3209 = vadd.f32 %v2728, %v3208
      %v3210 = vpop.f32.mrf.mxu0
      %3211 = vmatprep.mubr.f32.mxu0 0.0
      %3212 = vmatmul.mubr.f32.gmra.mxu0 %v2866
      %v3213 = vpop.f32.mrf.mxu0
      %v3214 = vadd.f32 %v2728, %v3213
      %v3215 = vpop.f32.mrf.mxu0
      %3216 = vmatprep.mubr.f32.mxu0 0.0
      %3217 = vmatmul.mubr.f32.gmra.mxu0 %v2869
      %v3218 = vpop.f32.mrf.mxu0
      %v3219 = vadd.f32 %v2728, %v3218
      %v3220 = vpop.f32.mrf.mxu0
      %3221 = vmatprep.mubr.f32.mxu0 0.0
      %3222 = vmatmul.mubr.f32.gmra.mxu0 %v2872
      %v3223 = vpop.f32.mrf.mxu0
      %v3224 = vadd.f32 %v2728, %v3223
      %v3225 = vpop.f32.mrf.mxu0
      %3226 = vmatprep.mubr.f32.mxu0 0.0
      %3227 = vmatmul.mubr.f32.gmra.mxu0 %v2875
      %v3228 = vpop.f32.mrf.mxu0
      %v3229 = vadd.f32 %v2728, %v3228
      %v3230 = vpop.f32.mrf.mxu0
      %3231 = vmatprep.mubr.f32.mxu0 0.0
      %3232 = vmatmul.mubr.f32.gmra.mxu0 %v2878
      %v3233 = vpop.f32.mrf.mxu0
      %v3234 = vadd.f32 %v2728, %v3233
      %v3235 = vpop.f32.mrf.mxu0
      %3236 = vmatprep.mubr.f32.mxu0 0.0
      %3237 = vmatmul.mubr.f32.gmra.mxu0 %v2881
      %v3238 = vpop.f32.mrf.mxu0
      %v3239 = vadd.f32 %v2728, %v3238
      %v3240 = vpop.f32.mrf.mxu0
      %3241 = vmatprep.mubr.f32.mxu0 0.0
      %3242 = vmatmul.mubr.f32.gmra.mxu0 %v2884
      %v3243 = vpop.f32.mrf.mxu0
      %v3244 = vadd.f32 %v2728, %v3243
      %v3245 = vpop.f32.mrf.mxu0
      %3246 = vmatprep.mubr.f32.mxu0 0.0
      %3247 = vmatmul.mubr.f32.gmra.mxu0 %v2887
      %v3248 = vpop.f32.mrf.mxu0
      %v3249 = vadd.f32 %v2728, %v3248
      %v3250 = vpop.f32.mrf.mxu0
      %3251 = vmatprep.mubr.f32.mxu0 0.0
      %3252 = vmatmul.mubr.f32.gmra.mxu0 %v2890
      %v3253 = vpop.f32.mrf.mxu0
      %v3254 = vadd.f32 %v2728, %v3253
      %v3255 = vpop.f32.mrf.mxu0
      %3256 = vmatprep.mubr.f32.mxu0 0.0
      %3257 = vmatmul.mubr.f32.gmra.mxu0 %v2893
      %v3258 = vpop.f32.mrf.mxu0
      %v3259 = vadd.f32 %v2728, %v3258
      %v3260 = vpop.f32.mrf.mxu0
      %3261 = vmatprep.mubr.f32.mxu0 0.0
      %3262 = vmatmul.mubr.f32.gmra.mxu0 %v2896
      %v3263 = vpop.f32.mrf.mxu0
      %v3264 = vadd.f32 %v2728, %v3263
      %v3265 = vpop.f32.mrf.mxu0
      %3266 = vmatprep.mubr.f32.mxu0 0.0
      %3267 = vmatmul.mubr.f32.gmra.mxu0 %v2899
      %v3268 = vpop.f32.mrf.mxu0
      %v3269 = vadd.f32 %v2728, %v3268
      %v3270 = vpop.f32.mrf.mxu0
      %3271 = vmatprep.mubr.f32.mxu0 0.0
      %3272 = vmatmul.mubr.f32.gmra.mxu0 %v2902
      %v3273 = vpop.f32.mrf.mxu0
      %v3274 = vadd.f32 %v2728, %v3273
      %v3275 = vpop.f32.mrf.mxu0
      %3276 = vmatprep.mubr.f32.mxu0 0.0
      %3277 = vmatmul.mubr.f32.gmra.mxu0 %v2905
      %v3278 = vpop.f32.mrf.mxu0
      %v3279 = vadd.f32 %v2728, %v3278
      %v3280 = vpop.f32.mrf.mxu0
      %3281 = vmatprep.mubr.f32.mxu0 0.0
      %3282 = vmatmul.mubr.f32.gmra.mxu0 %v2908
      %v3283 = vpop.f32.mrf.mxu0
      %v3284 = vadd.f32 %v2728, %v3283
      %v3285 = vpop.f32.mrf.mxu0
      %3286 = vmatprep.mubr.f32.mxu0 0.0
      %3287 = vmatmul.mubr.f32.gmra.mxu0 %v2911
      %v3288 = vpop.f32.mrf.mxu0
      %v3289 = vadd.f32 %v2728, %v3288
      %v3290 = vpop.f32.mrf.mxu0
      %3291 = vmatprep.mubr.f32.mxu0 0.0
      %3292 = vmatmul.mubr.f32.gmra.mxu0 %v2914
      %v3293 = vpop.f32.mrf.mxu0
      %v3294 = vadd.f32 %v2728, %v3293
      %v3295 = vpop.f32.mrf.mxu0
      %3296 = vmatprep.mubr.f32.mxu0 0.0
      %3297 = vmatmul.mubr.f32.gmra.mxu0 %v2917
      %v3298 = vpop.f32.mrf.mxu0
      %v3299 = vadd.f32 %v2728, %v3298
      %v3300 = vpop.f32.mrf.mxu0
      %3301 = vmatprep.mubr.f32.mxu0 0.0
      %3302 = vmatmul.mubr.f32.gmra.mxu0 %v2920
      %v3303 = vpop.f32.mrf.mxu0
      %v3304 = vadd.f32 %v2728, %v3303
      %v3305 = vpop.f32.mrf.mxu0
      %3306 = vdwg.mxu0
      %v3307 = vpack.c.bf16 %v2994, %v2989
      %v3308 = vpack.c.bf16 %v3004, %v2999
      %v3309 = vpack.c.bf16 %v3014, %v3009
      %v3310 = vpack.c.bf16 %v3024, %v3019
      %v3311 = vpack.c.bf16 %v3034, %v3029
      %v3312 = vpack.c.bf16 %v3044, %v3039
      %v3313 = vpack.c.bf16 %v3054, %v3049
      %v3314 = vpack.c.bf16 %v3064, %v3059
      %v3315 = vpack.c.bf16 %v3074, %v3069
      %v3316 = vpack.c.bf16 %v3084, %v3079
      %v3317 = vpack.c.bf16 %v3094, %v3089
      %v3318 = vpack.c.bf16 %v3104, %v3099
      %v3319 = vpack.c.bf16 %v3114, %v3109
      %v3320 = vpack.c.bf16 %v3124, %v3119
      %v3321 = vpack.c.bf16 %v3134, %v3129
      %v3322 = vpack.c.bf16 %v3144, %v3139
      %v3323 = vpack.c.bf16 %v3154, %v3149
      %v3324 = vpack.c.bf16 %v3164, %v3159
      %v3325 = vpack.c.bf16 %v3174, %v3169
      %v3326 = vpack.c.bf16 %v3184, %v3179
      %v3327 = vpack.c.bf16 %v3194, %v3189
      %v3328 = vpack.c.bf16 %v3204, %v3199
      %v3329 = vpack.c.bf16 %v3214, %v3209
      %v3330 = vpack.c.bf16 %v3224, %v3219
      %v3331 = vpack.c.bf16 %v3234, %v3229
      %v3332 = vpack.c.bf16 %v3244, %v3239
      %v3333 = vpack.c.bf16 %v3254, %v3249
      %v3334 = vpack.c.bf16 %v3264, %v3259
      %v3335 = vpack.c.bf16 %v3274, %v3269
      %v3336 = vpack.c.bf16 %v3284, %v3279
      %v3337 = vpack.c.bf16 %v3294, %v3289
      %v3338 = vpack.c.bf16 %v3304, %v3299
      %v3371 = vunpack.c.l.b16 %v3307
      %v3372 = vunpack.c.h.b16 %v3307
      %v3373 = vunpack.c.l.b16 %v3308
      %v3374 = vunpack.c.h.b16 %v3308
      %v3375 = vunpack.c.l.b16 %v3309
      %v3376 = vunpack.c.h.b16 %v3309
      %v3377 = vunpack.c.l.b16 %v3310
      %v3378 = vunpack.c.h.b16 %v3310
      %v3379 = vunpack.c.l.b16 %v3311
      %v3380 = vunpack.c.h.b16 %v3311
      %v3381 = vunpack.c.l.b16 %v3312
      %v3382 = vunpack.c.h.b16 %v3312
      %v3383 = vunpack.c.l.b16 %v3313
      %v3384 = vunpack.c.h.b16 %v3313
      %v3385 = vunpack.c.l.b16 %v3314
      %v3386 = vunpack.c.h.b16 %v3314
      %v3387 = vunpack.c.l.b16 %v3315
      %v3388 = vunpack.c.h.b16 %v3315
      %v3389 = vunpack.c.l.b16 %v3316
      %v3390 = vunpack.c.h.b16 %v3316
      %v3391 = vunpack.c.l.b16 %v3317
      %v3392 = vunpack.c.h.b16 %v3317
      %v3393 = vunpack.c.l.b16 %v3318
      %v3394 = vunpack.c.h.b16 %v3318
      %v3395 = vunpack.c.l.b16 %v3319
      %v3396 = vunpack.c.h.b16 %v3319
      %v3397 = vunpack.c.l.b16 %v3320
      %v3398 = vunpack.c.h.b16 %v3320
      %v3399 = vunpack.c.l.b16 %v3321
      %v3400 = vunpack.c.h.b16 %v3321
      %v3401 = vunpack.c.l.b16 %v3322
      %v3402 = vunpack.c.h.b16 %v3322
      %v3403 = vunpack.c.l.b16 %v3323
      %v3404 = vunpack.c.h.b16 %v3323
      %v3405 = vunpack.c.l.b16 %v3324
      %v3406 = vunpack.c.h.b16 %v3324
      %v3407 = vunpack.c.l.b16 %v3325
      %v3408 = vunpack.c.h.b16 %v3325
      %v3409 = vunpack.c.l.b16 %v3326
      %v3410 = vunpack.c.h.b16 %v3326
      %v3411 = vunpack.c.l.b16 %v3327
      %v3412 = vunpack.c.h.b16 %v3327
      %v3413 = vunpack.c.l.b16 %v3328
      %v3414 = vunpack.c.h.b16 %v3328
      %v3415 = vunpack.c.l.b16 %v3329
      %v3416 = vunpack.c.h.b16 %v3329
      %v3417 = vunpack.c.l.b16 %v3330
      %v3418 = vunpack.c.h.b16 %v3330
      %v3419 = vunpack.c.l.b16 %v3331
      %v3420 = vunpack.c.h.b16 %v3331
      %v3421 = vunpack.c.l.b16 %v3332
      %v3422 = vunpack.c.h.b16 %v3332
      %v3423 = vunpack.c.l.b16 %v3333
      %v3424 = vunpack.c.h.b16 %v3333
      %v3425 = vunpack.c.l.b16 %v3334
      %v3426 = vunpack.c.h.b16 %v3334
      %v3427 = vunpack.c.l.b16 %v3335
      %v3428 = vunpack.c.h.b16 %v3335
      %v3429 = vunpack.c.l.b16 %v3336
      %v3430 = vunpack.c.h.b16 %v3336
      %v3431 = vunpack.c.l.b16 %v3337
      %v3432 = vunpack.c.h.b16 %v3337
      %v3433 = vunpack.c.l.b16 %v3338
      %v3434 = vunpack.c.h.b16 %v3338
      %v3435 = vpack.c.b16 %v3371, %v3371
      %v3436 = vpack.c.b16 %v3372, %v3372
      %v3437 = vpack.c.b16 %v3373, %v3373
      %v3438 = vpack.c.b16 %v3374, %v3374
      %v3439 = vpack.c.b16 %v3375, %v3375
      %v3440 = vpack.c.b16 %v3376, %v3376
      %v3441 = vpack.c.b16 %v3377, %v3377
      %v3442 = vpack.c.b16 %v3378, %v3378
      %v3443 = vpack.c.b16 %v3379, %v3379
      %v3444 = vpack.c.b16 %v3380, %v3380
      %v3445 = vpack.c.b16 %v3381, %v3381
      %v3446 = vpack.c.b16 %v3382, %v3382
      %v3447 = vpack.c.b16 %v3383, %v3383
      %v3448 = vpack.c.b16 %v3384, %v3384
      %v3449 = vpack.c.b16 %v3385, %v3385
      %v3450 = vpack.c.b16 %v3386, %v3386
      %v3451 = vpack.c.b16 %v3387, %v3387
      %v3452 = vpack.c.b16 %v3388, %v3388
      %v3453 = vpack.c.b16 %v3389, %v3389
      %v3454 = vpack.c.b16 %v3390, %v3390
      %v3455 = vpack.c.b16 %v3391, %v3391
      %v3456 = vpack.c.b16 %v3392, %v3392
      %v3457 = vpack.c.b16 %v3393, %v3393
      %v3458 = vpack.c.b16 %v3394, %v3394
      %v3459 = vpack.c.b16 %v3395, %v3395
      %v3460 = vpack.c.b16 %v3396, %v3396
      %v3461 = vpack.c.b16 %v3397, %v3397
      %v3462 = vpack.c.b16 %v3398, %v3398
      %v3463 = vpack.c.b16 %v3399, %v3399
      %v3464 = vpack.c.b16 %v3400, %v3400
      %v3465 = vpack.c.b16 %v3401, %v3401
      %v3466 = vpack.c.b16 %v3402, %v3402
      %v3467 = vpack.c.b16 %v3403, %v3403
      %v3468 = vpack.c.b16 %v3404, %v3404
      %v3469 = vpack.c.b16 %v3405, %v3405
      %v3470 = vpack.c.b16 %v3406, %v3406
      %v3471 = vpack.c.b16 %v3407, %v3407
      %v3472 = vpack.c.b16 %v3408, %v3408
      %v3473 = vpack.c.b16 %v3409, %v3409
      %v3474 = vpack.c.b16 %v3410, %v3410
      %v3475 = vpack.c.b16 %v3411, %v3411
      %v3476 = vpack.c.b16 %v3412, %v3412
      %v3477 = vpack.c.b16 %v3413, %v3413
      %v3478 = vpack.c.b16 %v3414, %v3414
      %v3479 = vpack.c.b16 %v3415, %v3415
      %v3480 = vpack.c.b16 %v3416, %v3416
      %v3481 = vpack.c.b16 %v3417, %v3417
      %v3482 = vpack.c.b16 %v3418, %v3418
      %v3483 = vpack.c.b16 %v3419, %v3419
      %v3484 = vpack.c.b16 %v3420, %v3420
      %v3485 = vpack.c.b16 %v3421, %v3421
      %v3486 = vpack.c.b16 %v3422, %v3422
      %v3487 = vpack.c.b16 %v3423, %v3423
      %v3488 = vpack.c.b16 %v3424, %v3424
      %v3489 = vpack.c.b16 %v3425, %v3425
      %v3490 = vpack.c.b16 %v3426, %v3426
      %v3491 = vpack.c.b16 %v3427, %v3427
      %v3492 = vpack.c.b16 %v3428, %v3428
      %v3493 = vpack.c.b16 %v3429, %v3429
      %v3494 = vpack.c.b16 %v3430, %v3430
      %v3495 = vpack.c.b16 %v3431, %v3431
      %v3496 = vpack.c.b16 %v3432, %v3432
      %v3497 = vpack.c.b16 %v3433, %v3433
      %v3498 = vpack.c.b16 %v3434, %v3434
      %3563 = vst [vmem:[%s260] sm:$0xf] %v3435
      %3564 = vst [vmem:[%s260 + $0x4] sm:$0xf] %v3436
      %3565 = vst [vmem:[%s260 + $0x8] sm:$0xf] %v3437
      %3566 = vst [vmem:[%s260 + $0xc] sm:$0xf] %v3438
      %3567 = vst [vmem:[%s260 + $0x10] sm:$0xf] %v3439
      %3568 = vst [vmem:[%s260 + $0x14] sm:$0xf] %v3440
      %3569 = vst [vmem:[%s260 + $0x18] sm:$0xf] %v3441
      %3570 = vst [vmem:[%s260 + $0x1c] sm:$0xf] %v3442
      %3571 = vst [vmem:[%s260 + $0x20] sm:$0xf] %v3443
      %3572 = vst [vmem:[%s260 + $0x24] sm:$0xf] %v3444
      %3573 = vst [vmem:[%s260 + $0x28] sm:$0xf] %v3445
      %3574 = vst [vmem:[%s260 + $0x2c] sm:$0xf] %v3446
      %3575 = vst [vmem:[%s260 + $0x30] sm:$0xf] %v3447
      %3576 = vst [vmem:[%s260 + $0x34] sm:$0xf] %v3448
      %3577 = vst [vmem:[%s260 + $0x38] sm:$0xf] %v3449
      %3578 = vst [vmem:[%s260 + $0x3c] sm:$0xf] %v3450
      %3579 = vst [vmem:[%s260 + $0x40] sm:$0xf] %v3451
      %3580 = vst [vmem:[%s260 + $0x44] sm:$0xf] %v3452
      %3581 = vst [vmem:[%s260 + $0x48] sm:$0xf] %v3453
      %3582 = vst [vmem:[%s260 + $0x4c] sm:$0xf] %v3454
      %3583 = vst [vmem:[%s260 + $0x50] sm:$0xf] %v3455
      %3584 = vst [vmem:[%s260 + $0x54] sm:$0xf] %v3456
      %3585 = vst [vmem:[%s260 + $0x58] sm:$0xf] %v3457
      %3586 = vst [vmem:[%s260 + $0x5c] sm:$0xf] %v3458
      %3587 = vst [vmem:[%s260 + $0x60] sm:$0xf] %v3459
      %3588 = vst [vmem:[%s260 + $0x64] sm:$0xf] %v3460
      %3589 = vst [vmem:[%s260 + $0x68] sm:$0xf] %v3461
      %3590 = vst [vmem:[%s260 + $0x6c] sm:$0xf] %v3462
      %3591 = vst [vmem:[%s260 + $0x70] sm:$0xf] %v3463
      %3592 = vst [vmem:[%s260 + $0x74] sm:$0xf] %v3464
      %3593 = vst [vmem:[%s260 + $0x78] sm:$0xf] %v3465
      %3594 = vst [vmem:[%s260 + $0x7c] sm:$0xf] %v3466
      %3595 = vst [vmem:[%s260 + $0x80] sm:$0xf] %v3467
      %3596 = vst [vmem:[%s260 + $0x84] sm:$0xf] %v3468
      %3597 = vst [vmem:[%s260 + $0x88] sm:$0xf] %v3469
      %3598 = vst [vmem:[%s260 + $0x8c] sm:$0xf] %v3470
      %3599 = vst [vmem:[%s260 + $0x90] sm:$0xf] %v3471
      %3600 = vst [vmem:[%s260 + $0x94] sm:$0xf] %v3472
      %3601 = vst [vmem:[%s260 + $0x98] sm:$0xf] %v3473
      %3602 = vst [vmem:[%s260 + $0x9c] sm:$0xf] %v3474
      %3603 = vst [vmem:[%s260 + $0xa0] sm:$0xf] %v3475
      %3604 = vst [vmem:[%s260 + $0xa4] sm:$0xf] %v3476
      %3605 = vst [vmem:[%s260 + $0xa8] sm:$0xf] %v3477
      %3606 = vst [vmem:[%s260 + $0xac] sm:$0xf] %v3478
      %3607 = vst [vmem:[%s260 + $0xb0] sm:$0xf] %v3479
      %3608 = vst [vmem:[%s260 + $0xb4] sm:$0xf] %v3480
      %3609 = vst [vmem:[%s260 + $0xb8] sm:$0xf] %v3481
      %3610 = vst [vmem:[%s260 + $0xbc] sm:$0xf] %v3482
      %3611 = vst [vmem:[%s260 + $0xc0] sm:$0xf] %v3483
      %3612 = vst [vmem:[%s260 + $0xc4] sm:$0xf] %v3484
      %3613 = vst [vmem:[%s260 + $0xc8] sm:$0xf] %v3485
      %3614 = vst [vmem:[%s260 + $0xcc] sm:$0xf] %v3486
      %3615 = vst [vmem:[%s260 + $0xd0] sm:$0xf] %v3487
      %3616 = vst [vmem:[%s260 + $0xd4] sm:$0xf] %v3488
      %3617 = vst [vmem:[%s260 + $0xd8] sm:$0xf] %v3489
      %3618 = vst [vmem:[%s260 + $0xdc] sm:$0xf] %v3490
      %3619 = vst [vmem:[%s260 + $0xe0] sm:$0xf] %v3491
      %3620 = vst [vmem:[%s260 + $0xe4] sm:$0xf] %v3492
      %3621 = vst [vmem:[%s260 + $0xe8] sm:$0xf] %v3493
      %3622 = vst [vmem:[%s260 + $0xec] sm:$0xf] %v3494
      %3623 = vst [vmem:[%s260 + $0xf0] sm:$0xf] %v3495
      %3624 = vst [vmem:[%s260 + $0xf4] sm:$0xf] %v3496
      %3625 = vst [vmem:[%s260 + $0xf8] sm:$0xf] %v3497
      %3626 = vst [vmem:[%s260 + $0xfc] sm:$0xf] %v3498
      %vm3627 = vcmask 162816
      %v3628 = vsel %vm3627, %v2989, -inf
      %3629 = vmax.xlane.f32.xlu0 %v3628
      %v3630 = vpop.xlane.xlu0 %3629
      %v3631 = vsel %vm3627, %v2994, -inf
      %3632 = vmax.xlane.f32.xlu0 %v3631
      %v3633 = vpop.xlane.xlu0 %3632
      %v3634 = vsel %vm3627, %v2999, -inf
      %3635 = vmax.xlane.f32.xlu0 %v3634
      %v3636 = vpop.xlane.xlu0 %3635
      %v3637 = vsel %vm3627, %v3004, -inf
      %3638 = vmax.xlane.f32.xlu0 %v3637
      %v3639 = vpop.xlane.xlu0 %3638
      %v3640 = vsel %vm3627, %v3009, -inf
      %3641 = vmax.xlane.f32.xlu0 %v3640
      %v3642 = vpop.xlane.xlu0 %3641
      %v3643 = vsel %vm3627, %v3014, -inf
      %3644 = vmax.xlane.f32.xlu0 %v3643
      %v3645 = vpop.xlane.xlu0 %3644
      %v3646 = vsel %vm3627, %v3019, -inf
      %3647 = vmax.xlane.f32.xlu0 %v3646
      %v3648 = vpop.xlane.xlu0 %3647
      %v3649 = vsel %vm3627, %v3024, -inf
      %3650 = vmax.xlane.f32.xlu0 %v3649
      %v3651 = vpop.xlane.xlu0 %3650
      %v3652 = vsel %vm3627, %v3029, -inf
      %3653 = vmax.xlane.f32.xlu0 %v3652
      %v3654 = vpop.xlane.xlu0 %3653
      %v3655 = vsel %vm3627, %v3034, -inf
      %3656 = vmax.xlane.f32.xlu0 %v3655
      %v3657 = vpop.xlane.xlu0 %3656
      %v3658 = vsel %vm3627, %v3039, -inf
      %3659 = vmax.xlane.f32.xlu0 %v3658
      %v3660 = vpop.xlane.xlu0 %3659
      %v3661 = vsel %vm3627, %v3044, -inf
      %3662 = vmax.xlane.f32.xlu0 %v3661
      %v3663 = vpop.xlane.xlu0 %3662
      %v3664 = vsel %vm3627, %v3049, -inf
      %3665 = vmax.xlane.f32.xlu0 %v3664
      %v3666 = vpop.xlane.xlu0 %3665
      %v3667 = vsel %vm3627, %v3054, -inf
      %3668 = vmax.xlane.f32.xlu0 %v3667
      %v3669 = vpop.xlane.xlu0 %3668
      %v3670 = vsel %vm3627, %v3059, -inf
      %3671 = vmax.xlane.f32.xlu0 %v3670
      %v3672 = vpop.xlane.xlu0 %3671
      %v3673 = vsel %vm3627, %v3064, -inf
      %3674 = vmax.xlane.f32.xlu0 %v3673
      %v3675 = vpop.xlane.xlu0 %3674
      %v3676 = vsel %vm3627, %v3069, -inf
      %3677 = vmax.xlane.f32.xlu0 %v3676
      %v3678 = vpop.xlane.xlu0 %3677
      %v3679 = vsel %vm3627, %v3074, -inf
      %3680 = vmax.xlane.f32.xlu0 %v3679
      %v3681 = vpop.xlane.xlu0 %3680
      %v3682 = vsel %vm3627, %v3079, -inf
      %3683 = vmax.xlane.f32.xlu0 %v3682
      %v3684 = vpop.xlane.xlu0 %3683
      %v3685 = vsel %vm3627, %v3084, -inf
      %3686 = vmax.xlane.f32.xlu0 %v3685
      %v3687 = vpop.xlane.xlu0 %3686
      %v3688 = vsel %vm3627, %v3089, -inf
      %3689 = vmax.xlane.f32.xlu0 %v3688
      %v3690 = vpop.xlane.xlu0 %3689
      %v3691 = vsel %vm3627, %v3094, -inf
      %3692 = vmax.xlane.f32.xlu0 %v3691
      %v3693 = vpop.xlane.xlu0 %3692
      %v3694 = vsel %vm3627, %v3099, -inf
      %3695 = vmax.xlane.f32.xlu0 %v3694
      %v3696 = vpop.xlane.xlu0 %3695
      %v3697 = vsel %vm3627, %v3104, -inf
      %3698 = vmax.xlane.f32.xlu0 %v3697
      %v3699 = vpop.xlane.xlu0 %3698
      %v3700 = vsel %vm3627, %v3109, -inf
      %3701 = vmax.xlane.f32.xlu0 %v3700
      %v3702 = vpop.xlane.xlu0 %3701
      %v3703 = vsel %vm3627, %v3114, -inf
      %3704 = vmax.xlane.f32.xlu0 %v3703
      %v3705 = vpop.xlane.xlu0 %3704
      %v3706 = vsel %vm3627, %v3119, -inf
      %3707 = vmax.xlane.f32.xlu0 %v3706
      %v3708 = vpop.xlane.xlu0 %3707
      %v3709 = vsel %vm3627, %v3124, -inf
      %3710 = vmax.xlane.f32.xlu0 %v3709
      %v3711 = vpop.xlane.xlu0 %3710
      %v3712 = vsel %vm3627, %v3129, -inf
      %3713 = vmax.xlane.f32.xlu0 %v3712
      %v3714 = vpop.xlane.xlu0 %3713
      %v3715 = vsel %vm3627, %v3134, -inf
      %3716 = vmax.xlane.f32.xlu0 %v3715
      %v3717 = vpop.xlane.xlu0 %3716
      %v3718 = vsel %vm3627, %v3139, -inf
      %3719 = vmax.xlane.f32.xlu0 %v3718
      %v3720 = vpop.xlane.xlu0 %3719
      %v3721 = vsel %vm3627, %v3144, -inf
      %3722 = vmax.xlane.f32.xlu0 %v3721
      %v3723 = vpop.xlane.xlu0 %3722
      %v3724 = vsel %vm3627, %v3149, -inf
      %3725 = vmax.xlane.f32.xlu0 %v3724
      %v3726 = vpop.xlane.xlu0 %3725
      %v3727 = vsel %vm3627, %v3154, -inf
      %3728 = vmax.xlane.f32.xlu0 %v3727
      %v3729 = vpop.xlane.xlu0 %3728
      %v3730 = vsel %vm3627, %v3159, -inf
      %3731 = vmax.xlane.f32.xlu0 %v3730
      %v3732 = vpop.xlane.xlu0 %3731
      %v3733 = vsel %vm3627, %v3164, -inf
      %3734 = vmax.xlane.f32.xlu0 %v3733
      %v3735 = vpop.xlane.xlu0 %3734
      %v3736 = vsel %vm3627, %v3169, -inf
      %3737 = vmax.xlane.f32.xlu0 %v3736
      %v3738 = vpop.xlane.xlu0 %3737
      %v3739 = vsel %vm3627, %v3174, -inf
      %3740 = vmax.xlane.f32.xlu0 %v3739
      %v3741 = vpop.xlane.xlu0 %3740
      %v3742 = vsel %vm3627, %v3179, -inf
      %3743 = vmax.xlane.f32.xlu0 %v3742
      %v3744 = vpop.xlane.xlu0 %3743
      %v3745 = vsel %vm3627, %v3184, -inf
      %3746 = vmax.xlane.f32.xlu0 %v3745
      %v3747 = vpop.xlane.xlu0 %3746
      %v3748 = vsel %vm3627, %v3189, -inf
      %3749 = vmax.xlane.f32.xlu0 %v3748
      %v3750 = vpop.xlane.xlu0 %3749
      %v3751 = vsel %vm3627, %v3194, -inf
      %3752 = vmax.xlane.f32.xlu0 %v3751
      %v3753 = vpop.xlane.xlu0 %3752
      %v3754 = vsel %vm3627, %v3199, -inf
      %3755 = vmax.xlane.f32.xlu0 %v3754
      %v3756 = vpop.xlane.xlu0 %3755
      %v3757 = vsel %vm3627, %v3204, -inf
      %3758 = vmax.xlane.f32.xlu0 %v3757
      %v3759 = vpop.xlane.xlu0 %3758
      %v3760 = vsel %vm3627, %v3209, -inf
      %3761 = vmax.xlane.f32.xlu0 %v3760
      %v3762 = vpop.xlane.xlu0 %3761
      %v3763 = vsel %vm3627, %v3214, -inf
      %3764 = vmax.xlane.f32.xlu0 %v3763
      %v3765 = vpop.xlane.xlu0 %3764
      %v3766 = vsel %vm3627, %v3219, -inf
      %3767 = vmax.xlane.f32.xlu0 %v3766
      %v3768 = vpop.xlane.xlu0 %3767
      %v3769 = vsel %vm3627, %v3224, -inf
      %3770 = vmax.xlane.f32.xlu0 %v3769
      %v3771 = vpop.xlane.xlu0 %3770
      %v3772 = vsel %vm3627, %v3229, -inf
      %3773 = vmax.xlane.f32.xlu0 %v3772
      %v3774 = vpop.xlane.xlu0 %3773
      %v3775 = vsel %vm3627, %v3234, -inf
      %3776 = vmax.xlane.f32.xlu0 %v3775
      %v3777 = vpop.xlane.xlu0 %3776
      %v3778 = vsel %vm3627, %v3239, -inf
      %3779 = vmax.xlane.f32.xlu0 %v3778
      %v3780 = vpop.xlane.xlu0 %3779
      %v3781 = vsel %vm3627, %v3244, -inf
      %3782 = vmax.xlane.f32.xlu0 %v3781
      %v3783 = vpop.xlane.xlu0 %3782
      %v3784 = vsel %vm3627, %v3249, -inf
      %3785 = vmax.xlane.f32.xlu0 %v3784
      %v3786 = vpop.xlane.xlu0 %3785
      %v3787 = vsel %vm3627, %v3254, -inf
      %3788 = vmax.xlane.f32.xlu0 %v3787
      %v3789 = vpop.xlane.xlu0 %3788
      %v3790 = vsel %vm3627, %v3259, -inf
      %3791 = vmax.xlane.f32.xlu0 %v3790
      %v3792 = vpop.xlane.xlu0 %3791
      %v3793 = vsel %vm3627, %v3264, -inf
      %3794 = vmax.xlane.f32.xlu0 %v3793
      %v3795 = vpop.xlane.xlu0 %3794
      %v3796 = vsel %vm3627, %v3269, -inf
      %3797 = vmax.xlane.f32.xlu0 %v3796
      %v3798 = vpop.xlane.xlu0 %3797
      %v3799 = vsel %vm3627, %v3274, -inf
      %3800 = vmax.xlane.f32.xlu0 %v3799
      %v3801 = vpop.xlane.xlu0 %3800
      %v3802 = vsel %vm3627, %v3279, -inf
      %3803 = vmax.xlane.f32.xlu0 %v3802
      %v3804 = vpop.xlane.xlu0 %3803
      %v3805 = vsel %vm3627, %v3284, -inf
      %3806 = vmax.xlane.f32.xlu0 %v3805
      %v3807 = vpop.xlane.xlu0 %3806
      %v3808 = vsel %vm3627, %v3289, -inf
      %3809 = vmax.xlane.f32.xlu0 %v3808
      %v3810 = vpop.xlane.xlu0 %3809
      %v3811 = vsel %vm3627, %v3294, -inf
      %3812 = vmax.xlane.f32.xlu0 %v3811
      %v3813 = vpop.xlane.xlu0 %3812
      %v3814 = vsel %vm3627, %v3299, -inf
      %3815 = vmax.xlane.f32.xlu0 %v3814
      %v3816 = vpop.xlane.xlu0 %3815
      %v3817 = vsel %vm3627, %v3304, -inf
      %3818 = vmax.xlane.f32.xlu0 %v3817
      %v3819 = vpop.xlane.xlu0 %3818
      %v3820 = vsub.f32 %v2989, %v3630
      %v3821 = vsub.f32 %v2994, %v3633
      %v3822 = vsub.f32 %v2999, %v3636
      %v3823 = vsub.f32 %v3004, %v3639
      %v3824 = vsub.f32 %v3009, %v3642
      %v3825 = vsub.f32 %v3014, %v3645
      %v3826 = vsub.f32 %v3019, %v3648
      %v3827 = vsub.f32 %v3024, %v3651
      %v3828 = vsub.f32 %v3029, %v3654
      %v3829 = vsub.f32 %v3034, %v3657
      %v3830 = vsub.f32 %v3039, %v3660
      %v3831 = vsub.f32 %v3044, %v3663
      %v3832 = vsub.f32 %v3049, %v3666
      %v3833 = vsub.f32 %v3054, %v3669
      %v3834 = vsub.f32 %v3059, %v3672
      %v3835 = vsub.f32 %v3064, %v3675
      %v3836 = vsub.f32 %v3069, %v3678
      %v3837 = vsub.f32 %v3074, %v3681
      %v3838 = vsub.f32 %v3079, %v3684
      %v3839 = vsub.f32 %v3084, %v3687
      %v3840 = vsub.f32 %v3089, %v3690
      %v3841 = vsub.f32 %v3094, %v3693
      %v3842 = vsub.f32 %v3099, %v3696
      %v3843 = vsub.f32 %v3104, %v3699
      %v3844 = vsub.f32 %v3109, %v3702
      %v3845 = vsub.f32 %v3114, %v3705
      %v3846 = vsub.f32 %v3119, %v3708
      %v3847 = vsub.f32 %v3124, %v3711
      %v3848 = vsub.f32 %v3129, %v3714
      %v3849 = vsub.f32 %v3134, %v3717
      %v3850 = vsub.f32 %v3139, %v3720
      %v3851 = vsub.f32 %v3144, %v3723
      %v3852 = vsub.f32 %v3149, %v3726
      %v3853 = vsub.f32 %v3154, %v3729
      %v3854 = vsub.f32 %v3159, %v3732
      %v3855 = vsub.f32 %v3164, %v3735
      %v3856 = vsub.f32 %v3169, %v3738
      %v3857 = vsub.f32 %v3174, %v3741
      %v3858 = vsub.f32 %v3179, %v3744
      %v3859 = vsub.f32 %v3184, %v3747
      %v3860 = vsub.f32 %v3189, %v3750
      %v3861 = vsub.f32 %v3194, %v3753
      %v3862 = vsub.f32 %v3199, %v3756
      %v3863 = vsub.f32 %v3204, %v3759
      %v3864 = vsub.f32 %v3209, %v3762
      %v3865 = vsub.f32 %v3214, %v3765
      %v3866 = vsub.f32 %v3219, %v3768
      %v3867 = vsub.f32 %v3224, %v3771
      %v3868 = vsub.f32 %v3229, %v3774
      %v3869 = vsub.f32 %v3234, %v3777
      %v3870 = vsub.f32 %v3239, %v3780
      %v3871 = vsub.f32 %v3244, %v3783
      %v3872 = vsub.f32 %v3249, %v3786
      %v3873 = vsub.f32 %v3254, %v3789
      %v3874 = vsub.f32 %v3259, %v3792
      %v3875 = vsub.f32 %v3264, %v3795
      %v3876 = vsub.f32 %v3269, %v3798
      %v3877 = vsub.f32 %v3274, %v3801
      %v3878 = vsub.f32 %v3279, %v3804
      %v3879 = vsub.f32 %v3284, %v3807
      %v3880 = vsub.f32 %v3289, %v3810
      %v3881 = vsub.f32 %v3294, %v3813
      %v3882 = vsub.f32 %v3299, %v3816
      %v3883 = vsub.f32 %v3304, %v3819
      %v3884 = vmul.f32 %v3820, 1.442695
      %v3885 = vpow.pop %v3884
      %v3886 = vmul.f32 %v3821, 1.442695
      %v3887 = vpow.pop %v3886
      %v3888 = vmul.f32 %v3822, 1.442695
      %v3889 = vpow.pop %v3888
      %v3890 = vmul.f32 %v3823, 1.442695
      %v3891 = vpow.pop %v3890
      %v3892 = vmul.f32 %v3824, 1.442695
      %v3893 = vpow.pop %v3892
      %v3894 = vmul.f32 %v3825, 1.442695
      %v3895 = vpow.pop %v3894
      %v3896 = vmul.f32 %v3826, 1.442695
      %v3897 = vpow.pop %v3896
      %v3898 = vmul.f32 %v3827, 1.442695
      %v3899 = vpow.pop %v3898
      %v3900 = vmul.f32 %v3828, 1.442695
      %v3901 = vpow.pop %v3900
      %v3902 = vmul.f32 %v3829, 1.442695
      %v3903 = vpow.pop %v3902
      %v3904 = vmul.f32 %v3830, 1.442695
      %v3905 = vpow.pop %v3904
      %v3906 = vmul.f32 %v3831, 1.442695
      %v3907 = vpow.pop %v3906
      %v3908 = vmul.f32 %v3832, 1.442695
      %v3909 = vpow.pop %v3908
      %v3910 = vmul.f32 %v3833, 1.442695
      %v3911 = vpow.pop %v3910
      %v3912 = vmul.f32 %v3834, 1.442695
      %v3913 = vpow.pop %v3912
      %v3914 = vmul.f32 %v3835, 1.442695
      %v3915 = vpow.pop %v3914
      %v3916 = vmul.f32 %v3836, 1.442695
      %v3917 = vpow.pop %v3916
      %v3918 = vmul.f32 %v3837, 1.442695
      %v3919 = vpow.pop %v3918
      %v3920 = vmul.f32 %v3838, 1.442695
      %v3921 = vpow.pop %v3920
      %v3922 = vmul.f32 %v3839, 1.442695
      %v3923 = vpow.pop %v3922
      %v3924 = vmul.f32 %v3840, 1.442695
      %v3925 = vpow.pop %v3924
      %v3926 = vmul.f32 %v3841, 1.442695
      %v3927 = vpow.pop %v3926
      %v3928 = vmul.f32 %v3842, 1.442695
      %v3929 = vpow.pop %v3928
      %v3930 = vmul.f32 %v3843, 1.442695
      %v3931 = vpow.pop %v3930
      %v3932 = vmul.f32 %v3844, 1.442695
      %v3933 = vpow.pop %v3932
      %v3934 = vmul.f32 %v3845, 1.442695
      %v3935 = vpow.pop %v3934
      %v3936 = vmul.f32 %v3846, 1.442695
      %v3937 = vpow.pop %v3936
      %v3938 = vmul.f32 %v3847, 1.442695
      %v3939 = vpow.pop %v3938
      %v3940 = vmul.f32 %v3848, 1.442695
      %v3941 = vpow.pop %v3940
      %v3942 = vmul.f32 %v3849, 1.442695
      %v3943 = vpow.pop %v3942
      %v3944 = vmul.f32 %v3850, 1.442695
      %v3945 = vpow.pop %v3944
      %v3946 = vmul.f32 %v3851, 1.442695
      %v3947 = vpow.pop %v3946
      %v3948 = vmul.f32 %v3852, 1.442695
      %v3949 = vpow.pop %v3948
      %v3950 = vmul.f32 %v3853, 1.442695
      %v3951 = vpow.pop %v3950
      %v3952 = vmul.f32 %v3854, 1.442695
      %v3953 = vpow.pop %v3952
      %v3954 = vmul.f32 %v3855, 1.442695
      %v3955 = vpow.pop %v3954
      %v3956 = vmul.f32 %v3856, 1.442695
      %v3957 = vpow.pop %v3956
      %v3958 = vmul.f32 %v3857, 1.442695
      %v3959 = vpow.pop %v3958
      %v3960 = vmul.f32 %v3858, 1.442695
      %v3961 = vpow.pop %v3960
      %v3962 = vmul.f32 %v3859, 1.442695
      %v3963 = vpow.pop %v3962
      %v3964 = vmul.f32 %v3860, 1.442695
      %v3965 = vpow.pop %v3964
      %v3966 = vmul.f32 %v3861, 1.442695
      %v3967 = vpow.pop %v3966
      %v3968 = vmul.f32 %v3862, 1.442695
      %v3969 = vpow.pop %v3968
      %v3970 = vmul.f32 %v3863, 1.442695
      %v3971 = vpow.pop %v3970
      %v3972 = vmul.f32 %v3864, 1.442695
      %v3973 = vpow.pop %v3972
      %v3974 = vmul.f32 %v3865, 1.442695
      %v3975 = vpow.pop %v3974
      %v3976 = vmul.f32 %v3866, 1.442695
      %v3977 = vpow.pop %v3976
      %v3978 = vmul.f32 %v3867, 1.442695
      %v3979 = vpow.pop %v3978
      %v3980 = vmul.f32 %v3868, 1.442695
      %v3981 = vpow.pop %v3980
      %v3982 = vmul.f32 %v3869, 1.442695
      %v3983 = vpow.pop %v3982
      %v3984 = vmul.f32 %v3870, 1.442695
      %v3985 = vpow.pop %v3984
      %v3986 = vmul.f32 %v3871, 1.442695
      %v3987 = vpow.pop %v3986
      %v3988 = vmul.f32 %v3872, 1.442695
      %v3989 = vpow.pop %v3988
      %v3990 = vmul.f32 %v3873, 1.442695
      %v3991 = vpow.pop %v3990
      %v3992 = vmul.f32 %v3874, 1.442695
      %v3993 = vpow.pop %v3992
      %v3994 = vmul.f32 %v3875, 1.442695
      %v3995 = vpow.pop %v3994
      %v3996 = vmul.f32 %v3876, 1.442695
      %v3997 = vpow.pop %v3996
      %v3998 = vmul.f32 %v3877, 1.442695
      %v3999 = vpow.pop %v3998
      %v4000 = vmul.f32 %v3878, 1.442695
      %v4001 = vpow.pop %v4000
      %v4002 = vmul.f32 %v3879, 1.442695
      %v4003 = vpow.pop %v4002
      %v4004 = vmul.f32 %v3880, 1.442695
      %v4005 = vpow.pop %v4004
      %v4006 = vmul.f32 %v3881, 1.442695
      %v4007 = vpow.pop %v4006
      %v4008 = vmul.f32 %v3882, 1.442695
      %v4009 = vpow.pop %v4008
      %v4010 = vmul.f32 %v3883, 1.442695
      %v4011 = vpow.pop %v4010
      %v4012 = vsel %vm3627, %v3885, 0.0
      %4013 = vadd.xlane.f32.xlu0 %v4012
      %v4014 = vpop.xlane.xlu0 %4013
      %v4015 = vsel %vm3627, %v3887, 0.0
      %4016 = vadd.xlane.f32.xlu0 %v4015
      %v4017 = vpop.xlane.xlu0 %4016
      %v4018 = vsel %vm3627, %v3889, 0.0
      %4019 = vadd.xlane.f32.xlu0 %v4018
      %v4020 = vpop.xlane.xlu0 %4019
      %v4021 = vsel %vm3627, %v3891, 0.0
      %4022 = vadd.xlane.f32.xlu0 %v4021
      %v4023 = vpop.xlane.xlu0 %4022
      %v4024 = vsel %vm3627, %v3893, 0.0
      %4025 = vadd.xlane.f32.xlu0 %v4024
      %v4026 = vpop.xlane.xlu0 %4025
      %v4027 = vsel %vm3627, %v3895, 0.0
      %4028 = vadd.xlane.f32.xlu0 %v4027
      %v4029 = vpop.xlane.xlu0 %4028
      %v4030 = vsel %vm3627, %v3897, 0.0
      %4031 = vadd.xlane.f32.xlu0 %v4030
      %v4032 = vpop.xlane.xlu0 %4031
      %v4033 = vsel %vm3627, %v3899, 0.0
      %4034 = vadd.xlane.f32.xlu0 %v4033
      %v4035 = vpop.xlane.xlu0 %4034
      %v4036 = vsel %vm3627, %v3901, 0.0
      %4037 = vadd.xlane.f32.xlu0 %v4036
      %v4038 = vpop.xlane.xlu0 %4037
      %v4039 = vsel %vm3627, %v3903, 0.0
      %4040 = vadd.xlane.f32.xlu0 %v4039
      %v4041 = vpop.xlane.xlu0 %4040
      %v4042 = vsel %vm3627, %v3905, 0.0
      %4043 = vadd.xlane.f32.xlu0 %v4042
      %v4044 = vpop.xlane.xlu0 %4043
      %v4045 = vsel %vm3627, %v3907, 0.0
      %4046 = vadd.xlane.f32.xlu0 %v4045
      %v4047 = vpop.xlane.xlu0 %4046
      %v4048 = vsel %vm3627, %v3909, 0.0
      %4049 = vadd.xlane.f32.xlu0 %v4048
      %v4050 = vpop.xlane.xlu0 %4049
      %v4051 = vsel %vm3627, %v3911, 0.0
      %4052 = vadd.xlane.f32.xlu0 %v4051
      %v4053 = vpop.xlane.xlu0 %4052
      %v4054 = vsel %vm3627, %v3913, 0.0
      %4055 = vadd.xlane.f32.xlu0 %v4054
      %v4056 = vpop.xlane.xlu0 %4055
      %v4057 = vsel %vm3627, %v3915, 0.0
      %4058 = vadd.xlane.f32.xlu0 %v4057
      %v4059 = vpop.xlane.xlu0 %4058
      %v4060 = vsel %vm3627, %v3917, 0.0
      %4061 = vadd.xlane.f32.xlu0 %v4060
      %v4062 = vpop.xlane.xlu0 %4061
      %v4063 = vsel %vm3627, %v3919, 0.0
      %4064 = vadd.xlane.f32.xlu0 %v4063
      %v4065 = vpop.xlane.xlu0 %4064
      %v4066 = vsel %vm3627, %v3921, 0.0
      %4067 = vadd.xlane.f32.xlu0 %v4066
      %v4068 = vpop.xlane.xlu0 %4067
      %v4069 = vsel %vm3627, %v3923, 0.0
      %4070 = vadd.xlane.f32.xlu0 %v4069
      %v4071 = vpop.xlane.xlu0 %4070
      %v4072 = vsel %vm3627, %v3925, 0.0
      %4073 = vadd.xlane.f32.xlu0 %v4072
      %v4074 = vpop.xlane.xlu0 %4073
      %v4075 = vsel %vm3627, %v3927, 0.0
      %4076 = vadd.xlane.f32.xlu0 %v4075
      %v4077 = vpop.xlane.xlu0 %4076
      %v4078 = vsel %vm3627, %v3929, 0.0
      %4079 = vadd.xlane.f32.xlu0 %v4078
      %v4080 = vpop.xlane.xlu0 %4079
      %v4081 = vsel %vm3627, %v3931, 0.0
      %4082 = vadd.xlane.f32.xlu0 %v4081
      %v4083 = vpop.xlane.xlu0 %4082
      %v4084 = vsel %vm3627, %v3933, 0.0
      %4085 = vadd.xlane.f32.xlu0 %v4084
      %v4086 = vpop.xlane.xlu0 %4085
      %v4087 = vsel %vm3627, %v3935, 0.0
      %4088 = vadd.xlane.f32.xlu0 %v4087
      %v4089 = vpop.xlane.xlu0 %4088
      %v4090 = vsel %vm3627, %v3937, 0.0
      %4091 = vadd.xlane.f32.xlu0 %v4090
      %v4092 = vpop.xlane.xlu0 %4091
      %v4093 = vsel %vm3627, %v3939, 0.0
      %4094 = vadd.xlane.f32.xlu0 %v4093
      %v4095 = vpop.xlane.xlu0 %4094
      %v4096 = vsel %vm3627, %v3941, 0.0
      %4097 = vadd.xlane.f32.xlu0 %v4096
      %v4098 = vpop.xlane.xlu0 %4097
      %v4099 = vsel %vm3627, %v3943, 0.0
      %4100 = vadd.xlane.f32.xlu0 %v4099
      %v4101 = vpop.xlane.xlu0 %4100
      %v4102 = vsel %vm3627, %v3945, 0.0
      %4103 = vadd.xlane.f32.xlu0 %v4102
      %v4104 = vpop.xlane.xlu0 %4103
      %v4105 = vsel %vm3627, %v3947, 0.0
      %4106 = vadd.xlane.f32.xlu0 %v4105
      %v4107 = vpop.xlane.xlu0 %4106
      %v4108 = vsel %vm3627, %v3949, 0.0
      %4109 = vadd.xlane.f32.xlu0 %v4108
      %v4110 = vpop.xlane.xlu0 %4109
      %v4111 = vsel %vm3627, %v3951, 0.0
      %4112 = vadd.xlane.f32.xlu0 %v4111
      %v4113 = vpop.xlane.xlu0 %4112
      %v4114 = vsel %vm3627, %v3953, 0.0
      %4115 = vadd.xlane.f32.xlu0 %v4114
      %v4116 = vpop.xlane.xlu0 %4115
      %v4117 = vsel %vm3627, %v3955, 0.0
      %4118 = vadd.xlane.f32.xlu0 %v4117
      %v4119 = vpop.xlane.xlu0 %4118
      %v4120 = vsel %vm3627, %v3957, 0.0
      %4121 = vadd.xlane.f32.xlu0 %v4120
      %v4122 = vpop.xlane.xlu0 %4121
      %v4123 = vsel %vm3627, %v3959, 0.0
      %4124 = vadd.xlane.f32.xlu0 %v4123
      %v4125 = vpop.xlane.xlu0 %4124
      %v4126 = vsel %vm3627, %v3961, 0.0
      %4127 = vadd.xlane.f32.xlu0 %v4126
      %v4128 = vpop.xlane.xlu0 %4127
      %v4129 = vsel %vm3627, %v3963, 0.0
      %4130 = vadd.xlane.f32.xlu0 %v4129
      %v4131 = vpop.xlane.xlu0 %4130
      %v4132 = vsel %vm3627, %v3965, 0.0
      %4133 = vadd.xlane.f32.xlu0 %v4132
      %v4134 = vpop.xlane.xlu0 %4133
      %v4135 = vsel %vm3627, %v3967, 0.0
      %4136 = vadd.xlane.f32.xlu0 %v4135
      %v4137 = vpop.xlane.xlu0 %4136
      %v4138 = vsel %vm3627, %v3969, 0.0
      %4139 = vadd.xlane.f32.xlu0 %v4138
      %v4140 = vpop.xlane.xlu0 %4139
      %v4141 = vsel %vm3627, %v3971, 0.0
      %4142 = vadd.xlane.f32.xlu0 %v4141
      %v4143 = vpop.xlane.xlu0 %4142
      %v4144 = vsel %vm3627, %v3973, 0.0
      %4145 = vadd.xlane.f32.xlu0 %v4144
      %v4146 = vpop.xlane.xlu0 %4145
      %v4147 = vsel %vm3627, %v3975, 0.0
      %4148 = vadd.xlane.f32.xlu0 %v4147
      %v4149 = vpop.xlane.xlu0 %4148
      %v4150 = vsel %vm3627, %v3977, 0.0
      %4151 = vadd.xlane.f32.xlu0 %v4150
      %v4152 = vpop.xlane.xlu0 %4151
      %v4153 = vsel %vm3627, %v3979, 0.0
      %4154 = vadd.xlane.f32.xlu0 %v4153
      %v4155 = vpop.xlane.xlu0 %4154
      %v4156 = vsel %vm3627, %v3981, 0.0
      %4157 = vadd.xlane.f32.xlu0 %v4156
      %v4158 = vpop.xlane.xlu0 %4157
      %v4159 = vsel %vm3627, %v3983, 0.0
      %4160 = vadd.xlane.f32.xlu0 %v4159
      %v4161 = vpop.xlane.xlu0 %4160
      %v4162 = vsel %vm3627, %v3985, 0.0
      %4163 = vadd.xlane.f32.xlu0 %v4162
      %v4164 = vpop.xlane.xlu0 %4163
      %v4165 = vsel %vm3627, %v3987, 0.0
      %4166 = vadd.xlane.f32.xlu0 %v4165
      %v4167 = vpop.xlane.xlu0 %4166
      %v4168 = vsel %vm3627, %v3989, 0.0
      %4169 = vadd.xlane.f32.xlu0 %v4168
      %v4170 = vpop.xlane.xlu0 %4169
      %v4171 = vsel %vm3627, %v3991, 0.0
      %4172 = vadd.xlane.f32.xlu0 %v4171
      %v4173 = vpop.xlane.xlu0 %4172
      %v4174 = vsel %vm3627, %v3993, 0.0
      %4175 = vadd.xlane.f32.xlu0 %v4174
      %v4176 = vpop.xlane.xlu0 %4175
      %v4177 = vsel %vm3627, %v3995, 0.0
      %4178 = vadd.xlane.f32.xlu0 %v4177
      %v4179 = vpop.xlane.xlu0 %4178
      %v4180 = vsel %vm3627, %v3997, 0.0
      %4181 = vadd.xlane.f32.xlu0 %v4180
      %v4182 = vpop.xlane.xlu0 %4181
      %v4183 = vsel %vm3627, %v3999, 0.0
      %4184 = vadd.xlane.f32.xlu0 %v4183
      %v4185 = vpop.xlane.xlu0 %4184
      %v4186 = vsel %vm3627, %v4001, 0.0
      %4187 = vadd.xlane.f32.xlu0 %v4186
      %v4188 = vpop.xlane.xlu0 %4187
      %v4189 = vsel %vm3627, %v4003, 0.0
      %4190 = vadd.xlane.f32.xlu0 %v4189
      %v4191 = vpop.xlane.xlu0 %4190
      %v4192 = vsel %vm3627, %v4005, 0.0
      %4193 = vadd.xlane.f32.xlu0 %v4192
      %v4194 = vpop.xlane.xlu0 %4193
      %v4195 = vsel %vm3627, %v4007, 0.0
      %4196 = vadd.xlane.f32.xlu0 %v4195
      %v4197 = vpop.xlane.xlu0 %4196
      %v4198 = vsel %vm3627, %v4009, 0.0
      %4199 = vadd.xlane.f32.xlu0 %v4198
      %v4200 = vpop.xlane.xlu0 %4199
      %v4201 = vsel %vm3627, %v4011, 0.0
      %4202 = vadd.xlane.f32.xlu0 %v4201
      %v4203 = vpop.xlane.xlu0 %4202
      %v4204 = vlog2.pop %v4014
      %v4205 = vmul.f32 %v4204, 0.6931472
      %v4206 = vlog2.pop %v4017
      %v4207 = vmul.f32 %v4206, 0.6931472
      %v4208 = vlog2.pop %v4020
      %v4209 = vmul.f32 %v4208, 0.6931472
      %v4210 = vlog2.pop %v4023
      %v4211 = vmul.f32 %v4210, 0.6931472
      %v4212 = vlog2.pop %v4026
      %v4213 = vmul.f32 %v4212, 0.6931472
      %v4214 = vlog2.pop %v4029
      %v4215 = vmul.f32 %v4214, 0.6931472
      %v4216 = vlog2.pop %v4032
      %v4217 = vmul.f32 %v4216, 0.6931472
      %v4218 = vlog2.pop %v4035
      %v4219 = vmul.f32 %v4218, 0.6931472
      %v4220 = vlog2.pop %v4038
      %v4221 = vmul.f32 %v4220, 0.6931472
      %v4222 = vlog2.pop %v4041
      %v4223 = vmul.f32 %v4222, 0.6931472
      %v4224 = vlog2.pop %v4044
      %v4225 = vmul.f32 %v4224, 0.6931472
      %v4226 = vlog2.pop %v4047
      %v4227 = vmul.f32 %v4226, 0.6931472
      %v4228 = vlog2.pop %v4050
      %v4229 = vmul.f32 %v4228, 0.6931472
      %v4230 = vlog2.pop %v4053
      %v4231 = vmul.f32 %v4230, 0.6931472
      %v4232 = vlog2.pop %v4056
      %v4233 = vmul.f32 %v4232, 0.6931472
      %v4234 = vlog2.pop %v4059
      %v4235 = vmul.f32 %v4234, 0.6931472
      %v4236 = vlog2.pop %v4062
      %v4237 = vmul.f32 %v4236, 0.6931472
      %v4238 = vlog2.pop %v4065
      %v4239 = vmul.f32 %v4238, 0.6931472
      %v4240 = vlog2.pop %v4068
      %v4241 = vmul.f32 %v4240, 0.6931472
      %v4242 = vlog2.pop %v4071
      %v4243 = vmul.f32 %v4242, 0.6931472
      %v4244 = vlog2.pop %v4074
      %v4245 = vmul.f32 %v4244, 0.6931472
      %v4246 = vlog2.pop %v4077
      %v4247 = vmul.f32 %v4246, 0.6931472
      %v4248 = vlog2.pop %v4080
      %v4249 = vmul.f32 %v4248, 0.6931472
      %v4250 = vlog2.pop %v4083
      %v4251 = vmul.f32 %v4250, 0.6931472
      %v4252 = vlog2.pop %v4086
      %v4253 = vmul.f32 %v4252, 0.6931472
      %v4254 = vlog2.pop %v4089
      %v4255 = vmul.f32 %v4254, 0.6931472
      %v4256 = vlog2.pop %v4092
      %v4257 = vmul.f32 %v4256, 0.6931472
      %v4258 = vlog2.pop %v4095
      %v4259 = vmul.f32 %v4258, 0.6931472
      %v4260 = vlog2.pop %v4098
      %v4261 = vmul.f32 %v4260, 0.6931472
      %v4262 = vlog2.pop %v4101
      %v4263 = vmul.f32 %v4262, 0.6931472
      %v4264 = vlog2.pop %v4104
      %v4265 = vmul.f32 %v4264, 0.6931472
      %v4266 = vlog2.pop %v4107
      %v4267 = vmul.f32 %v4266, 0.6931472
      %v4268 = vlog2.pop %v4110
      %v4269 = vmul.f32 %v4268, 0.6931472
      %v4270 = vlog2.pop %v4113
      %v4271 = vmul.f32 %v4270, 0.6931472
      %v4272 = vlog2.pop %v4116
      %v4273 = vmul.f32 %v4272, 0.6931472
      %v4274 = vlog2.pop %v4119
      %v4275 = vmul.f32 %v4274, 0.6931472
      %v4276 = vlog2.pop %v4122
      %v4277 = vmul.f32 %v4276, 0.6931472
      %v4278 = vlog2.pop %v4125
      %v4279 = vmul.f32 %v4278, 0.6931472
      %v4280 = vlog2.pop %v4128
      %v4281 = vmul.f32 %v4280, 0.6931472
      %v4282 = vlog2.pop %v4131
      %v4283 = vmul.f32 %v4282, 0.6931472
      %v4284 = vlog2.pop %v4134
      %v4285 = vmul.f32 %v4284, 0.6931472
      %v4286 = vlog2.pop %v4137
      %v4287 = vmul.f32 %v4286, 0.6931472
      %v4288 = vlog2.pop %v4140
      %v4289 = vmul.f32 %v4288, 0.6931472
      %v4290 = vlog2.pop %v4143
      %v4291 = vmul.f32 %v4290, 0.6931472
      %v4292 = vlog2.pop %v4146
      %v4293 = vmul.f32 %v4292, 0.6931472
      %v4294 = vlog2.pop %v4149
      %v4295 = vmul.f32 %v4294, 0.6931472
      %v4296 = vlog2.pop %v4152
      %v4297 = vmul.f32 %v4296, 0.6931472
      %v4298 = vlog2.pop %v4155
      %v4299 = vmul.f32 %v4298, 0.6931472
      %v4300 = vlog2.pop %v4158
      %v4301 = vmul.f32 %v4300, 0.6931472
      %v4302 = vlog2.pop %v4161
      %v4303 = vmul.f32 %v4302, 0.6931472
      %v4304 = vlog2.pop %v4164
      %v4305 = vmul.f32 %v4304, 0.6931472
      %v4306 = vlog2.pop %v4167
      %v4307 = vmul.f32 %v4306, 0.6931472
      %v4308 = vlog2.pop %v4170
      %v4309 = vmul.f32 %v4308, 0.6931472
      %v4310 = vlog2.pop %v4173
      %v4311 = vmul.f32 %v4310, 0.6931472
      %v4312 = vlog2.pop %v4176
      %v4313 = vmul.f32 %v4312, 0.6931472
      %v4314 = vlog2.pop %v4179
      %v4315 = vmul.f32 %v4314, 0.6931472
      %v4316 = vlog2.pop %v4182
      %v4317 = vmul.f32 %v4316, 0.6931472
      %v4318 = vlog2.pop %v4185
      %v4319 = vmul.f32 %v4318, 0.6931472
      %v4320 = vlog2.pop %v4188
      %v4321 = vmul.f32 %v4320, 0.6931472
      %v4322 = vlog2.pop %v4191
      %v4323 = vmul.f32 %v4322, 0.6931472
      %v4324 = vlog2.pop %v4194
      %v4325 = vmul.f32 %v4324, 0.6931472
      %v4326 = vlog2.pop %v4197
      %v4327 = vmul.f32 %v4326, 0.6931472
      %v4328 = vlog2.pop %v4200
      %v4329 = vmul.f32 %v4328, 0.6931472
      %v4330 = vlog2.pop %v4203
      %v4331 = vmul.f32 %v4330, 0.6931472
      %v4332 = vadd.f32 %v3630, %v4205
      %v4333 = vadd.f32 %v3633, %v4207
      %v4334 = vadd.f32 %v3636, %v4209
      %v4335 = vadd.f32 %v3639, %v4211
      %v4336 = vadd.f32 %v3642, %v4213
      %v4337 = vadd.f32 %v3645, %v4215
      %v4338 = vadd.f32 %v3648, %v4217
      %v4339 = vadd.f32 %v3651, %v4219
      %v4340 = vadd.f32 %v3654, %v4221
      %v4341 = vadd.f32 %v3657, %v4223
      %v4342 = vadd.f32 %v3660, %v4225
      %v4343 = vadd.f32 %v3663, %v4227
      %v4344 = vadd.f32 %v3666, %v4229
      %v4345 = vadd.f32 %v3669, %v4231
      %v4346 = vadd.f32 %v3672, %v4233
      %v4347 = vadd.f32 %v3675, %v4235
      %v4348 = vadd.f32 %v3678, %v4237
      %v4349 = vadd.f32 %v3681, %v4239
      %v4350 = vadd.f32 %v3684, %v4241
      %v4351 = vadd.f32 %v3687, %v4243
      %v4352 = vadd.f32 %v3690, %v4245
      %v4353 = vadd.f32 %v3693, %v4247
      %v4354 = vadd.f32 %v3696, %v4249
      %v4355 = vadd.f32 %v3699, %v4251
      %v4356 = vadd.f32 %v3702, %v4253
      %v4357 = vadd.f32 %v3705, %v4255
      %v4358 = vadd.f32 %v3708, %v4257
      %v4359 = vadd.f32 %v3711, %v4259
      %v4360 = vadd.f32 %v3714, %v4261
      %v4361 = vadd.f32 %v3717, %v4263
      %v4362 = vadd.f32 %v3720, %v4265
      %v4363 = vadd.f32 %v3723, %v4267
      %v4364 = vadd.f32 %v3726, %v4269
      %v4365 = vadd.f32 %v3729, %v4271
      %v4366 = vadd.f32 %v3732, %v4273
      %v4367 = vadd.f32 %v3735, %v4275
      %v4368 = vadd.f32 %v3738, %v4277
      %v4369 = vadd.f32 %v3741, %v4279
      %v4370 = vadd.f32 %v3744, %v4281
      %v4371 = vadd.f32 %v3747, %v4283
      %v4372 = vadd.f32 %v3750, %v4285
      %v4373 = vadd.f32 %v3753, %v4287
      %v4374 = vadd.f32 %v3756, %v4289
      %v4375 = vadd.f32 %v3759, %v4291
      %v4376 = vadd.f32 %v3762, %v4293
      %v4377 = vadd.f32 %v3765, %v4295
      %v4378 = vadd.f32 %v3768, %v4297
      %v4379 = vadd.f32 %v3771, %v4299
      %v4380 = vadd.f32 %v3774, %v4301
      %v4381 = vadd.f32 %v3777, %v4303
      %v4382 = vadd.f32 %v3780, %v4305
      %v4383 = vadd.f32 %v3783, %v4307
      %v4384 = vadd.f32 %v3786, %v4309
      %v4385 = vadd.f32 %v3789, %v4311
      %v4386 = vadd.f32 %v3792, %v4313
      %v4387 = vadd.f32 %v3795, %v4315
      %v4388 = vadd.f32 %v3798, %v4317
      %v4389 = vadd.f32 %v3801, %v4319
      %v4390 = vadd.f32 %v3804, %v4321
      %v4391 = vadd.f32 %v3807, %v4323
      %v4392 = vadd.f32 %v3810, %v4325
      %v4393 = vadd.f32 %v3813, %v4327
      %v4394 = vadd.f32 %v3816, %v4329
      %v4395 = vadd.f32 %v3819, %v4331
      %v4396 = vsub.f32 %v4332, %v2989
      %v4397 = vsub.f32 %v4333, %v2994
      %v4398 = vsub.f32 %v4334, %v2999
      %v4399 = vsub.f32 %v4335, %v3004
      %v4400 = vsub.f32 %v4336, %v3009
      %v4401 = vsub.f32 %v4337, %v3014
      %v4402 = vsub.f32 %v4338, %v3019
      %v4403 = vsub.f32 %v4339, %v3024
      %v4404 = vsub.f32 %v4340, %v3029
      %v4405 = vsub.f32 %v4341, %v3034
      %v4406 = vsub.f32 %v4342, %v3039
      %v4407 = vsub.f32 %v4343, %v3044
      %v4408 = vsub.f32 %v4344, %v3049
      %v4409 = vsub.f32 %v4345, %v3054
      %v4410 = vsub.f32 %v4346, %v3059
      %v4411 = vsub.f32 %v4347, %v3064
      %v4412 = vsub.f32 %v4348, %v3069
      %v4413 = vsub.f32 %v4349, %v3074
      %v4414 = vsub.f32 %v4350, %v3079
      %v4415 = vsub.f32 %v4351, %v3084
      %v4416 = vsub.f32 %v4352, %v3089
      %v4417 = vsub.f32 %v4353, %v3094
      %v4418 = vsub.f32 %v4354, %v3099
      %v4419 = vsub.f32 %v4355, %v3104
      %v4420 = vsub.f32 %v4356, %v3109
      %v4421 = vsub.f32 %v4357, %v3114
      %v4422 = vsub.f32 %v4358, %v3119
      %v4423 = vsub.f32 %v4359, %v3124
      %v4424 = vsub.f32 %v4360, %v3129
      %v4425 = vsub.f32 %v4361, %v3134
      %v4426 = vsub.f32 %v4362, %v3139
      %v4427 = vsub.f32 %v4363, %v3144
      %v4428 = vsub.f32 %v4364, %v3149
      %v4429 = vsub.f32 %v4365, %v3154
      %v4430 = vsub.f32 %v4366, %v3159
      %v4431 = vsub.f32 %v4367, %v3164
      %v4432 = vsub.f32 %v4368, %v3169
      %v4433 = vsub.f32 %v4369, %v3174
      %v4434 = vsub.f32 %v4370, %v3179
      %v4435 = vsub.f32 %v4371, %v3184
      %v4436 = vsub.f32 %v4372, %v3189
      %v4437 = vsub.f32 %v4373, %v3194
      %v4438 = vsub.f32 %v4374, %v3199
      %v4439 = vsub.f32 %v4375, %v3204
      %v4440 = vsub.f32 %v4376, %v3209
      %v4441 = vsub.f32 %v4377, %v3214
      %v4442 = vsub.f32 %v4378, %v3219
      %v4443 = vsub.f32 %v4379, %v3224
      %v4444 = vsub.f32 %v4380, %v3229
      %v4445 = vsub.f32 %v4381, %v3234
      %v4446 = vsub.f32 %v4382, %v3239
      %v4447 = vsub.f32 %v4383, %v3244
      %v4448 = vsub.f32 %v4384, %v3249
      %v4449 = vsub.f32 %v4385, %v3254
      %v4450 = vsub.f32 %v4386, %v3259
      %v4451 = vsub.f32 %v4387, %v3264
      %v4452 = vsub.f32 %v4388, %v3269
      %v4453 = vsub.f32 %v4389, %v3274
      %v4454 = vsub.f32 %v4390, %v3279
      %v4455 = vsub.f32 %v4391, %v3284
      %v4456 = vsub.f32 %v4392, %v3289
      %v4457 = vsub.f32 %v4393, %v3294
      %v4458 = vsub.f32 %v4394, %v3299
      %v4459 = vsub.f32 %v4395, %v3304
      %v4460 = vmul.f32 %v266, %v4396
      %v4461 = vmul.f32 %v267, %v4397
      %v4462 = vmul.f32 %v268, %v4398
      %v4463 = vmul.f32 %v269, %v4399
      %v4464 = vmul.f32 %v270, %v4400
      %v4465 = vmul.f32 %v271, %v4401
      %v4466 = vmul.f32 %v272, %v4402
      %v4467 = vmul.f32 %v273, %v4403
      %v4468 = vmul.f32 %v274, %v4404
      %v4469 = vmul.f32 %v275, %v4405
      %v4470 = vmul.f32 %v276, %v4406
      %v4471 = vmul.f32 %v277, %v4407
      %v4472 = vmul.f32 %v278, %v4408
      %v4473 = vmul.f32 %v279, %v4409
      %v4474 = vmul.f32 %v280, %v4410
      %v4475 = vmul.f32 %v281, %v4411
      %v4476 = vmul.f32 %v282, %v4412
      %v4477 = vmul.f32 %v283, %v4413
      %v4478 = vmul.f32 %v284, %v4414
      %v4479 = vmul.f32 %v285, %v4415
      %v4480 = vmul.f32 %v286, %v4416
      %v4481 = vmul.f32 %v287, %v4417
      %v4482 = vmul.f32 %v288, %v4418
      %v4483 = vmul.f32 %v289, %v4419
      %v4484 = vmul.f32 %v290, %v4420
      %v4485 = vmul.f32 %v291, %v4421
      %v4486 = vmul.f32 %v292, %v4422
      %v4487 = vmul.f32 %v293, %v4423
      %v4488 = vmul.f32 %v294, %v4424
      %v4489 = vmul.f32 %v295, %v4425
      %v4490 = vmul.f32 %v296, %v4426
      %v4491 = vmul.f32 %v297, %v4427
      %v4492 = vmul.f32 %v298, %v4428
      %v4493 = vmul.f32 %v299, %v4429
      %v4494 = vmul.f32 %v300, %v4430
      %v4495 = vmul.f32 %v301, %v4431
      %v4496 = vmul.f32 %v302, %v4432
      %v4497 = vmul.f32 %v303, %v4433
      %v4498 = vmul.f32 %v304, %v4434
      %v4499 = vmul.f32 %v305, %v4435
      %v4500 = vmul.f32 %v306, %v4436
      %v4501 = vmul.f32 %v307, %v4437
      %v4502 = vmul.f32 %v308, %v4438
      %v4503 = vmul.f32 %v309, %v4439
      %v4504 = vmul.f32 %v310, %v4440
      %v4505 = vmul.f32 %v311, %v4441
      %v4506 = vmul.f32 %v312, %v4442
      %v4507 = vmul.f32 %v313, %v4443
      %v4508 = vmul.f32 %v314, %v4444
      %v4509 = vmul.f32 %v315, %v4445
      %v4510 = vmul.f32 %v316, %v4446
      %v4511 = vmul.f32 %v317, %v4447
      %v4512 = vmul.f32 %v318, %v4448
      %v4513 = vmul.f32 %v319, %v4449
      %v4514 = vmul.f32 %v320, %v4450
      %v4515 = vmul.f32 %v321, %v4451
      %v4516 = vmul.f32 %v322, %v4452
      %v4517 = vmul.f32 %v323, %v4453
      %v4518 = vmul.f32 %v324, %v4454
      %v4519 = vmul.f32 %v325, %v4455
      %v4520 = vmul.f32 %v326, %v4456
      %v4521 = vmul.f32 %v327, %v4457
      %v4522 = vmul.f32 %v328, %v4458
      %v4523 = vmul.f32 %v329, %v4459
      %v4524 = vsel %vm3627, %v4460, 0.0
      %4525 = vadd.xlane.f32.xlu0 %v4524
      %v4526 = vpop.xlane.xlu0 %4525
      %v4527 = vsel %vm3627, %v4461, 0.0
      %4528 = vadd.xlane.f32.xlu0 %v4527
      %v4529 = vpop.xlane.xlu0 %4528
      %v4530 = vsel %vm3627, %v4462, 0.0
      %4531 = vadd.xlane.f32.xlu0 %v4530
      %v4532 = vpop.xlane.xlu0 %4531
      %v4533 = vsel %vm3627, %v4463, 0.0
      %4534 = vadd.xlane.f32.xlu0 %v4533
      %v4535 = vpop.xlane.xlu0 %4534
      %v4536 = vsel %vm3627, %v4464, 0.0
      %4537 = vadd.xlane.f32.xlu0 %v4536
      %v4538 = vpop.xlane.xlu0 %4537
      %v4539 = vsel %vm3627, %v4465, 0.0
      %4540 = vadd.xlane.f32.xlu0 %v4539
      %v4541 = vpop.xlane.xlu0 %4540
      %v4542 = vsel %vm3627, %v4466, 0.0
      %4543 = vadd.xlane.f32.xlu0 %v4542
      %v4544 = vpop.xlane.xlu0 %4543
      %v4545 = vsel %vm3627, %v4467, 0.0
      %4546 = vadd.xlane.f32.xlu0 %v4545
      %v4547 = vpop.xlane.xlu0 %4546
      %v4548 = vsel %vm3627, %v4468, 0.0
      %4549 = vadd.xlane.f32.xlu0 %v4548
      %v4550 = vpop.xlane.xlu0 %4549
      %v4551 = vsel %vm3627, %v4469, 0.0
      %4552 = vadd.xlane.f32.xlu0 %v4551
      %v4553 = vpop.xlane.xlu0 %4552
      %v4554 = vsel %vm3627, %v4470, 0.0
      %4555 = vadd.xlane.f32.xlu0 %v4554
      %v4556 = vpop.xlane.xlu0 %4555
      %v4557 = vsel %vm3627, %v4471, 0.0
      %4558 = vadd.xlane.f32.xlu0 %v4557
      %v4559 = vpop.xlane.xlu0 %4558
      %v4560 = vsel %vm3627, %v4472, 0.0
      %4561 = vadd.xlane.f32.xlu0 %v4560
      %v4562 = vpop.xlane.xlu0 %4561
      %v4563 = vsel %vm3627, %v4473, 0.0
      %4564 = vadd.xlane.f32.xlu0 %v4563
      %v4565 = vpop.xlane.xlu0 %4564
      %v4566 = vsel %vm3627, %v4474, 0.0
      %4567 = vadd.xlane.f32.xlu0 %v4566
      %v4568 = vpop.xlane.xlu0 %4567
      %v4569 = vsel %vm3627, %v4475, 0.0
      %4570 = vadd.xlane.f32.xlu0 %v4569
      %v4571 = vpop.xlane.xlu0 %4570
      %v4572 = vsel %vm3627, %v4476, 0.0
      %4573 = vadd.xlane.f32.xlu0 %v4572
      %v4574 = vpop.xlane.xlu0 %4573
      %v4575 = vsel %vm3627, %v4477, 0.0
      %4576 = vadd.xlane.f32.xlu0 %v4575
      %v4577 = vpop.xlane.xlu0 %4576
      %v4578 = vsel %vm3627, %v4478, 0.0
      %4579 = vadd.xlane.f32.xlu0 %v4578
      %v4580 = vpop.xlane.xlu0 %4579
      %v4581 = vsel %vm3627, %v4479, 0.0
      %4582 = vadd.xlane.f32.xlu0 %v4581
      %v4583 = vpop.xlane.xlu0 %4582
      %v4584 = vsel %vm3627, %v4480, 0.0
      %4585 = vadd.xlane.f32.xlu0 %v4584
      %v4586 = vpop.xlane.xlu0 %4585
      %v4587 = vsel %vm3627, %v4481, 0.0
      %4588 = vadd.xlane.f32.xlu0 %v4587
      %v4589 = vpop.xlane.xlu0 %4588
      %v4590 = vsel %vm3627, %v4482, 0.0
      %4591 = vadd.xlane.f32.xlu0 %v4590
      %v4592 = vpop.xlane.xlu0 %4591
      %v4593 = vsel %vm3627, %v4483, 0.0
      %4594 = vadd.xlane.f32.xlu0 %v4593
      %v4595 = vpop.xlane.xlu0 %4594
      %v4596 = vsel %vm3627, %v4484, 0.0
      %4597 = vadd.xlane.f32.xlu0 %v4596
      %v4598 = vpop.xlane.xlu0 %4597
      %v4599 = vsel %vm3627, %v4485, 0.0
      %4600 = vadd.xlane.f32.xlu0 %v4599
      %v4601 = vpop.xlane.xlu0 %4600
      %v4602 = vsel %vm3627, %v4486, 0.0
      %4603 = vadd.xlane.f32.xlu0 %v4602
      %v4604 = vpop.xlane.xlu0 %4603
      %v4605 = vsel %vm3627, %v4487, 0.0
      %4606 = vadd.xlane.f32.xlu0 %v4605
      %v4607 = vpop.xlane.xlu0 %4606
      %v4608 = vsel %vm3627, %v4488, 0.0
      %4609 = vadd.xlane.f32.xlu0 %v4608
      %v4610 = vpop.xlane.xlu0 %4609
      %v4611 = vsel %vm3627, %v4489, 0.0
      %4612 = vadd.xlane.f32.xlu0 %v4611
      %v4613 = vpop.xlane.xlu0 %4612
      %v4614 = vsel %vm3627, %v4490, 0.0
      %4615 = vadd.xlane.f32.xlu0 %v4614
      %v4616 = vpop.xlane.xlu0 %4615
      %v4617 = vsel %vm3627, %v4491, 0.0
      %4618 = vadd.xlane.f32.xlu0 %v4617
      %v4619 = vpop.xlane.xlu0 %4618
      %v4620 = vsel %vm3627, %v4492, 0.0
      %4621 = vadd.xlane.f32.xlu0 %v4620
      %v4622 = vpop.xlane.xlu0 %4621
      %v4623 = vsel %vm3627, %v4493, 0.0
      %4624 = vadd.xlane.f32.xlu0 %v4623
      %v4625 = vpop.xlane.xlu0 %4624
      %v4626 = vsel %vm3627, %v4494, 0.0
      %4627 = vadd.xlane.f32.xlu0 %v4626
      %v4628 = vpop.xlane.xlu0 %4627
      %v4629 = vsel %vm3627, %v4495, 0.0
      %4630 = vadd.xlane.f32.xlu0 %v4629
      %v4631 = vpop.xlane.xlu0 %4630
      %v4632 = vsel %vm3627, %v4496, 0.0
      %4633 = vadd.xlane.f32.xlu0 %v4632
      %v4634 = vpop.xlane.xlu0 %4633
      %v4635 = vsel %vm3627, %v4497, 0.0
      %4636 = vadd.xlane.f32.xlu0 %v4635
      %v4637 = vpop.xlane.xlu0 %4636
      %v4638 = vsel %vm3627, %v4498, 0.0
      %4639 = vadd.xlane.f32.xlu0 %v4638
      %v4640 = vpop.xlane.xlu0 %4639
      %v4641 = vsel %vm3627, %v4499, 0.0
      %4642 = vadd.xlane.f32.xlu0 %v4641
      %v4643 = vpop.xlane.xlu0 %4642
      %v4644 = vsel %vm3627, %v4500, 0.0
      %4645 = vadd.xlane.f32.xlu0 %v4644
      %v4646 = vpop.xlane.xlu0 %4645
      %v4647 = vsel %vm3627, %v4501, 0.0
      %4648 = vadd.xlane.f32.xlu0 %v4647
      %v4649 = vpop.xlane.xlu0 %4648
      %v4650 = vsel %vm3627, %v4502, 0.0
      %4651 = vadd.xlane.f32.xlu0 %v4650
      %v4652 = vpop.xlane.xlu0 %4651
      %v4653 = vsel %vm3627, %v4503, 0.0
      %4654 = vadd.xlane.f32.xlu0 %v4653
      %v4655 = vpop.xlane.xlu0 %4654
      %v4656 = vsel %vm3627, %v4504, 0.0
      %4657 = vadd.xlane.f32.xlu0 %v4656
      %v4658 = vpop.xlane.xlu0 %4657
      %v4659 = vsel %vm3627, %v4505, 0.0
      %4660 = vadd.xlane.f32.xlu0 %v4659
      %v4661 = vpop.xlane.xlu0 %4660
      %v4662 = vsel %vm3627, %v4506, 0.0
      %4663 = vadd.xlane.f32.xlu0 %v4662
      %v4664 = vpop.xlane.xlu0 %4663
      %v4665 = vsel %vm3627, %v4507, 0.0
      %4666 = vadd.xlane.f32.xlu0 %v4665
      %v4667 = vpop.xlane.xlu0 %4666
      %v4668 = vsel %vm3627, %v4508, 0.0
      %4669 = vadd.xlane.f32.xlu0 %v4668
      %v4670 = vpop.xlane.xlu0 %4669
      %v4671 = vsel %vm3627, %v4509, 0.0
      %4672 = vadd.xlane.f32.xlu0 %v4671
      %v4673 = vpop.xlane.xlu0 %4672
      %v4674 = vsel %vm3627, %v4510, 0.0
      %4675 = vadd.xlane.f32.xlu0 %v4674
      %v4676 = vpop.xlane.xlu0 %4675
      %v4677 = vsel %vm3627, %v4511, 0.0
      %4678 = vadd.xlane.f32.xlu0 %v4677
      %v4679 = vpop.xlane.xlu0 %4678
      %v4680 = vsel %vm3627, %v4512, 0.0
      %4681 = vadd.xlane.f32.xlu0 %v4680
      %v4682 = vpop.xlane.xlu0 %4681
      %v4683 = vsel %vm3627, %v4513, 0.0
      %4684 = vadd.xlane.f32.xlu0 %v4683
      %v4685 = vpop.xlane.xlu0 %4684
      %v4686 = vsel %vm3627, %v4514, 0.0
      %4687 = vadd.xlane.f32.xlu0 %v4686
      %v4688 = vpop.xlane.xlu0 %4687
      %v4689 = vsel %vm3627, %v4515, 0.0
      %4690 = vadd.xlane.f32.xlu0 %v4689
      %v4691 = vpop.xlane.xlu0 %4690
      %v4692 = vsel %vm3627, %v4516, 0.0
      %4693 = vadd.xlane.f32.xlu0 %v4692
      %v4694 = vpop.xlane.xlu0 %4693
      %v4695 = vsel %vm3627, %v4517, 0.0
      %4696 = vadd.xlane.f32.xlu0 %v4695
      %v4697 = vpop.xlane.xlu0 %4696
      %v4698 = vsel %vm3627, %v4518, 0.0
      %4699 = vadd.xlane.f32.xlu0 %v4698
      %v4700 = vpop.xlane.xlu0 %4699
      %v4701 = vsel %vm3627, %v4519, 0.0
      %4702 = vadd.xlane.f32.xlu0 %v4701
      %v4703 = vpop.xlane.xlu0 %4702
      %v4704 = vsel %vm3627, %v4520, 0.0
      %4705 = vadd.xlane.f32.xlu0 %v4704
      %v4706 = vpop.xlane.xlu0 %4705
      %v4707 = vsel %vm3627, %v4521, 0.0
      %4708 = vadd.xlane.f32.xlu0 %v4707
      %v4709 = vpop.xlane.xlu0 %4708
      %v4710 = vsel %vm3627, %v4522, 0.0
      %4711 = vadd.xlane.f32.xlu0 %v4710
      %v4712 = vpop.xlane.xlu0 %4711
      %v4713 = vsel %vm3627, %v4523, 0.0
      %4714 = vadd.xlane.f32.xlu0 %v4713
      %v4715 = vpop.xlane.xlu0 %4714
      %v4716 = vmul.f32 %v4526, %v266
      %v4717 = vmul.f32 %v4529, %v267
      %v4718 = vmul.f32 %v4532, %v268
      %v4719 = vmul.f32 %v4535, %v269
      %v4720 = vmul.f32 %v4538, %v270
      %v4721 = vmul.f32 %v4541, %v271
      %v4722 = vmul.f32 %v4544, %v272
      %v4723 = vmul.f32 %v4547, %v273
      %v4724 = vmul.f32 %v4550, %v274
      %v4725 = vmul.f32 %v4553, %v275
      %v4726 = vmul.f32 %v4556, %v276
      %v4727 = vmul.f32 %v4559, %v277
      %v4728 = vmul.f32 %v4562, %v278
      %v4729 = vmul.f32 %v4565, %v279
      %v4730 = vmul.f32 %v4568, %v280
      %v4731 = vmul.f32 %v4571, %v281
      %v4732 = vmul.f32 %v4574, %v282
      %v4733 = vmul.f32 %v4577, %v283
      %v4734 = vmul.f32 %v4580, %v284
      %v4735 = vmul.f32 %v4583, %v285
      %v4736 = vmul.f32 %v4586, %v286
      %v4737 = vmul.f32 %v4589, %v287
      %v4738 = vmul.f32 %v4592, %v288
      %v4739 = vmul.f32 %v4595, %v289
      %v4740 = vmul.f32 %v4598, %v290
      %v4741 = vmul.f32 %v4601, %v291
      %v4742 = vmul.f32 %v4604, %v292
      %v4743 = vmul.f32 %v4607, %v293
      %v4744 = vmul.f32 %v4610, %v294
      %v4745 = vmul.f32 %v4613, %v295
      %v4746 = vmul.f32 %v4616, %v296
      %v4747 = vmul.f32 %v4619, %v297
      %v4748 = vmul.f32 %v4622, %v298
      %v4749 = vmul.f32 %v4625, %v299
      %v4750 = vmul.f32 %v4628, %v300
      %v4751 = vmul.f32 %v4631, %v301
      %v4752 = vmul.f32 %v4634, %v302
      %v4753 = vmul.f32 %v4637, %v303
      %v4754 = vmul.f32 %v4640, %v304
      %v4755 = vmul.f32 %v4643, %v305
      %v4756 = vmul.f32 %v4646, %v306
      %v4757 = vmul.f32 %v4649, %v307
      %v4758 = vmul.f32 %v4652, %v308
      %v4759 = vmul.f32 %v4655, %v309
      %v4760 = vmul.f32 %v4658, %v310
      %v4761 = vmul.f32 %v4661, %v311
      %v4762 = vmul.f32 %v4664, %v312
      %v4763 = vmul.f32 %v4667, %v313
      %v4764 = vmul.f32 %v4670, %v314
      %v4765 = vmul.f32 %v4673, %v315
      %v4766 = vmul.f32 %v4676, %v316
      %v4767 = vmul.f32 %v4679, %v317
      %v4768 = vmul.f32 %v4682, %v318
      %v4769 = vmul.f32 %v4685, %v319
      %v4770 = vmul.f32 %v4688, %v320
      %v4771 = vmul.f32 %v4691, %v321
      %v4772 = vmul.f32 %v4694, %v322
      %v4773 = vmul.f32 %v4697, %v323
      %v4774 = vmul.f32 %v4700, %v324
      %v4775 = vmul.f32 %v4703, %v325
      %v4776 = vmul.f32 %v4706, %v326
      %v4777 = vmul.f32 %v4709, %v327
      %v4778 = vmul.f32 %v4712, %v328
      %v4779 = vmul.f32 %v4715, %v329
      %4780 = vrot.lane.b32.xlu0 %v266, 126
      %v4781 = vpop.permute.xlu0 %4780
      %4782 = vrot.lane.b32.xlu0 %v267, 126
      %v4783 = vpop.permute.xlu0 %4782
      %4784 = vrot.lane.b32.xlu0 %v268, 126
      %v4785 = vpop.permute.xlu0 %4784
      %4786 = vrot.lane.b32.xlu0 %v269, 126
      %v4787 = vpop.permute.xlu0 %4786
      %4788 = vrot.lane.b32.xlu0 %v270, 126
      %v4789 = vpop.permute.xlu0 %4788
      %4790 = vrot.lane.b32.xlu0 %v271, 126
      %v4791 = vpop.permute.xlu0 %4790
      %4792 = vrot.lane.b32.xlu0 %v272, 126
      %v4793 = vpop.permute.xlu0 %4792
      %4794 = vrot.lane.b32.xlu0 %v273, 126
      %v4795 = vpop.permute.xlu0 %4794
      %4796 = vrot.lane.b32.xlu0 %v274, 126
      %v4797 = vpop.permute.xlu0 %4796
      %4798 = vrot.lane.b32.xlu0 %v275, 126
      %v4799 = vpop.permute.xlu0 %4798
      %4800 = vrot.lane.b32.xlu0 %v276, 126
      %v4801 = vpop.permute.xlu0 %4800
      %4802 = vrot.lane.b32.xlu0 %v277, 126
      %v4803 = vpop.permute.xlu0 %4802
      %4804 = vrot.lane.b32.xlu0 %v278, 126
      %v4805 = vpop.permute.xlu0 %4804
      %4806 = vrot.lane.b32.xlu0 %v279, 126
      %v4807 = vpop.permute.xlu0 %4806
      %4808 = vrot.lane.b32.xlu0 %v280, 126
      %v4809 = vpop.permute.xlu0 %4808
      %4810 = vrot.lane.b32.xlu0 %v281, 126
      %v4811 = vpop.permute.xlu0 %4810
      %4812 = vrot.lane.b32.xlu0 %v282, 126
      %v4813 = vpop.permute.xlu0 %4812
      %4814 = vrot.lane.b32.xlu0 %v283, 126
      %v4815 = vpop.permute.xlu0 %4814
      %4816 = vrot.lane.b32.xlu0 %v284, 126
      %v4817 = vpop.permute.xlu0 %4816
      %4818 = vrot.lane.b32.xlu0 %v285, 126
      %v4819 = vpop.permute.xlu0 %4818
      %4820 = vrot.lane.b32.xlu0 %v286, 126
      %v4821 = vpop.permute.xlu0 %4820
      %4822 = vrot.lane.b32.xlu0 %v287, 126
      %v4823 = vpop.permute.xlu0 %4822
      %4824 = vrot.lane.b32.xlu0 %v288, 126
      %v4825 = vpop.permute.xlu0 %4824
      %4826 = vrot.lane.b32.xlu0 %v289, 126
      %v4827 = vpop.permute.xlu0 %4826
      %4828 = vrot.lane.b32.xlu0 %v290, 126
      %v4829 = vpop.permute.xlu0 %4828
      %4830 = vrot.lane.b32.xlu0 %v291, 126
      %v4831 = vpop.permute.xlu0 %4830
      %4832 = vrot.lane.b32.xlu0 %v292, 126
      %v4833 = vpop.permute.xlu0 %4832
      %4834 = vrot.lane.b32.xlu0 %v293, 126
      %v4835 = vpop.permute.xlu0 %4834
      %4836 = vrot.lane.b32.xlu0 %v294, 126
      %v4837 = vpop.permute.xlu0 %4836
      %4838 = vrot.lane.b32.xlu0 %v295, 126
      %v4839 = vpop.permute.xlu0 %4838
      %4840 = vrot.lane.b32.xlu0 %v296, 126
      %v4841 = vpop.permute.xlu0 %4840
      %4842 = vrot.lane.b32.xlu0 %v297, 126
      %v4843 = vpop.permute.xlu0 %4842
      %4844 = vrot.lane.b32.xlu0 %v298, 126
      %v4845 = vpop.permute.xlu0 %4844
      %4846 = vrot.lane.b32.xlu0 %v299, 126
      %v4847 = vpop.permute.xlu0 %4846
      %4848 = vrot.lane.b32.xlu0 %v300, 126
      %v4849 = vpop.permute.xlu0 %4848
      %4850 = vrot.lane.b32.xlu0 %v301, 126
      %v4851 = vpop.permute.xlu0 %4850
      %4852 = vrot.lane.b32.xlu0 %v302, 126
      %v4853 = vpop.permute.xlu0 %4852
      %4854 = vrot.lane.b32.xlu0 %v303, 126
      %v4855 = vpop.permute.xlu0 %4854
      %4856 = vrot.lane.b32.xlu0 %v304, 126
      %v4857 = vpop.permute.xlu0 %4856
      %4858 = vrot.lane.b32.xlu0 %v305, 126
      %v4859 = vpop.permute.xlu0 %4858
      %4860 = vrot.lane.b32.xlu0 %v306, 126
      %v4861 = vpop.permute.xlu0 %4860
      %4862 = vrot.lane.b32.xlu0 %v307, 126
      %v4863 = vpop.permute.xlu0 %4862
      %4864 = vrot.lane.b32.xlu0 %v308, 126
      %v4865 = vpop.permute.xlu0 %4864
      %4866 = vrot.lane.b32.xlu0 %v309, 126
      %v4867 = vpop.permute.xlu0 %4866
      %4868 = vrot.lane.b32.xlu0 %v310, 126
      %v4869 = vpop.permute.xlu0 %4868
      %4870 = vrot.lane.b32.xlu0 %v311, 126
      %v4871 = vpop.permute.xlu0 %4870
      %4872 = vrot.lane.b32.xlu0 %v312, 126
      %v4873 = vpop.permute.xlu0 %4872
      %4874 = vrot.lane.b32.xlu0 %v313, 126
      %v4875 = vpop.permute.xlu0 %4874
      %4876 = vrot.lane.b32.xlu0 %v314, 126
      %v4877 = vpop.permute.xlu0 %4876
      %4878 = vrot.lane.b32.xlu0 %v315, 126
      %v4879 = vpop.permute.xlu0 %4878
      %4880 = vrot.lane.b32.xlu0 %v316, 126
      %v4881 = vpop.permute.xlu0 %4880
      %4882 = vrot.lane.b32.xlu0 %v317, 126
      %v4883 = vpop.permute.xlu0 %4882
      %4884 = vrot.lane.b32.xlu0 %v318, 126
      %v4885 = vpop.permute.xlu0 %4884
      %4886 = vrot.lane.b32.xlu0 %v319, 126
      %v4887 = vpop.permute.xlu0 %4886
      %4888 = vrot.lane.b32.xlu0 %v320, 126
      %v4889 = vpop.permute.xlu0 %4888
      %4890 = vrot.lane.b32.xlu0 %v321, 126
      %v4891 = vpop.permute.xlu0 %4890
      %4892 = vrot.lane.b32.xlu0 %v322, 126
      %v4893 = vpop.permute.xlu0 %4892
      %4894 = vrot.lane.b32.xlu0 %v323, 126
      %v4895 = vpop.permute.xlu0 %4894
      %4896 = vrot.lane.b32.xlu0 %v324, 126
      %v4897 = vpop.permute.xlu0 %4896
      %4898 = vrot.lane.b32.xlu0 %v325, 126
      %v4899 = vpop.permute.xlu0 %4898
      %4900 = vrot.lane.b32.xlu0 %v326, 126
      %v4901 = vpop.permute.xlu0 %4900
      %4902 = vrot.lane.b32.xlu0 %v327, 126
      %v4903 = vpop.permute.xlu0 %4902
      %4904 = vrot.lane.b32.xlu0 %v328, 126
      %v4905 = vpop.permute.xlu0 %4904
      %4906 = vrot.lane.b32.xlu0 %v329, 126
      %v4907 = vpop.permute.xlu0 %4906
      %v4972 = vsub.f32 %v2989, %v4781
      %v4973 = vsub.f32 %v2994, %v4783
      %v4974 = vsub.f32 %v2999, %v4785
      %v4975 = vsub.f32 %v3004, %v4787
      %v4976 = vsub.f32 %v3009, %v4789
      %v4977 = vsub.f32 %v3014, %v4791
      %v4978 = vsub.f32 %v3019, %v4793
      %v4979 = vsub.f32 %v3024, %v4795
      %v4980 = vsub.f32 %v3029, %v4797
      %v4981 = vsub.f32 %v3034, %v4799
      %v4982 = vsub.f32 %v3039, %v4801
      %v4983 = vsub.f32 %v3044, %v4803
      %v4984 = vsub.f32 %v3049, %v4805
      %v4985 = vsub.f32 %v3054, %v4807
      %v4986 = vsub.f32 %v3059, %v4809
      %v4987 = vsub.f32 %v3064, %v4811
      %v4988 = vsub.f32 %v3069, %v4813
      %v4989 = vsub.f32 %v3074, %v4815
      %v4990 = vsub.f32 %v3079, %v4817
      %v4991 = vsub.f32 %v3084, %v4819
      %v4992 = vsub.f32 %v3089, %v4821
      %v4993 = vsub.f32 %v3094, %v4823
      %v4994 = vsub.f32 %v3099, %v4825
      %v4995 = vsub.f32 %v3104, %v4827
      %v4996 = vsub.f32 %v3109, %v4829
      %v4997 = vsub.f32 %v3114, %v4831
      %v4998 = vsub.f32 %v3119, %v4833
      %v4999 = vsub.f32 %v3124, %v4835
      %v5000 = vsub.f32 %v3129, %v4837
      %v5001 = vsub.f32 %v3134, %v4839
      %v5002 = vsub.f32 %v3139, %v4841
      %v5003 = vsub.f32 %v3144, %v4843
      %v5004 = vsub.f32 %v3149, %v4845
      %v5005 = vsub.f32 %v3154, %v4847
      %v5006 = vsub.f32 %v3159, %v4849
      %v5007 = vsub.f32 %v3164, %v4851
      %v5008 = vsub.f32 %v3169, %v4853
      %v5009 = vsub.f32 %v3174, %v4855
      %v5010 = vsub.f32 %v3179, %v4857
      %v5011 = vsub.f32 %v3184, %v4859
      %v5012 = vsub.f32 %v3189, %v4861
      %v5013 = vsub.f32 %v3194, %v4863
      %v5014 = vsub.f32 %v3199, %v4865
      %v5015 = vsub.f32 %v3204, %v4867
      %v5016 = vsub.f32 %v3209, %v4869
      %v5017 = vsub.f32 %v3214, %v4871
      %v5018 = vsub.f32 %v3219, %v4873
      %v5019 = vsub.f32 %v3224, %v4875
      %v5020 = vsub.f32 %v3229, %v4877
      %v5021 = vsub.f32 %v3234, %v4879
      %v5022 = vsub.f32 %v3239, %v4881
      %v5023 = vsub.f32 %v3244, %v4883
      %v5024 = vsub.f32 %v3249, %v4885
      %v5025 = vsub.f32 %v3254, %v4887
      %v5026 = vsub.f32 %v3259, %v4889
      %v5027 = vsub.f32 %v3264, %v4891
      %v5028 = vsub.f32 %v3269, %v4893
      %v5029 = vsub.f32 %v3274, %v4895
      %v5030 = vsub.f32 %v3279, %v4897
      %v5031 = vsub.f32 %v3284, %v4899
      %v5032 = vsub.f32 %v3289, %v4901
      %v5033 = vsub.f32 %v3294, %v4903
      %v5034 = vsub.f32 %v3299, %v4905
      %v5035 = vsub.f32 %v3304, %v4907
      %5036 = vrot.lane.b32.xlu0 %v266, 125
      %v5037 = vpop.permute.xlu0 %5036
      %5038 = vrot.lane.b32.xlu0 %v267, 125
      %v5039 = vpop.permute.xlu0 %5038
      %5040 = vrot.lane.b32.xlu0 %v268, 125
      %v5041 = vpop.permute.xlu0 %5040
      %5042 = vrot.lane.b32.xlu0 %v269, 125
      %v5043 = vpop.permute.xlu0 %5042
      %5044 = vrot.lane.b32.xlu0 %v270, 125
      %v5045 = vpop.permute.xlu0 %5044
      %5046 = vrot.lane.b32.xlu0 %v271, 125
      %v5047 = vpop.permute.xlu0 %5046
      %5048 = vrot.lane.b32.xlu0 %v272, 125
      %v5049 = vpop.permute.xlu0 %5048
      %5050 = vrot.lane.b32.xlu0 %v273, 125
      %v5051 = vpop.permute.xlu0 %5050
      %5052 = vrot.lane.b32.xlu0 %v274, 125
      %v5053 = vpop.permute.xlu0 %5052
      %5054 = vrot.lane.b32.xlu0 %v275, 125
      %v5055 = vpop.permute.xlu0 %5054
      %5056 = vrot.lane.b32.xlu0 %v276, 125
      %v5057 = vpop.permute.xlu0 %5056
      %5058 = vrot.lane.b32.xlu0 %v277, 125
      %v5059 = vpop.permute.xlu0 %5058
      %5060 = vrot.lane.b32.xlu0 %v278, 125
      %v5061 = vpop.permute.xlu0 %5060
      %5062 = vrot.lane.b32.xlu0 %v279, 125
      %v5063 = vpop.permute.xlu0 %5062
      %5064 = vrot.lane.b32.xlu0 %v280, 125
      %v5065 = vpop.permute.xlu0 %5064
      %5066 = vrot.lane.b32.xlu0 %v281, 125
      %v5067 = vpop.permute.xlu0 %5066
      %5068 = vrot.lane.b32.xlu0 %v282, 125
      %v5069 = vpop.permute.xlu0 %5068
      %5070 = vrot.lane.b32.xlu0 %v283, 125
      %v5071 = vpop.permute.xlu0 %5070
      %5072 = vrot.lane.b32.xlu0 %v284, 125
      %v5073 = vpop.permute.xlu0 %5072
      %5074 = vrot.lane.b32.xlu0 %v285, 125
      %v5075 = vpop.permute.xlu0 %5074
      %5076 = vrot.lane.b32.xlu0 %v286, 125
      %v5077 = vpop.permute.xlu0 %5076
      %5078 = vrot.lane.b32.xlu0 %v287, 125
      %v5079 = vpop.permute.xlu0 %5078
      %5080 = vrot.lane.b32.xlu0 %v288, 125
      %v5081 = vpop.permute.xlu0 %5080
      %5082 = vrot.lane.b32.xlu0 %v289, 125
      %v5083 = vpop.permute.xlu0 %5082
      %5084 = vrot.lane.b32.xlu0 %v290, 125
      %v5085 = vpop.permute.xlu0 %5084
      %5086 = vrot.lane.b32.xlu0 %v291, 125
      %v5087 = vpop.permute.xlu0 %5086
      %5088 = vrot.lane.b32.xlu0 %v292, 125
      %v5089 = vpop.permute.xlu0 %5088
      %5090 = vrot.lane.b32.xlu0 %v293, 125
      %v5091 = vpop.permute.xlu0 %5090
      %5092 = vrot.lane.b32.xlu0 %v294, 125
      %v5093 = vpop.permute.xlu0 %5092
      %5094 = vrot.lane.b32.xlu0 %v295, 125
      %v5095 = vpop.permute.xlu0 %5094
      %5096 = vrot.lane.b32.xlu0 %v296, 125
      %v5097 = vpop.permute.xlu0 %5096
      %5098 = vrot.lane.b32.xlu0 %v297, 125
      %v5099 = vpop.permute.xlu0 %5098
      %5100 = vrot.lane.b32.xlu0 %v298, 125
      %v5101 = vpop.permute.xlu0 %5100
      %5102 = vrot.lane.b32.xlu0 %v299, 125
      %v5103 = vpop.permute.xlu0 %5102
      %5104 = vrot.lane.b32.xlu0 %v300, 125
      %v5105 = vpop.permute.xlu0 %5104
      %5106 = vrot.lane.b32.xlu0 %v301, 125
      %v5107 = vpop.permute.xlu0 %5106
      %5108 = vrot.lane.b32.xlu0 %v302, 125
      %v5109 = vpop.permute.xlu0 %5108
      %5110 = vrot.lane.b32.xlu0 %v303, 125
      %v5111 = vpop.permute.xlu0 %5110
      %5112 = vrot.lane.b32.xlu0 %v304, 125
      %v5113 = vpop.permute.xlu0 %5112
      %5114 = vrot.lane.b32.xlu0 %v305, 125
      %v5115 = vpop.permute.xlu0 %5114
      %5116 = vrot.lane.b32.xlu0 %v306, 125
      %v5117 = vpop.permute.xlu0 %5116
      %5118 = vrot.lane.b32.xlu0 %v307, 125
      %v5119 = vpop.permute.xlu0 %5118
      %5120 = vrot.lane.b32.xlu0 %v308, 125
      %v5121 = vpop.permute.xlu0 %5120
      %5122 = vrot.lane.b32.xlu0 %v309, 125
      %v5123 = vpop.permute.xlu0 %5122
      %5124 = vrot.lane.b32.xlu0 %v310, 125
      %v5125 = vpop.permute.xlu0 %5124
      %5126 = vrot.lane.b32.xlu0 %v311, 125
      %v5127 = vpop.permute.xlu0 %5126
      %5128 = vrot.lane.b32.xlu0 %v312, 125
      %v5129 = vpop.permute.xlu0 %5128
      %5130 = vrot.lane.b32.xlu0 %v313, 125
      %v5131 = vpop.permute.xlu0 %5130
      %5132 = vrot.lane.b32.xlu0 %v314, 125
      %v5133 = vpop.permute.xlu0 %5132
      %5134 = vrot.lane.b32.xlu0 %v315, 125
      %v5135 = vpop.permute.xlu0 %5134
      %5136 = vrot.lane.b32.xlu0 %v316, 125
      %v5137 = vpop.permute.xlu0 %5136
      %5138 = vrot.lane.b32.xlu0 %v317, 125
      %v5139 = vpop.permute.xlu0 %5138
      %5140 = vrot.lane.b32.xlu0 %v318, 125
      %v5141 = vpop.permute.xlu0 %5140
      %5142 = vrot.lane.b32.xlu0 %v319, 125
      %v5143 = vpop.permute.xlu0 %5142
      %5144 = vrot.lane.b32.xlu0 %v320, 125
      %v5145 = vpop.permute.xlu0 %5144
      %5146 = vrot.lane.b32.xlu0 %v321, 125
      %v5147 = vpop.permute.xlu0 %5146
      %5148 = vrot.lane.b32.xlu0 %v322, 125
      %v5149 = vpop.permute.xlu0 %5148
      %5150 = vrot.lane.b32.xlu0 %v323, 125
      %v5151 = vpop.permute.xlu0 %5150
      %5152 = vrot.lane.b32.xlu0 %v324, 125
      %v5153 = vpop.permute.xlu0 %5152
      %5154 = vrot.lane.b32.xlu0 %v325, 125
      %v5155 = vpop.permute.xlu0 %5154
      %5156 = vrot.lane.b32.xlu0 %v326, 125
      %v5157 = vpop.permute.xlu0 %5156
      %5158 = vrot.lane.b32.xlu0 %v327, 125
      %v5159 = vpop.permute.xlu0 %5158
      %5160 = vrot.lane.b32.xlu0 %v328, 125
      %v5161 = vpop.permute.xlu0 %5160
      %5162 = vrot.lane.b32.xlu0 %v329, 125
      %v5163 = vpop.permute.xlu0 %5162
      %v5228 = vmul.f32 %v4972, %v5037
      %v5229 = vmul.f32 %v4973, %v5039
      %v5230 = vmul.f32 %v4974, %v5041
      %v5231 = vmul.f32 %v4975, %v5043
      %v5232 = vmul.f32 %v4976, %v5045
      %v5233 = vmul.f32 %v4977, %v5047
      %v5234 = vmul.f32 %v4978, %v5049
      %v5235 = vmul.f32 %v4979, %v5051
      %v5236 = vmul.f32 %v4980, %v5053
      %v5237 = vmul.f32 %v4981, %v5055
      %v5238 = vmul.f32 %v4982, %v5057
      %v5239 = vmul.f32 %v4983, %v5059
      %v5240 = vmul.f32 %v4984, %v5061
      %v5241 = vmul.f32 %v4985, %v5063
      %v5242 = vmul.f32 %v4986, %v5065
      %v5243 = vmul.f32 %v4987, %v5067
      %v5244 = vmul.f32 %v4988, %v5069
      %v5245 = vmul.f32 %v4989, %v5071
      %v5246 = vmul.f32 %v4990, %v5073
      %v5247 = vmul.f32 %v4991, %v5075
      %v5248 = vmul.f32 %v4992, %v5077
      %v5249 = vmul.f32 %v4993, %v5079
      %v5250 = vmul.f32 %v4994, %v5081
      %v5251 = vmul.f32 %v4995, %v5083
      %v5252 = vmul.f32 %v4996, %v5085
      %v5253 = vmul.f32 %v4997, %v5087
      %v5254 = vmul.f32 %v4998, %v5089
      %v5255 = vmul.f32 %v4999, %v5091
      %v5256 = vmul.f32 %v5000, %v5093
      %v5257 = vmul.f32 %v5001, %v5095
      %v5258 = vmul.f32 %v5002, %v5097
      %v5259 = vmul.f32 %v5003, %v5099
      %v5260 = vmul.f32 %v5004, %v5101
      %v5261 = vmul.f32 %v5005, %v5103
      %v5262 = vmul.f32 %v5006, %v5105
      %v5263 = vmul.f32 %v5007, %v5107
      %v5264 = vmul.f32 %v5008, %v5109
      %v5265 = vmul.f32 %v5009, %v5111
      %v5266 = vmul.f32 %v5010, %v5113
      %v5267 = vmul.f32 %v5011, %v5115
      %v5268 = vmul.f32 %v5012, %v5117
      %v5269 = vmul.f32 %v5013, %v5119
      %v5270 = vmul.f32 %v5014, %v5121
      %v5271 = vmul.f32 %v5015, %v5123
      %v5272 = vmul.f32 %v5016, %v5125
      %v5273 = vmul.f32 %v5017, %v5127
      %v5274 = vmul.f32 %v5018, %v5129
      %v5275 = vmul.f32 %v5019, %v5131
      %v5276 = vmul.f32 %v5020, %v5133
      %v5277 = vmul.f32 %v5021, %v5135
      %v5278 = vmul.f32 %v5022, %v5137
      %v5279 = vmul.f32 %v5023, %v5139
      %v5280 = vmul.f32 %v5024, %v5141
      %v5281 = vmul.f32 %v5025, %v5143
      %v5282 = vmul.f32 %v5026, %v5145
      %v5283 = vmul.f32 %v5027, %v5147
      %v5284 = vmul.f32 %v5028, %v5149
      %v5285 = vmul.f32 %v5029, %v5151
      %v5286 = vmul.f32 %v5030, %v5153
      %v5287 = vmul.f32 %v5031, %v5155
      %v5288 = vmul.f32 %v5032, %v5157
      %v5289 = vmul.f32 %v5033, %v5159
      %v5290 = vmul.f32 %v5034, %v5161
      %v5291 = vmul.f32 %v5035, %v5163
      %5356 = vrot.lane.b32.xlu0 %v4716, 105
      %v5357 = vpop.permute.xlu0 %5356
      %5358 = vrot.lane.b32.xlu0 %v4717, 105
      %v5359 = vpop.permute.xlu0 %5358
      %5360 = vrot.lane.b32.xlu0 %v4718, 105
      %v5361 = vpop.permute.xlu0 %5360
      %5362 = vrot.lane.b32.xlu0 %v4719, 105
      %v5363 = vpop.permute.xlu0 %5362
      %5364 = vrot.lane.b32.xlu0 %v4720, 105
      %v5365 = vpop.permute.xlu0 %5364
      %5366 = vrot.lane.b32.xlu0 %v4721, 105
      %v5367 = vpop.permute.xlu0 %5366
      %5368 = vrot.lane.b32.xlu0 %v4722, 105
      %v5369 = vpop.permute.xlu0 %5368
      %5370 = vrot.lane.b32.xlu0 %v4723, 105
      %v5371 = vpop.permute.xlu0 %5370
      %5372 = vrot.lane.b32.xlu0 %v4724, 105
      %v5373 = vpop.permute.xlu0 %5372
      %5374 = vrot.lane.b32.xlu0 %v4725, 105
      %v5375 = vpop.permute.xlu0 %5374
      %5376 = vrot.lane.b32.xlu0 %v4726, 105
      %v5377 = vpop.permute.xlu0 %5376
      %5378 = vrot.lane.b32.xlu0 %v4727, 105
      %v5379 = vpop.permute.xlu0 %5378
      %5380 = vrot.lane.b32.xlu0 %v4728, 105
      %v5381 = vpop.permute.xlu0 %5380
      %5382 = vrot.lane.b32.xlu0 %v4729, 105
      %v5383 = vpop.permute.xlu0 %5382
      %5384 = vrot.lane.b32.xlu0 %v4730, 105
      %v5385 = vpop.permute.xlu0 %5384
      %5386 = vrot.lane.b32.xlu0 %v4731, 105
      %v5387 = vpop.permute.xlu0 %5386
      %5388 = vrot.lane.b32.xlu0 %v4732, 105
      %v5389 = vpop.permute.xlu0 %5388
      %5390 = vrot.lane.b32.xlu0 %v4733, 105
      %v5391 = vpop.permute.xlu0 %5390
      %5392 = vrot.lane.b32.xlu0 %v4734, 105
      %v5393 = vpop.permute.xlu0 %5392
      %5394 = vrot.lane.b32.xlu0 %v4735, 105
      %v5395 = vpop.permute.xlu0 %5394
      %5396 = vrot.lane.b32.xlu0 %v4736, 105
      %v5397 = vpop.permute.xlu0 %5396
      %5398 = vrot.lane.b32.xlu0 %v4737, 105
      %v5399 = vpop.permute.xlu0 %5398
      %5400 = vrot.lane.b32.xlu0 %v4738, 105
      %v5401 = vpop.permute.xlu0 %5400
      %5402 = vrot.lane.b32.xlu0 %v4739, 105
      %v5403 = vpop.permute.xlu0 %5402
      %5404 = vrot.lane.b32.xlu0 %v4740, 105
      %v5405 = vpop.permute.xlu0 %5404
      %5406 = vrot.lane.b32.xlu0 %v4741, 105
      %v5407 = vpop.permute.xlu0 %5406
      %5408 = vrot.lane.b32.xlu0 %v4742, 105
      %v5409 = vpop.permute.xlu0 %5408
      %5410 = vrot.lane.b32.xlu0 %v4743, 105
      %v5411 = vpop.permute.xlu0 %5410
      %5412 = vrot.lane.b32.xlu0 %v4744, 105
      %v5413 = vpop.permute.xlu0 %5412
      %5414 = vrot.lane.b32.xlu0 %v4745, 105
      %v5415 = vpop.permute.xlu0 %5414
      %5416 = vrot.lane.b32.xlu0 %v4746, 105
      %v5417 = vpop.permute.xlu0 %5416
      %5418 = vrot.lane.b32.xlu0 %v4747, 105
      %v5419 = vpop.permute.xlu0 %5418
      %5420 = vrot.lane.b32.xlu0 %v4748, 105
      %v5421 = vpop.permute.xlu0 %5420
      %5422 = vrot.lane.b32.xlu0 %v4749, 105
      %v5423 = vpop.permute.xlu0 %5422
      %5424 = vrot.lane.b32.xlu0 %v4750, 105
      %v5425 = vpop.permute.xlu0 %5424
      %5426 = vrot.lane.b32.xlu0 %v4751, 105
      %v5427 = vpop.permute.xlu0 %5426
      %5428 = vrot.lane.b32.xlu0 %v4752, 105
      %v5429 = vpop.permute.xlu0 %5428
      %5430 = vrot.lane.b32.xlu0 %v4753, 105
      %v5431 = vpop.permute.xlu0 %5430
      %5432 = vrot.lane.b32.xlu0 %v4754, 105
      %v5433 = vpop.permute.xlu0 %5432
      %5434 = vrot.lane.b32.xlu0 %v4755, 105
      %v5435 = vpop.permute.xlu0 %5434
      %5436 = vrot.lane.b32.xlu0 %v4756, 105
      %v5437 = vpop.permute.xlu0 %5436
      %5438 = vrot.lane.b32.xlu0 %v4757, 105
      %v5439 = vpop.permute.xlu0 %5438
      %5440 = vrot.lane.b32.xlu0 %v4758, 105
      %v5441 = vpop.permute.xlu0 %5440
      %5442 = vrot.lane.b32.xlu0 %v4759, 105
      %v5443 = vpop.permute.xlu0 %5442
      %5444 = vrot.lane.b32.xlu0 %v4760, 105
      %v5445 = vpop.permute.xlu0 %5444
      %5446 = vrot.lane.b32.xlu0 %v4761, 105
      %v5447 = vpop.permute.xlu0 %5446
      %5448 = vrot.lane.b32.xlu0 %v4762, 105
      %v5449 = vpop.permute.xlu0 %5448
      %5450 = vrot.lane.b32.xlu0 %v4763, 105
      %v5451 = vpop.permute.xlu0 %5450
      %5452 = vrot.lane.b32.xlu0 %v4764, 105
      %v5453 = vpop.permute.xlu0 %5452
      %5454 = vrot.lane.b32.xlu0 %v4765, 105
      %v5455 = vpop.permute.xlu0 %5454
      %5456 = vrot.lane.b32.xlu0 %v4766, 105
      %v5457 = vpop.permute.xlu0 %5456
      %5458 = vrot.lane.b32.xlu0 %v4767, 105
      %v5459 = vpop.permute.xlu0 %5458
      %5460 = vrot.lane.b32.xlu0 %v4768, 105
      %v5461 = vpop.permute.xlu0 %5460
      %5462 = vrot.lane.b32.xlu0 %v4769, 105
      %v5463 = vpop.permute.xlu0 %5462
      %5464 = vrot.lane.b32.xlu0 %v4770, 105
      %v5465 = vpop.permute.xlu0 %5464
      %5466 = vrot.lane.b32.xlu0 %v4771, 105
      %v5467 = vpop.permute.xlu0 %5466
      %5468 = vrot.lane.b32.xlu0 %v4772, 105
      %v5469 = vpop.permute.xlu0 %5468
      %5470 = vrot.lane.b32.xlu0 %v4773, 105
      %v5471 = vpop.permute.xlu0 %5470
      %5472 = vrot.lane.b32.xlu0 %v4774, 105
      %v5473 = vpop.permute.xlu0 %5472
      %5474 = vrot.lane.b32.xlu0 %v4775, 105
      %v5475 = vpop.permute.xlu0 %5474
      %5476 = vrot.lane.b32.xlu0 %v4776, 105
      %v5477 = vpop.permute.xlu0 %5476
      %5478 = vrot.lane.b32.xlu0 %v4777, 105
      %v5479 = vpop.permute.xlu0 %5478
      %5480 = vrot.lane.b32.xlu0 %v4778, 105
      %v5481 = vpop.permute.xlu0 %5480
      %5482 = vrot.lane.b32.xlu0 %v4779, 105
      %v5483 = vpop.permute.xlu0 %5482
      %vm5548 = vcmask 7168
      %v5549 = vsel %vm5548, %v5357, 0.0
      %v5550 = vsel %vm5548, %v5359, 0.0
      %v5551 = vadd.f32 %v5549, %v5550
      %v5552 = vsel %vm5548, %v5361, 0.0
      %v5553 = vadd.f32 %v5551, %v5552
      %v5554 = vsel %vm5548, %v5363, 0.0
      %v5555 = vadd.f32 %v5553, %v5554
      %v5556 = vsel %vm5548, %v5365, 0.0
      %v5557 = vadd.f32 %v5555, %v5556
      %v5558 = vsel %vm5548, %v5367, 0.0
      %v5559 = vadd.f32 %v5557, %v5558
      %v5560 = vsel %vm5548, %v5369, 0.0
      %v5561 = vadd.f32 %v5559, %v5560
      %v5562 = vsel %vm5548, %v5371, 0.0
      %v5563 = vadd.f32 %v5561, %v5562
      %v5564 = vsel %vm5548, %v5373, 0.0
      %v5565 = vadd.f32 %v5563, %v5564
      %v5566 = vsel %vm5548, %v5375, 0.0
      %v5567 = vadd.f32 %v5565, %v5566
      %v5568 = vsel %vm5548, %v5377, 0.0
      %v5569 = vadd.f32 %v5567, %v5568
      %v5570 = vsel %vm5548, %v5379, 0.0
      %v5571 = vadd.f32 %v5569, %v5570
      %v5572 = vsel %vm5548, %v5381, 0.0
      %v5573 = vadd.f32 %v5571, %v5572
      %v5574 = vsel %vm5548, %v5383, 0.0
      %v5575 = vadd.f32 %v5573, %v5574
      %v5576 = vsel %vm5548, %v5385, 0.0
      %v5577 = vadd.f32 %v5575, %v5576
      %v5578 = vsel %vm5548, %v5387, 0.0
      %v5579 = vadd.f32 %v5577, %v5578
      %v5580 = vsel %vm5548, %v5389, 0.0
      %v5581 = vadd.f32 %v5579, %v5580
      %v5582 = vsel %vm5548, %v5391, 0.0
      %v5583 = vadd.f32 %v5581, %v5582
      %v5584 = vsel %vm5548, %v5393, 0.0
      %v5585 = vadd.f32 %v5583, %v5584
      %v5586 = vsel %vm5548, %v5395, 0.0
      %v5587 = vadd.f32 %v5585, %v5586
      %v5588 = vsel %vm5548, %v5397, 0.0
      %v5589 = vadd.f32 %v5587, %v5588
      %v5590 = vsel %vm5548, %v5399, 0.0
      %v5591 = vadd.f32 %v5589, %v5590
      %v5592 = vsel %vm5548, %v5401, 0.0
      %v5593 = vadd.f32 %v5591, %v5592
      %v5594 = vsel %vm5548, %v5403, 0.0
      %v5595 = vadd.f32 %v5593, %v5594
      %v5596 = vsel %vm5548, %v5405, 0.0
      %v5597 = vadd.f32 %v5595, %v5596
      %v5598 = vsel %vm5548, %v5407, 0.0
      %v5599 = vadd.f32 %v5597, %v5598
      %v5600 = vsel %vm5548, %v5409, 0.0
      %v5601 = vadd.f32 %v5599, %v5600
      %v5602 = vsel %vm5548, %v5411, 0.0
      %v5603 = vadd.f32 %v5601, %v5602
      %v5604 = vsel %vm5548, %v5413, 0.0
      %v5605 = vadd.f32 %v5603, %v5604
      %v5606 = vsel %vm5548, %v5415, 0.0
      %v5607 = vadd.f32 %v5605, %v5606
      %v5608 = vsel %vm5548, %v5417, 0.0
      %v5609 = vadd.f32 %v5607, %v5608
      %v5610 = vsel %vm5548, %v5419, 0.0
      %v5611 = vadd.f32 %v5609, %v5610
      %v5612 = vsel %vm5548, %v5421, 0.0
      %v5613 = vadd.f32 %v5611, %v5612
      %v5614 = vsel %vm5548, %v5423, 0.0
      %v5615 = vadd.f32 %v5613, %v5614
      %v5616 = vsel %vm5548, %v5425, 0.0
      %v5617 = vadd.f32 %v5615, %v5616
      %v5618 = vsel %vm5548, %v5427, 0.0
      %v5619 = vadd.f32 %v5617, %v5618
      %v5620 = vsel %vm5548, %v5429, 0.0
      %v5621 = vadd.f32 %v5619, %v5620
      %v5622 = vsel %vm5548, %v5431, 0.0
      %v5623 = vadd.f32 %v5621, %v5622
      %v5624 = vsel %vm5548, %v5433, 0.0
      %v5625 = vadd.f32 %v5623, %v5624
      %v5626 = vsel %vm5548, %v5435, 0.0
      %v5627 = vadd.f32 %v5625, %v5626
      %v5628 = vsel %vm5548, %v5437, 0.0
      %v5629 = vadd.f32 %v5627, %v5628
      %v5630 = vsel %vm5548, %v5439, 0.0
      %v5631 = vadd.f32 %v5629, %v5630
      %v5632 = vsel %vm5548, %v5441, 0.0
      %v5633 = vadd.f32 %v5631, %v5632
      %v5634 = vsel %vm5548, %v5443, 0.0
      %v5635 = vadd.f32 %v5633, %v5634
      %v5636 = vsel %vm5548, %v5445, 0.0
      %v5637 = vadd.f32 %v5635, %v5636
      %v5638 = vsel %vm5548, %v5447, 0.0
      %v5639 = vadd.f32 %v5637, %v5638
      %v5640 = vsel %vm5548, %v5449, 0.0
      %v5641 = vadd.f32 %v5639, %v5640
      %v5642 = vsel %vm5548, %v5451, 0.0
      %v5643 = vadd.f32 %v5641, %v5642
      %v5644 = vsel %vm5548, %v5453, 0.0
      %v5645 = vadd.f32 %v5643, %v5644
      %v5646 = vsel %vm5548, %v5455, 0.0
      %v5647 = vadd.f32 %v5645, %v5646
      %v5648 = vsel %vm5548, %v5457, 0.0
      %v5649 = vadd.f32 %v5647, %v5648
      %v5650 = vsel %vm5548, %v5459, 0.0
      %v5651 = vadd.f32 %v5649, %v5650
      %v5652 = vsel %vm5548, %v5461, 0.0
      %v5653 = vadd.f32 %v5651, %v5652
      %v5654 = vsel %vm5548, %v5463, 0.0
      %v5655 = vadd.f32 %v5653, %v5654
      %v5656 = vsel %vm5548, %v5465, 0.0
      %v5657 = vadd.f32 %v5655, %v5656
      %v5658 = vsel %vm5548, %v5467, 0.0
      %v5659 = vadd.f32 %v5657, %v5658
      %v5660 = vsel %vm5548, %v5469, 0.0
      %v5661 = vadd.f32 %v5659, %v5660
      %v5662 = vsel %vm5548, %v5471, 0.0
      %v5663 = vadd.f32 %v5661, %v5662
      %v5664 = vsel %vm5548, %v5473, 0.0
      %v5665 = vadd.f32 %v5663, %v5664
      %v5666 = vsel %vm5548, %v5475, 0.0
      %v5667 = vadd.f32 %v5665, %v5666
      %v5668 = vsel %vm5548, %v5477, 0.0
      %v5669 = vadd.f32 %v5667, %v5668
      %v5670 = vsel %vm5548, %v5479, 0.0
      %v5671 = vadd.f32 %v5669, %v5670
      %v5672 = vsel %vm5548, %v5481, 0.0
      %v5673 = vadd.f32 %v5671, %v5672
      %v5674 = vsel %vm5548, %v5483, 0.0
      %v5675 = vadd.f32 %v5673, %v5674
      %5676 = vadd.xlane.f32.xlu0 %v5675
      %v5677 = vpop.xlane.xlu0 %5676
      %v5678 = vrot.slane %v5677, 4
      %v5679 = vadd.f32 %v5677, %v5678
      %v5680 = vrot.slane %v5679, 2
      %v5681 = vadd.f32 %v5679, %v5680
      %v5682 = vrot.slane %v5681, 1
      %v5683 = vadd.f32 %v5681, %v5682
      %s5684 = vtos %v5683
      %v5685 = vmul.f32 %v5228, %v5228
      %v5686 = vmul.f32 %v5229, %v5229
      %v5687 = vmul.f32 %v5230, %v5230
      %v5688 = vmul.f32 %v5231, %v5231
      %v5689 = vmul.f32 %v5232, %v5232
      %v5690 = vmul.f32 %v5233, %v5233
      %v5691 = vmul.f32 %v5234, %v5234
      %v5692 = vmul.f32 %v5235, %v5235
      %v5693 = vmul.f32 %v5236, %v5236
      %v5694 = vmul.f32 %v5237, %v5237
      %v5695 = vmul.f32 %v5238, %v5238
      %v5696 = vmul.f32 %v5239, %v5239
      %v5697 = vmul.f32 %v5240, %v5240
      %v5698 = vmul.f32 %v5241, %v5241
      %v5699 = vmul.f32 %v5242, %v5242
      %v5700 = vmul.f32 %v5243, %v5243
      %v5701 = vmul.f32 %v5244, %v5244
      %v5702 = vmul.f32 %v5245, %v5245
      %v5703 = vmul.f32 %v5246, %v5246
      %v5704 = vmul.f32 %v5247, %v5247
      %v5705 = vmul.f32 %v5248, %v5248
      %v5706 = vmul.f32 %v5249, %v5249
      %v5707 = vmul.f32 %v5250, %v5250
      %v5708 = vmul.f32 %v5251, %v5251
      %v5709 = vmul.f32 %v5252, %v5252
      %v5710 = vmul.f32 %v5253, %v5253
      %v5711 = vmul.f32 %v5254, %v5254
      %v5712 = vmul.f32 %v5255, %v5255
      %v5713 = vmul.f32 %v5256, %v5256
      %v5714 = vmul.f32 %v5257, %v5257
      %v5715 = vmul.f32 %v5258, %v5258
      %v5716 = vmul.f32 %v5259, %v5259
      %v5717 = vmul.f32 %v5260, %v5260
      %v5718 = vmul.f32 %v5261, %v5261
      %v5719 = vmul.f32 %v5262, %v5262
      %v5720 = vmul.f32 %v5263, %v5263
      %v5721 = vmul.f32 %v5264, %v5264
      %v5722 = vmul.f32 %v5265, %v5265
      %v5723 = vmul.f32 %v5266, %v5266
      %v5724 = vmul.f32 %v5267, %v5267
      %v5725 = vmul.f32 %v5268, %v5268
      %v5726 = vmul.f32 %v5269, %v5269
      %v5727 = vmul.f32 %v5270, %v5270
      %v5728 = vmul.f32 %v5271, %v5271
      %v5729 = vmul.f32 %v5272, %v5272
      %v5730 = vmul.f32 %v5273, %v5273
      %v5731 = vmul.f32 %v5274, %v5274
      %v5732 = vmul.f32 %v5275, %v5275
      %v5733 = vmul.f32 %v5276, %v5276
      %v5734 = vmul.f32 %v5277, %v5277
      %v5735 = vmul.f32 %v5278, %v5278
      %v5736 = vmul.f32 %v5279, %v5279
      %v5737 = vmul.f32 %v5280, %v5280
      %v5738 = vmul.f32 %v5281, %v5281
      %v5739 = vmul.f32 %v5282, %v5282
      %v5740 = vmul.f32 %v5283, %v5283
      %v5741 = vmul.f32 %v5284, %v5284
      %v5742 = vmul.f32 %v5285, %v5285
      %v5743 = vmul.f32 %v5286, %v5286
      %v5744 = vmul.f32 %v5287, %v5287
      %v5745 = vmul.f32 %v5288, %v5288
      %v5746 = vmul.f32 %v5289, %v5289
      %v5747 = vmul.f32 %v5290, %v5290
      %v5748 = vmul.f32 %v5291, %v5291
      %5813 = vrot.lane.b32.xlu0 %v5685, 108
      %v5814 = vpop.permute.xlu0 %5813
      %5815 = vrot.lane.b32.xlu0 %v5686, 108
      %v5816 = vpop.permute.xlu0 %5815
      %5817 = vrot.lane.b32.xlu0 %v5687, 108
      %v5818 = vpop.permute.xlu0 %5817
      %5819 = vrot.lane.b32.xlu0 %v5688, 108
      %v5820 = vpop.permute.xlu0 %5819
      %5821 = vrot.lane.b32.xlu0 %v5689, 108
      %v5822 = vpop.permute.xlu0 %5821
      %5823 = vrot.lane.b32.xlu0 %v5690, 108
      %v5824 = vpop.permute.xlu0 %5823
      %5825 = vrot.lane.b32.xlu0 %v5691, 108
      %v5826 = vpop.permute.xlu0 %5825
      %5827 = vrot.lane.b32.xlu0 %v5692, 108
      %v5828 = vpop.permute.xlu0 %5827
      %5829 = vrot.lane.b32.xlu0 %v5693, 108
      %v5830 = vpop.permute.xlu0 %5829
      %5831 = vrot.lane.b32.xlu0 %v5694, 108
      %v5832 = vpop.permute.xlu0 %5831
      %5833 = vrot.lane.b32.xlu0 %v5695, 108
      %v5834 = vpop.permute.xlu0 %5833
      %5835 = vrot.lane.b32.xlu0 %v5696, 108
      %v5836 = vpop.permute.xlu0 %5835
      %5837 = vrot.lane.b32.xlu0 %v5697, 108
      %v5838 = vpop.permute.xlu0 %5837
      %5839 = vrot.lane.b32.xlu0 %v5698, 108
      %v5840 = vpop.permute.xlu0 %5839
      %5841 = vrot.lane.b32.xlu0 %v5699, 108
      %v5842 = vpop.permute.xlu0 %5841
      %5843 = vrot.lane.b32.xlu0 %v5700, 108
      %v5844 = vpop.permute.xlu0 %5843
      %5845 = vrot.lane.b32.xlu0 %v5701, 108
      %v5846 = vpop.permute.xlu0 %5845
      %5847 = vrot.lane.b32.xlu0 %v5702, 108
      %v5848 = vpop.permute.xlu0 %5847
      %5849 = vrot.lane.b32.xlu0 %v5703, 108
      %v5850 = vpop.permute.xlu0 %5849
      %5851 = vrot.lane.b32.xlu0 %v5704, 108
      %v5852 = vpop.permute.xlu0 %5851
      %5853 = vrot.lane.b32.xlu0 %v5705, 108
      %v5854 = vpop.permute.xlu0 %5853
      %5855 = vrot.lane.b32.xlu0 %v5706, 108
      %v5856 = vpop.permute.xlu0 %5855
      %5857 = vrot.lane.b32.xlu0 %v5707, 108
      %v5858 = vpop.permute.xlu0 %5857
      %5859 = vrot.lane.b32.xlu0 %v5708, 108
      %v5860 = vpop.permute.xlu0 %5859
      %5861 = vrot.lane.b32.xlu0 %v5709, 108
      %v5862 = vpop.permute.xlu0 %5861
      %5863 = vrot.lane.b32.xlu0 %v5710, 108
      %v5864 = vpop.permute.xlu0 %5863
      %5865 = vrot.lane.b32.xlu0 %v5711, 108
      %v5866 = vpop.permute.xlu0 %5865
      %5867 = vrot.lane.b32.xlu0 %v5712, 108
      %v5868 = vpop.permute.xlu0 %5867
      %5869 = vrot.lane.b32.xlu0 %v5713, 108
      %v5870 = vpop.permute.xlu0 %5869
      %5871 = vrot.lane.b32.xlu0 %v5714, 108
      %v5872 = vpop.permute.xlu0 %5871
      %5873 = vrot.lane.b32.xlu0 %v5715, 108
      %v5874 = vpop.permute.xlu0 %5873
      %5875 = vrot.lane.b32.xlu0 %v5716, 108
      %v5876 = vpop.permute.xlu0 %5875
      %5877 = vrot.lane.b32.xlu0 %v5717, 108
      %v5878 = vpop.permute.xlu0 %5877
      %5879 = vrot.lane.b32.xlu0 %v5718, 108
      %v5880 = vpop.permute.xlu0 %5879
      %5881 = vrot.lane.b32.xlu0 %v5719, 108
      %v5882 = vpop.permute.xlu0 %5881
      %5883 = vrot.lane.b32.xlu0 %v5720, 108
      %v5884 = vpop.permute.xlu0 %5883
      %5885 = vrot.lane.b32.xlu0 %v5721, 108
      %v5886 = vpop.permute.xlu0 %5885
      %5887 = vrot.lane.b32.xlu0 %v5722, 108
      %v5888 = vpop.permute.xlu0 %5887
      %5889 = vrot.lane.b32.xlu0 %v5723, 108
      %v5890 = vpop.permute.xlu0 %5889
      %5891 = vrot.lane.b32.xlu0 %v5724, 108
      %v5892 = vpop.permute.xlu0 %5891
      %5893 = vrot.lane.b32.xlu0 %v5725, 108
      %v5894 = vpop.permute.xlu0 %5893
      %5895 = vrot.lane.b32.xlu0 %v5726, 108
      %v5896 = vpop.permute.xlu0 %5895
      %5897 = vrot.lane.b32.xlu0 %v5727, 108
      %v5898 = vpop.permute.xlu0 %5897
      %5899 = vrot.lane.b32.xlu0 %v5728, 108
      %v5900 = vpop.permute.xlu0 %5899
      %5901 = vrot.lane.b32.xlu0 %v5729, 108
      %v5902 = vpop.permute.xlu0 %5901
      %5903 = vrot.lane.b32.xlu0 %v5730, 108
      %v5904 = vpop.permute.xlu0 %5903
      %5905 = vrot.lane.b32.xlu0 %v5731, 108
      %v5906 = vpop.permute.xlu0 %5905
      %5907 = vrot.lane.b32.xlu0 %v5732, 108
      %v5908 = vpop.permute.xlu0 %5907
      %5909 = vrot.lane.b32.xlu0 %v5733, 108
      %v5910 = vpop.permute.xlu0 %5909
      %5911 = vrot.lane.b32.xlu0 %v5734, 108
      %v5912 = vpop.permute.xlu0 %5911
      %5913 = vrot.lane.b32.xlu0 %v5735, 108
      %v5914 = vpop.permute.xlu0 %5913
      %5915 = vrot.lane.b32.xlu0 %v5736, 108
      %v5916 = vpop.permute.xlu0 %5915
      %5917 = vrot.lane.b32.xlu0 %v5737, 108
      %v5918 = vpop.permute.xlu0 %5917
      %5919 = vrot.lane.b32.xlu0 %v5738, 108
      %v5920 = vpop.permute.xlu0 %5919
      %5921 = vrot.lane.b32.xlu0 %v5739, 108
      %v5922 = vpop.permute.xlu0 %5921
      %5923 = vrot.lane.b32.xlu0 %v5740, 108
      %v5924 = vpop.permute.xlu0 %5923
      %5925 = vrot.lane.b32.xlu0 %v5741, 108
      %v5926 = vpop.permute.xlu0 %5925
      %5927 = vrot.lane.b32.xlu0 %v5742, 108
      %v5928 = vpop.permute.xlu0 %5927
      %5929 = vrot.lane.b32.xlu0 %v5743, 108
      %v5930 = vpop.permute.xlu0 %5929
      %5931 = vrot.lane.b32.xlu0 %v5744, 108
      %v5932 = vpop.permute.xlu0 %5931
      %5933 = vrot.lane.b32.xlu0 %v5745, 108
      %v5934 = vpop.permute.xlu0 %5933
      %5935 = vrot.lane.b32.xlu0 %v5746, 108
      %v5936 = vpop.permute.xlu0 %5935
      %5937 = vrot.lane.b32.xlu0 %v5747, 108
      %v5938 = vpop.permute.xlu0 %5937
      %5939 = vrot.lane.b32.xlu0 %v5748, 108
      %v5940 = vpop.permute.xlu0 %5939
      %v6005 = vsel %vm5548, %v5814, 0.0
      %v6006 = vsel %vm5548, %v5816, 0.0
      %v6007 = vadd.f32 %v6005, %v6006
      %v6008 = vsel %vm5548, %v5818, 0.0
      %v6009 = vadd.f32 %v6007, %v6008
      %v6010 = vsel %vm5548, %v5820, 0.0
      %v6011 = vadd.f32 %v6009, %v6010
      %v6012 = vsel %vm5548, %v5822, 0.0
      %v6013 = vadd.f32 %v6011, %v6012
      %v6014 = vsel %vm5548, %v5824, 0.0
      %v6015 = vadd.f32 %v6013, %v6014
      %v6016 = vsel %vm5548, %v5826, 0.0
      %v6017 = vadd.f32 %v6015, %v6016
      %v6018 = vsel %vm5548, %v5828, 0.0
      %v6019 = vadd.f32 %v6017, %v6018
      %v6020 = vsel %vm5548, %v5830, 0.0
      %v6021 = vadd.f32 %v6019, %v6020
      %v6022 = vsel %vm5548, %v5832, 0.0
      %v6023 = vadd.f32 %v6021, %v6022
      %v6024 = vsel %vm5548, %v5834, 0.0
      %v6025 = vadd.f32 %v6023, %v6024
      %v6026 = vsel %vm5548, %v5836, 0.0
      %v6027 = vadd.f32 %v6025, %v6026
      %v6028 = vsel %vm5548, %v5838, 0.0
      %v6029 = vadd.f32 %v6027, %v6028
      %v6030 = vsel %vm5548, %v5840, 0.0
      %v6031 = vadd.f32 %v6029, %v6030
      %v6032 = vsel %vm5548, %v5842, 0.0
      %v6033 = vadd.f32 %v6031, %v6032
      %v6034 = vsel %vm5548, %v5844, 0.0
      %v6035 = vadd.f32 %v6033, %v6034
      %v6036 = vsel %vm5548, %v5846, 0.0
      %v6037 = vadd.f32 %v6035, %v6036
      %v6038 = vsel %vm5548, %v5848, 0.0
      %v6039 = vadd.f32 %v6037, %v6038
      %v6040 = vsel %vm5548, %v5850, 0.0
      %v6041 = vadd.f32 %v6039, %v6040
      %v6042 = vsel %vm5548, %v5852, 0.0
      %v6043 = vadd.f32 %v6041, %v6042
      %v6044 = vsel %vm5548, %v5854, 0.0
      %v6045 = vadd.f32 %v6043, %v6044
      %v6046 = vsel %vm5548, %v5856, 0.0
      %v6047 = vadd.f32 %v6045, %v6046
      %v6048 = vsel %vm5548, %v5858, 0.0
      %v6049 = vadd.f32 %v6047, %v6048
      %v6050 = vsel %vm5548, %v5860, 0.0
      %v6051 = vadd.f32 %v6049, %v6050
      %v6052 = vsel %vm5548, %v5862, 0.0
      %v6053 = vadd.f32 %v6051, %v6052
      %v6054 = vsel %vm5548, %v5864, 0.0
      %v6055 = vadd.f32 %v6053, %v6054
      %v6056 = vsel %vm5548, %v5866, 0.0
      %v6057 = vadd.f32 %v6055, %v6056
      %v6058 = vsel %vm5548, %v5868, 0.0
      %v6059 = vadd.f32 %v6057, %v6058
      %v6060 = vsel %vm5548, %v5870, 0.0
      %v6061 = vadd.f32 %v6059, %v6060
      %v6062 = vsel %vm5548, %v5872, 0.0
      %v6063 = vadd.f32 %v6061, %v6062
      %v6064 = vsel %vm5548, %v5874, 0.0
      %v6065 = vadd.f32 %v6063, %v6064
      %v6066 = vsel %vm5548, %v5876, 0.0
      %v6067 = vadd.f32 %v6065, %v6066
      %v6068 = vsel %vm5548, %v5878, 0.0
      %v6069 = vadd.f32 %v6067, %v6068
      %v6070 = vsel %vm5548, %v5880, 0.0
      %v6071 = vadd.f32 %v6069, %v6070
      %v6072 = vsel %vm5548, %v5882, 0.0
      %v6073 = vadd.f32 %v6071, %v6072
      %v6074 = vsel %vm5548, %v5884, 0.0
      %v6075 = vadd.f32 %v6073, %v6074
      %v6076 = vsel %vm5548, %v5886, 0.0
      %v6077 = vadd.f32 %v6075, %v6076
      %v6078 = vsel %vm5548, %v5888, 0.0
      %v6079 = vadd.f32 %v6077, %v6078
      %v6080 = vsel %vm5548, %v5890, 0.0
      %v6081 = vadd.f32 %v6079, %v6080
      %v6082 = vsel %vm5548, %v5892, 0.0
      %v6083 = vadd.f32 %v6081, %v6082
      %v6084 = vsel %vm5548, %v5894, 0.0
      %v6085 = vadd.f32 %v6083, %v6084
      %v6086 = vsel %vm5548, %v5896, 0.0
      %v6087 = vadd.f32 %v6085, %v6086
      %v6088 = vsel %vm5548, %v5898, 0.0
      %v6089 = vadd.f32 %v6087, %v6088
      %v6090 = vsel %vm5548, %v5900, 0.0
      %v6091 = vadd.f32 %v6089, %v6090
      %v6092 = vsel %vm5548, %v5902, 0.0
      %v6093 = vadd.f32 %v6091, %v6092
      %v6094 = vsel %vm5548, %v5904, 0.0
      %v6095 = vadd.f32 %v6093, %v6094
      %v6096 = vsel %vm5548, %v5906, 0.0
      %v6097 = vadd.f32 %v6095, %v6096
      %v6098 = vsel %vm5548, %v5908, 0.0
      %v6099 = vadd.f32 %v6097, %v6098
      %v6100 = vsel %vm5548, %v5910, 0.0
      %v6101 = vadd.f32 %v6099, %v6100
      %v6102 = vsel %vm5548, %v5912, 0.0
      %v6103 = vadd.f32 %v6101, %v6102
      %v6104 = vsel %vm5548, %v5914, 0.0
      %v6105 = vadd.f32 %v6103, %v6104
      %v6106 = vsel %vm5548, %v5916, 0.0
      %v6107 = vadd.f32 %v6105, %v6106
      %v6108 = vsel %vm5548, %v5918, 0.0
      %v6109 = vadd.f32 %v6107, %v6108
      %v6110 = vsel %vm5548, %v5920, 0.0
      %v6111 = vadd.f32 %v6109, %v6110
      %v6112 = vsel %vm5548, %v5922, 0.0
      %v6113 = vadd.f32 %v6111, %v6112
      %v6114 = vsel %vm5548, %v5924, 0.0
      %v6115 = vadd.f32 %v6113, %v6114
      %v6116 = vsel %vm5548, %v5926, 0.0
      %v6117 = vadd.f32 %v6115, %v6116
      %v6118 = vsel %vm5548, %v5928, 0.0
      %v6119 = vadd.f32 %v6117, %v6118
      %v6120 = vsel %vm5548, %v5930, 0.0
      %v6121 = vadd.f32 %v6119, %v6120
      %v6122 = vsel %vm5548, %v5932, 0.0
      %v6123 = vadd.f32 %v6121, %v6122
      %v6124 = vsel %vm5548, %v5934, 0.0
      %v6125 = vadd.f32 %v6123, %v6124
      %v6126 = vsel %vm5548, %v5936, 0.0
      %v6127 = vadd.f32 %v6125, %v6126
      %v6128 = vsel %vm5548, %v5938, 0.0
      %v6129 = vadd.f32 %v6127, %v6128
      %v6130 = vsel %vm5548, %v5940, 0.0
      %v6131 = vadd.f32 %v6129, %v6130
      %6132 = vadd.xlane.f32.xlu0 %v6131
      %v6133 = vpop.xlane.xlu0 %6132
      %v6134 = vrot.slane %v6133, 4
      %v6135 = vadd.f32 %v6133, %v6134
      %v6136 = vrot.slane %v6135, 2
      %v6137 = vadd.f32 %v6135, %v6136
      %v6138 = vrot.slane %v6137, 1
      %v6139 = vadd.f32 %v6137, %v6138
      %s6140 = vtos %v6139
      %v6141 = vlaneseq
      %v6142 = vshrl.u32 %v6141, 7
      %vm6143 = vcmp.eq.s32.totalorder %v6142, 0
      %v6144 = vstv %s5684
      %v6145 = vstv %s6140
      %v6146 = vsel %vm6143, %v6144, %v6145
      %6147 = vst [vmem:[%s265] sm:$0x3] %v6146
      %s6148 = smul.u32 64, %s18
      %p6149 = scmp.lt.s32.totalorder %s6148, 127
      %s6150 = scalar_select %p6149, %s6148, 127
      %s6151 = smul.addr %s6150, 4
      %s6152 = scalar_lea.vmem %s5, %s6151
      %p6153 = scmp.lt.s32.totalorder %s18, 1
      %s6154 = scalar_select %p6153, %s18, 1
      %s6155 = smul.addr %s6154, 2
      %s6156 = scalar_lea.vmem %s6, %s6155
      // Predicated region
      $region41: #{sparse_digress_forward.3} parent=39 // pred_check
        %p6157 = pneg %p146
      $region42: #{sparse_digress_forward.3} parent=39 // pred_check_branch
        %6159 = sbr.rel (%p6157) target = $region44
      $region43: #{sparse_digress_forward.3} parent=39 // pred_region
        %s6160 = smul.u32 64, %s18
      $region44: #{sparse_digress_forward.3} parent=39 // pred_fallthru
        _
      // Predicated region
      $region45: #{sparse_digress_forward.3} parent=39 // pred_check
        %p6161 = pneg %p172
      $region46: #{sparse_digress_forward.3} parent=39 // pred_check_branch
        %6163 = sbr.rel (%p6161) target = $region48
      $region47: #{sparse_digress_forward.3} parent=39 // pred_region
        _
      $region48: #{sparse_digress_forward.3} parent=39 // pred_fallthru
        _
    $region40: #{sparse_digress_forward.3} parent=5 // pred_fallthru
      _
    %p6164 = scmp.le.s32.totalorder 2, %s13
    // Predicated region
    $region49: #{sparse_digress_forward.3} parent=5 // pred_check
      %p6165 = pneg %p6164
    $region50: #{sparse_digress_forward.3} parent=5 // pred_check_branch
      %6167 = sbr.rel (%p6165) target = $region52
    $region51: #{sparse_digress_forward.3} parent=5 // pred_region
      %s6168 = ssub.s32 %s13, 2
      // Predicated region
      $region53: #{sparse_digress_forward.3} parent=51 // pred_check
        %p6169 = pneg %p152
      $region54: #{sparse_digress_forward.3} parent=51 // pred_check_branch
        %6171 = sbr.rel (%p6169) target = $region56
      $region55: #{sparse_digress_forward.3} parent=51 // pred_region
        %s6172 = smul.u32 64, %s19
        %p6173 = scmp.lt.s32.totalorder %s6172, 127
        %s6174 = scalar_select %p6173, %s6172, 127
        %s6175 = smul.addr %s6174, 4
        %s6176 = scalar_lea.vmem %s5, %s6175
      $region56: #{sparse_digress_forward.3} parent=51 // pred_fallthru
        _
      // Predicated region
      $region57: #{sparse_digress_forward.3} parent=51 // pred_check
        %p6177 = pneg %p178
      $region58: #{sparse_digress_forward.3} parent=51 // pred_check_branch
        %6179 = sbr.rel (%p6177) target = $region60
      $region59: #{sparse_digress_forward.3} parent=51 // pred_region
        %p6180 = scmp.lt.s32.totalorder %s19, 1
        %s6181 = scalar_select %p6180, %s19, 1
        %s6182 = smul.addr %s6181, 2
        %s6183 = scalar_lea.vmem %s6, %s6182
      $region60: #{sparse_digress_forward.3} parent=51 // pred_fallthru
        _
    $region52: #{sparse_digress_forward.3} parent=5 // pred_fallthru
      _
  $region6: #{sparse_digress_forward.3} parent=0 // loop_footer
    %s17 = sadd.s32 1, %s13
  $region7: #{sparse_digress_forward.3} parent=0 // loop_footer_branch
    %12 = sbr.rel target = $region3
  $region8: #{sparse_digress_forward.3} parent=0 // loop_exit
    _

</llo_original>
